<compile_context>
chip_gen: v7x
topology: tpu7x:2x2x1
jax: 0.10.0
libtpu: 0.0.40
codegen_flags: <defaults>
</compile_context>

<pallas_src>
import functools

import numpy as np
import jax
import jax.numpy as jnp
from jax.experimental import pallas as pl
from jax.experimental.pallas import tpu as pltpu  # noqa: F401  (kept for parity)

# ----------------------------- config --------------------------------------
N_TOKEN = 50
N_LAYER = 2
N_HEAD = 4
D_HEAD = 8
D_MODEL = 32
D_INNER = 32          # must equal D_MODEL (see note above)
MEM_LEN = 4
REUSE_LEN = 0
QLEN = 8
BSZ = 2
LN_EPS = 1e-5         # nn.LayerNorm default


# ------------------------- Pallas kernel ------------------------------------
def _dot_t(a, b):
    # a: [m, d], b: [n, d] -> [m, n], contracting the last dims (no transpose op)
    return jax.lax.dot_general(a, b, (((1,), (1,)), ((), ())),
                               preferred_element_type=jnp.float32)


def xlnet_fused_kernel(hp_ref, m_ref, w_ref, lb_ref, vec_ref, lw_ref,
                       mems_ref, logits_ref,
                       *, bsz, qlen, n_head, d_head, n_layer, mem_len):
    """Full XLNet forward (all layers + logits) with batch folded into rows.

    Slab layout:
      hp_ref   [bq + rlen, d_model] : rows [0,bq)   = h0 (batch-major tokens)
                                      rows [bq,...) = pos_emb
      m_ref    [2, bq, bq]          : [0] = seg_same, [1] = -1e30 * attn mask
      w_ref    [d_model, 6*HD]      : wq | wk | wv | wr | proj_o^T | conv1_w^T
      lb_ref   [n_layer, 3+2*n_head, HD] : r_w | r_r | r_s | block-diag seg_emb
      vec_ref  [3, d_model]         : ln_gamma | ln_beta | conv1_b
      lw_ref   [d_model+1, n_token_pad] : embedding^T (padded) | softmax_b
    """
    bq = m_ref.shape[1]
    d_model = hp_ref.shape[1]
    hd = n_head * d_head
    rlen = hp_ref.shape[0] - bq
    klen = qlen                       # mlen = 0 on this path
    scale = 1.0 / (d_head ** 0.5)
    assert qlen & (qlen - 1) == 0, "barrel-shift rel_shift assumes power-of-2 qlen"
    assert hd == d_model, "weight-slab packing assumes n_head*d_head == d_model"

    # ---- unpack slabs; everything layer-invariant is loaded/computed once ----
    hp = hp_ref[...]
    h = hp[:bq, :]                    # [bq, d_model]
    r = hp[bq:, :]                    # [rlen, d_model]
    seg_same = m_ref[0]               # [bq, bq]
    mask_bias = m_ref[1]              # [bq, bq], already -1e30 * mask
    w = w_ref[...]
    w_qkv = w[:, 0:3 * hd]            # fused q/k/v projection weight
    w_r = w[:, 3 * hd:4 * hd]
    po_t = w[:, 4 * hd:5 * hd]        # [HD, d_model]
    w1 = w[:, 5 * hd:6 * hd]          # [d_model, d_inner]
    gamma = vec_ref[0:1, :]
    beta = vec_ref[1:2, :]
    b1 = vec_ref[2:3, :]
    lw = lw_ref[...]
    emb_t = lw[:d_model, :]           # [d_model, n_token_pad]
    smb = lw[d_model:d_model + 1, :]  # [1, n_token_pad]

    # r_proj_weight is shared across layers -> project the pos-emb once
    kr = jnp.dot(r, w_r, preferred_element_type=jnp.float32)       # [rlen, HD]

    # flat row index for the head-stacked rel_shift ((row % qlen) & s == row & s)
    row_all = jax.lax.broadcasted_iota(jnp.int32, (n_head * bq, 1), 0)

    def layer_norm(x):
        mu = jnp.mean(x, axis=-1, keepdims=True)
        var = jnp.mean(jnp.square(x - mu), axis=-1, keepdims=True)
        return (x - mu) * jax.lax.rsqrt(var + LN_EPS) * gamma + beta

    def rel_shift_all_heads(x):
        # x: [n_head*bq, rlen];  out[t, j] = x[t, qlen + j - (t % qlen)]
        # Rotate each row right by (t % qlen) with a log2(qlen)-stage barrel
        # shifter built from constant-shift lane rotations + per-row selects,
        # applied once for all heads (stacked along sublanes).
        # TODO(synk): pltpu.roll(x, s, axis=1) would use the XLU slot instead.
        s = 1
        while s < qlen:
            rolled = jnp.concatenate([x[:, rlen - s:], x[:, :rlen - s]], axis=1)
            x = jnp.where((row_all & s) != 0, rolled, x)
            s *= 2
        return x[:, qlen:qlen + klen]                               # [n_head*bq, klen]

    for l in range(n_layer):                                        # static unroll
        if l > 0:
            # _cache_mem for layer l (reuse_len=0, prev_mem=None): last mem_len
            # positions per batch of the hidden state entering layer l.
            # Layer 0's entry is just h0, which the wrapper already holds.
            mems_ref[l - 1, :, :] = jnp.concatenate(
                [h[b * qlen + qlen - mem_len:(b + 1) * qlen, :]
                 for b in range(bsz)], axis=0)

        lb = lb_ref[l]                                              # [3+2*n_head, HD]
        rw = lb[0:1, :]
        rr = lb[1:2, :]
        rs = lb[2:3, :]
        seg_blk = lb[3:3 + 2 * n_head, :]                           # block-diag seg

        # fused q/k/v projection: ONE matmul for all three, all heads packed
        qkv = jnp.dot(h, w_qkv, preferred_element_type=jnp.float32)  # [bq, 3*HD]
        q = qkv[:, 0:hd]
        k = qkv[:, hd:2 * hd]
        v = qkv[:, 2 * hd:3 * hd]
        q_rw = q + rw
        q_rr = q + rr
        q_rs = q + rs

        # segment bias for every head with one dot: [bq, 2*n_head]
        # (columns 0..n_head-1 = "same", n_head..2*n_head-1 = "diff")
        ef_cols = _dot_t(q_rs, seg_blk)

        # ac and bdf per head with ONE stacked dot each:
        # [q_rw ; q_rr] (2*bq rows) against [k ; kr] (bq+rlen rows)
        a_full = jnp.concatenate([q_rw, q_rr], axis=0)              # [2*bq, HD]
        b_full = jnp.concatenate([k, kr], axis=0)                   # [bq+rlen, HD]
        ac_list = []
        bdf_list = []
        for n in range(n_head):                                     # static unroll
            lo = n * d_head
            hi = lo + d_head
            res = _dot_t(a_full[:, lo:hi], b_full[:, lo:hi])        # [2*bq, bq+rlen]
            ac_list.append(res[:bq, :bq])
            bdf_list.append(res[bq:, bq:])

        # relative shift once for all heads (3 rotate stages per layer total)
        bdf_all = jnp.concatenate(bdf_list, axis=0)                 # [n_head*bq, rlen]
        bd_all = rel_shift_all_heads(bdf_all)                       # [n_head*bq, klen]
        bd_all = jnp.concatenate([bd_all] * bsz, axis=1)            # [n_head*bq, bq]

        attn_out = None
        for n in range(n_head):                                     # static unroll
            lo = n * d_head
            hi = lo + d_head
            ef_s = ef_cols[:, n:n + 1]
            ef_d = ef_cols[:, n_head + n:n_head + n + 1]
            ef = ef_d + seg_same * (ef_s - ef_d)
            # cross-batch pairs carry garbage in ac/bd/ef but get -1e30 from
            # mask_bias, so they underflow to exactly 0 in the softmax.
            score = (ac_list[n] + bd_all[n * bq:(n + 1) * bq, :] + ef) * scale \
                + mask_bias
            score = score - jnp.max(score, axis=-1, keepdims=True)
            ex = jnp.exp(score)
            prob = ex / jnp.sum(ex, axis=-1, keepdims=True)          # exact recip
            head_out = jnp.dot(prob, v[:, lo:hi],
                               preferred_element_type=jnp.float32)   # [bq, d_head]
            # accumulate the output projection per head (no lane concat)
            contrib = jnp.dot(head_out, po_t[lo:hi, :],
                              preferred_element_type=jnp.float32)    # [bq, d_model]
            attn_out = contrib if attn_out is None else attn_out + contrib

        ln1 = layer_norm(attn_out + h)                               # post_attention
        ff = jnp.maximum(jnp.dot(ln1, w1,
                                 preferred_element_type=jnp.float32) + b1, 0.0)
        h = layer_norm(ff + ln1)                                     # positionwise_ffn

    # final logits, lane-dense (vocab padded to a multiple of 128)
    logits_ref[...] = jnp.dot(h, emb_t,
                              preferred_element_type=jnp.float32) + smb


def xlnet_fused_pallas(hp, masks, w_slab, lbias, vecs, lw,
                       *, bsz, qlen, n_head, d_head, mem_len):
    bq = masks.shape[1]
    d_model = hp.shape[1]
    n_layer = lbias.shape[0]
    n_token_pad = lw.shape[1]

    kernel = functools.partial(xlnet_fused_kernel, bsz=bsz, qlen=qlen,
                               n_head=n_head, d_head=d_head,
                               n_layer=n_layer, mem_len=mem_len)

    # One-shot kernel: no grid, no BlockSpecs -> every slab is a whole-array
    # VMEM operand (6 input DMAs, 2 output DMAs), no pipelining bookkeeping.
    return pl.pallas_call(
        kernel,
        out_shape=(jax.ShapeDtypeStruct((n_layer - 1, bsz * mem_len, d_model),
                                        jnp.float32),
                   jax.ShapeDtypeStruct((bq, n_token_pad), jnp.float32)),
    )(hp, masks, w_slab, lbias, vecs, lw)


# ------------------------------ glue ----------------------------------------
def xlnet_forward(params, inp_k, seg_id, input_mask):
    """mems=None, perm_mask=None, target_mapping=None, inp_q=None path."""
    qlen, bsz = inp_k.shape
    d_model = params["embedding"].shape[1]
    n_token = params["embedding"].shape[0]
    klen = qlen                                   # mlen = 0

    # attn_type='bi' -> base attn_mask is None; build data mask from input_mask
    data_mask = input_mask[None]                                   # [1, k, b]
    attn_mask = (data_mask[:, :, :, None] > 0).astype(jnp.float32)
    non_tgt = -jnp.eye(qlen, dtype=jnp.float32)
    non_tgt_mask = ((attn_mask + non_tgt[:, :, None, None]) > 0
                    ).astype(jnp.float32)                          # [q, k, b, 1]
    mask_bqk = jnp.transpose(non_tgt_mask[:, :, :, 0], (2, 0, 1))  # [b, q, k]
    # fold batch into rows: block-diagonal flat mask (cross-batch pairs masked)
    same_b = jnp.eye(bsz, dtype=jnp.float32)
    mask_flat = ((1.0 - same_b)[:, None, :, None]
                 + same_b[:, None, :, None] * mask_bqk[:, :, None, :]
                 ).reshape(bsz * qlen, bsz * qlen)

    # segment match matrix, flat batch-major (cross-batch pairs masked anyway)
    seg_bq = jnp.transpose(seg_id, (1, 0)).reshape(bsz * qlen)
    seg_same = (seg_bq[:, None] == seg_bq[None, :]).astype(jnp.float32)
    # pack masks into one slab; pre-scale the attention mask by -1e30 here
    masks = jnp.stack([seg_same, -1e30 * mask_flat], axis=0)

    # relative positional encoding ('bi', bi_data=False, no clamping)
    freq_seq = jnp.arange(0, d_model, 2.0, dtype=jnp.float32)
    inv_freq = 1.0 / (10000.0 ** (freq_seq / d_model))
    pos_seq = jnp.arange(klen, -qlen, -1.0, dtype=jnp.float32)
    sinusoid = pos_seq[:, None] * inv_freq[None, :]
    pos_emb = jnp.concatenate([jnp.sin(sinusoid), jnp.cos(sinusoid)], axis=-1)

    # embedding lookup (gather stays in XLA); ONE transpose to batch-major rows
    word_emb_k = params["embedding"][inp_k]                        # [q, b, d]
    h0 = jnp.transpose(word_emb_k, (1, 0, 2)).reshape(bsz * qlen, d_model)
    hp = jnp.concatenate([h0, pos_emb], axis=0)                    # [bq+rlen, d]

    mems_out, logits_pad = xlnet_fused_pallas(
        hp, masks, params["w_slab"], params["lbias"], params["vecs"],
        params["lw"], bsz=bsz, qlen=qlen, n_head=N_HEAD, d_head=D_HEAD,
        mem_len=MEM_LEN)

    logits = jnp.transpose(logits_pad[:, :n_token].reshape(bsz, qlen, n_token),
                           (1, 0, 2))                              # [q, b, n_token]

    # _cache_mem (reuse_len=0, prev_mem=None): last MEM_LEN positions of each
    # layer's input hidden state in [mem_len, bsz, d_model] layout.
    # Layer 0's is just the embedded input; deeper ones come from the kernel.
    new_mems = [word_emb_k[qlen - MEM_LEN:]]
    for l in range(1, N_LAYER):
        m = mems_out[l - 1].reshape(bsz, MEM_LEN, d_model)
        new_mems.append(jnp.transpose(m, (1, 0, 2)))
    return logits, new_mems


# ---------------------- pure-JAX reference (for checking) -------------------
def _ref_rel_shift(x, klen):
    q, r, b, n = x.shape
    x = x.reshape(r, q, b, n)[1:]
    x = x.reshape(q, r - 1, b, n)
    return x[:, :klen]


def reference_forward(raw, inp_k, seg_id, input_mask):
    qlen, bsz = inp_k.shape
    d_model = raw["embedding"].shape[1]
    klen = qlen
    data_mask = input_mask[None]
    attn_mask = (data_mask[:, :, :, None] > 0).astype(jnp.float32)
    non_tgt = -jnp.eye(qlen, dtype=jnp.float32)
    non_tgt_mask = ((attn_mask + non_tgt[:, :, None, None]) > 0).astype(jnp.float32)

    output_h = raw["embedding"][inp_k]
    neq = (seg_id[:, None] != seg_id[None, :]).astype(jnp.int32)
    seg_mat = jnp.eye(2, dtype=jnp.float32)[neq]                  # [q,k,b,2]

    freq_seq = jnp.arange(0, d_model, 2.0, dtype=jnp.float32)
    inv_freq = 1.0 / (10000.0 ** (freq_seq / d_model))
    pos_seq = jnp.arange(klen, -qlen, -1.0, dtype=jnp.float32)
    sinusoid = pos_seq[:, None] * inv_freq[None, :]
    pos_emb = jnp.concatenate([jnp.sin(sinusoid), jnp.cos(sinusoid)], axis=-1)

    def layer_norm(x):
        mu = jnp.mean(x, axis=-1, keepdims=True)
        var = jnp.mean((x - mu) ** 2, axis=-1, keepdims=True)
        return (x - mu) / jnp.sqrt(var + LN_EPS) * raw["ln_g"] + raw["ln_b"]

    scale = 1.0 / (D_HEAD ** 0.5)
    new_mems = []
    for i in range(N_LAYER):
        new_mems.append(output_h[-MEM_LEN:])
        h = output_h
        q = jnp.einsum("ibh,hnd->ibnd", h, raw["wq"])
        k = jnp.einsum("ibh,hnd->ibnd", h, raw["wk"])
        v = jnp.einsum("ibh,hnd->ibnd", h, raw["wv"])
        kr = jnp.einsum("ih,hnd->ind", pos_emb, raw["wr"])
        rw, rr, rs = raw["r_w_bias"][i], raw["r_r_bias"][i], raw["r_s_bias"][i]
        ac = jnp.einsum("ibnd,jbnd->ijbn", q + rw, k)
        bd = _ref_rel_shift(jnp.einsum("ibnd,jnd->ijbn", q + rr, kr), klen)
        ef = jnp.einsum("ibnd,snd->ibns", q + rs, raw["seg_embed"][i])
        ef = jnp.einsum("ijbs,ibns->ijbn", seg_mat, ef)
        score = (ac + bd + ef) * scale - 1e30 * non_tgt_mask
        prob = jax.nn.softmax(score, axis=1)
        attn_vec = jnp.einsum("ijbn,jbnd->ibnd", prob, v)
        attn_out = jnp.einsum("ibnd,hnd->ibh", attn_vec, raw["proj_o"])
        ln1 = layer_norm(attn_out + h)
        ff = jnp.maximum(ln1 @ raw["conv1_w"].T + raw["conv1_b"], 0.0)
        output_h = layer_norm(ff + ln1)

    logits = jnp.einsum("ibd,nd->ibn", output_h, raw["embedding"]) + raw["softmax_b"]
    return logits, new_mems


# ------------------------------- main ---------------------------------------
if __name__ == "__main__":
    key = jax.random.PRNGKey(0)
    ks = jax.random.split(key, 14)
    raw = {
        "embedding": 0.5 * jax.random.normal(ks[0], (N_TOKEN, D_MODEL), jnp.float32),
        "r_w_bias": 0.1 * jax.random.normal(ks[1], (N_LAYER, N_HEAD, D_HEAD), jnp.float32),
        "r_r_bias": 0.1 * jax.random.normal(ks[2], (N_LAYER, N_HEAD, D_HEAD), jnp.float32),
        "r_s_bias": 0.1 * jax.random.normal(ks[3], (N_LAYER, N_HEAD, D_HEAD), jnp.float32),
        "seg_embed": 0.1 * jax.random.normal(ks[4], (N_LAYER, 2, N_HEAD, D_HEAD), jnp.float32),
        "proj_o": 0.1 * jax.random.normal(ks[5], (D_MODEL, N_HEAD, D_HEAD), jnp.float32),
        "wq": 0.1 * jax.random.normal(ks[6], (D_MODEL, N_HEAD, D_HEAD), jnp.float32),
        "wk": 0.1 * jax.random.normal(ks[7], (D_MODEL, N_HEAD, D_HEAD), jnp.float32),
        "wv": 0.1 * jax.random.normal(ks[8], (D_MODEL, N_HEAD, D_HEAD), jnp.float32),
        "wr": 0.1 * jax.random.normal(ks[9], (D_MODEL, N_HEAD, D_HEAD), jnp.float32),
        "ln_g": jnp.ones((D_MODEL,), jnp.float32),
        "ln_b": jnp.zeros((D_MODEL,), jnp.float32),
        "conv1_w": 0.1 * jax.random.normal(ks[10], (D_INNER, D_MODEL), jnp.float32),
        "conv1_b": 0.1 * jax.random.normal(ks[11], (D_INNER,), jnp.float32),
        "softmax_b": jnp.zeros((N_TOKEN,), jnp.float32),
        # TODO(synk): mask_emb and conv2 exist in the torch module but are never
        # used on this forward path (inp_q=None; conv2 is never called).
    }

    HD = N_HEAD * D_HEAD
    # Required by this forward path / the slab packing (fail loudly otherwise):
    assert D_INNER == D_MODEL, "positionwise_ffn adds conv1(x) to x"
    assert HD == D_MODEL, "weight-slab packing assumes n_head*d_head == d_model"
    N_TOKEN_PAD = ((N_TOKEN + 127) // 128) * 128     # lane-dense logits output

    # ---- pack parameters into a few slabs (done once, outside the kernel) ----
    wq = raw["wq"].reshape(D_MODEL, HD)
    wk = raw["wk"].reshape(D_MODEL, HD)
    wv = raw["wv"].reshape(D_MODEL, HD)
    wr = raw["wr"].reshape(D_MODEL, HD)
    po_t = raw["proj_o"].reshape(D_MODEL, HD).T          # [HD, d_model]
    w1_t = raw["conv1_w"].T                              # [d_model, d_inner]
    w_slab = jnp.concatenate([wq, wk, wv, wr, po_t, w1_t], axis=1)  # [32, 192]

    rw = raw["r_w_bias"].reshape(N_LAYER, 1, HD)
    rr = raw["r_r_bias"].reshape(N_LAYER, 1, HD)
    rs = raw["r_s_bias"].reshape(N_LAYER, 1, HD)
    seg = raw["seg_embed"].reshape(N_LAYER, 2, HD)
    # block-diagonal segment weight: row n = "same" emb of head n (cols of head n),
    # row n_head+n = "diff" emb of head n; zeros elsewhere.
    segblk = jnp.zeros((N_LAYER, 2 * N_HEAD, HD), jnp.float32)
    for n in range(N_HEAD):
        lo, hi = n * D_HEAD, (n + 1) * D_HEAD
        segblk = segblk.at[:, n, lo:hi].set(seg[:, 0, lo:hi])
        segblk = segblk.at[:, N_HEAD + n, lo:hi].set(seg[:, 1, lo:hi])
    lbias = jnp.concatenate([rw, rr, rs, segblk], axis=1)  # [N_LAYER, 3+2*N_HEAD, HD]

    vecs = jnp.stack([raw["ln_g"], raw["ln_b"], raw["conv1_b"]], axis=0)  # [3, 32]

    lw = jnp.zeros((D_MODEL + 1, N_TOKEN_PAD), jnp.float32)
    lw = lw.at[:D_MODEL, :N_TOKEN].set(raw["embedding"].T)
    lw = lw.at[D_MODEL, :N_TOKEN].set(raw["softmax_b"])

    params = {"embedding": raw["embedding"], "w_slab": w_slab,
              "lbias": lbias, "vecs": vecs, "lw": lw}

    k_inp, k_seg, _ = jax.random.split(ks[12], 3)
    inp_k = jax.random.randint(k_inp, (QLEN, BSZ), 0, N_TOKEN, dtype=jnp.int32)
    seg_id = jax.random.randint(k_seg, (QLEN, BSZ), 0, 2, dtype=jnp.int32)
    # input_mask: 0 for real tokens, 1 for padding (pad the last 2 tokens of batch 0)
    input_mask = jnp.zeros((QLEN, BSZ), jnp.float32).at[QLEN - 2:, 0].set(1.0)

    logits, new_mems = jax.jit(xlnet_forward)(params, inp_k, seg_id, input_mask)
    jax.block_until_ready(logits)

    ref_logits, ref_mems = reference_forward(raw, inp_k, seg_id, input_mask)
    np.testing.assert_allclose(np.asarray(logits), np.asarray(ref_logits),
                               rtol=2e-3, atol=2e-3)
    for got, ref in zip(new_mems, ref_mems):
        np.testing.assert_allclose(np.asarray(got), np.asarray(ref),
                                   rtol=2e-3, atol=2e-3)
    print("KERNEL_OK")
</pallas_src>

<mosaic_0001>
module attributes {stable_mosaic.version = 11 : i64} {
  func.func @xlnet_fused_kernel(%arg0: memref<32x32xf32, #tpu.memory_space<vmem>>, %arg1: memref<2x16x16xf32, #tpu.memory_space<vmem>>, %arg2: memref<32x192xf32, #tpu.memory_space<vmem>>, %arg3: memref<2x11x32xf32, #tpu.memory_space<vmem>>, %arg4: memref<3x32xf32, #tpu.memory_space<vmem>>, %arg5: memref<33x128xf32, #tpu.memory_space<vmem>>, %arg6: memref<1x8x32xf32, #tpu.memory_space<vmem>>, %arg7: memref<16x128xf32, #tpu.memory_space<vmem>>) attributes {dimension_semantics = [], scalar_prefetch = 0 : i64, scratch_operands = 0 : i64, tpu.core_type = #tpu.core_type<tc>} {
    %c0 = arith.constant 0 : index
    %c0_0 = arith.constant 0 : index
    %0 = vector.load %arg0[%c0, %c0_0] : memref<32x32xf32, #tpu.memory_space<vmem>>, vector<32x32xf32>
    %1 = vector.extract_strided_slice %0 {offsets = [0, 0], sizes = [16, 32], strides = [1, 1]} : vector<32x32xf32> to vector<16x32xf32>
    %2 = vector.extract_strided_slice %0 {offsets = [16, 0], sizes = [16, 32], strides = [1, 1]} : vector<32x32xf32> to vector<16x32xf32>
    %c0_1 = arith.constant 0 : index
    %c0_2 = arith.constant 0 : index
    %c0_3 = arith.constant 0 : index
    %3 = vector.load %arg1[%c0_1, %c0_2, %c0_3] : memref<2x16x16xf32, #tpu.memory_space<vmem>>, vector<1x16x16xf32>
    %4 = vector.shape_cast %3 : vector<1x16x16xf32> to vector<16x16xf32>
    %c1 = arith.constant 1 : index
    %c0_4 = arith.constant 0 : index
    %c0_5 = arith.constant 0 : index
    %5 = vector.load %arg1[%c1, %c0_4, %c0_5] : memref<2x16x16xf32, #tpu.memory_space<vmem>>, vector<1x16x16xf32>
    %6 = vector.shape_cast %5 : vector<1x16x16xf32> to vector<16x16xf32>
    %c0_6 = arith.constant 0 : index
    %c0_7 = arith.constant 0 : index
    %7 = vector.load %arg2[%c0_6, %c0_7] : memref<32x192xf32, #tpu.memory_space<vmem>>, vector<32x192xf32>
    %8 = vector.extract_strided_slice %7 {offsets = [0, 0], sizes = [32, 96], strides = [1, 1]} : vector<32x192xf32> to vector<32x96xf32>
    %9 = vector.extract_strided_slice %7 {offsets = [0, 96], sizes = [32, 32], strides = [1, 1]} : vector<32x192xf32> to vector<32x32xf32>
    %10 = vector.extract_strided_slice %7 {offsets = [0, 128], sizes = [32, 32], strides = [1, 1]} : vector<32x192xf32> to vector<32x32xf32>
    %11 = vector.extract_strided_slice %7 {offsets = [0, 160], sizes = [32, 32], strides = [1, 1]} : vector<32x192xf32> to vector<32x32xf32>
    %c0_8 = arith.constant 0 : index
    %c0_9 = arith.constant 0 : index
    %12 = vector.load %arg4[%c0_8, %c0_9] : memref<3x32xf32, #tpu.memory_space<vmem>>, vector<1x32xf32>
    %c1_10 = arith.constant 1 : index
    %c0_11 = arith.constant 0 : index
    %13 = vector.load %arg4[%c1_10, %c0_11] : memref<3x32xf32, #tpu.memory_space<vmem>>, vector<1x32xf32>
    %c2 = arith.constant 2 : index
    %c0_12 = arith.constant 0 : index
    %14 = vector.load %arg4[%c2, %c0_12] : memref<3x32xf32, #tpu.memory_space<vmem>>, vector<1x32xf32>
    %c0_13 = arith.constant 0 : index
    %c0_14 = arith.constant 0 : index
    %15 = vector.load %arg5[%c0_13, %c0_14] : memref<33x128xf32, #tpu.memory_space<vmem>>, vector<33x128xf32>
    %16 = vector.extract_strided_slice %15 {offsets = [0, 0], sizes = [32, 128], strides = [1, 1]} : vector<33x128xf32> to vector<32x128xf32>
    %17 = vector.extract_strided_slice %15 {offsets = [32, 0], sizes = [1, 128], strides = [1, 1]} : vector<33x128xf32> to vector<1x128xf32>
    %cst = arith.constant dense<0.000000e+00> : vector<16x32xf32>
    %18 = tpu.matmul %2, %9, %cst {dimension_numbers = #tpu.dot_dimension_numbers<[1], [0], [0], [1], [0, 0, 1, 1], [], []>} : vector<16x32xf32>, vector<32x32xf32>, vector<16x32xf32> -> vector<16x32xf32>
    %19 = tpu.iota {dimensions = array<i32: 0>} : vector<64x1xi32>
    %c0_15 = arith.constant 0 : index
    %c0_16 = arith.constant 0 : index
    %c0_17 = arith.constant 0 : index
    %20 = vector.load %arg3[%c0_15, %c0_16, %c0_17] : memref<2x11x32xf32, #tpu.memory_space<vmem>>, vector<1x11x32xf32>
    %21 = vector.shape_cast %20 : vector<1x11x32xf32> to vector<11x32xf32>
    %22 = vector.extract_strided_slice %21 {offsets = [0, 0], sizes = [1, 32], strides = [1, 1]} : vector<11x32xf32> to vector<1x32xf32>
    %23 = vector.extract_strided_slice %21 {offsets = [1, 0], sizes = [1, 32], strides = [1, 1]} : vector<11x32xf32> to vector<1x32xf32>
    %24 = vector.extract_strided_slice %21 {offsets = [2, 0], sizes = [1, 32], strides = [1, 1]} : vector<11x32xf32> to vector<1x32xf32>
    %25 = vector.extract_strided_slice %21 {offsets = [3, 0], sizes = [8, 32], strides = [1, 1]} : vector<11x32xf32> to vector<8x32xf32>
    %cst_18 = arith.constant dense<0.000000e+00> : vector<16x96xf32>
    %26 = tpu.matmul %1, %8, %cst_18 {dimension_numbers = #tpu.dot_dimension_numbers<[1], [0], [0], [1], [0, 0, 1, 1], [], []>} : vector<16x32xf32>, vector<32x96xf32>, vector<16x96xf32> -> vector<16x96xf32>
    %27 = vector.extract_strided_slice %26 {offsets = [0, 0], sizes = [16, 32], strides = [1, 1]} : vector<16x96xf32> to vector<16x32xf32>
    %28 = vector.extract_strided_slice %26 {offsets = [0, 32], sizes = [16, 32], strides = [1, 1]} : vector<16x96xf32> to vector<16x32xf32>
    %29 = vector.extract_strided_slice %26 {offsets = [0, 64], sizes = [16, 32], strides = [1, 1]} : vector<16x96xf32> to vector<16x32xf32>
    %30 = vector.broadcast %22 : vector<1x32xf32> to vector<16x32xf32>
    %31 = arith.addf %27, %30 : vector<16x32xf32>
    %32 = vector.broadcast %23 : vector<1x32xf32> to vector<16x32xf32>
    %33 = arith.addf %27, %32 : vector<16x32xf32>
    %34 = vector.broadcast %24 : vector<1x32xf32> to vector<16x32xf32>
    %35 = arith.addf %27, %34 : vector<16x32xf32>
    %cst_19 = arith.constant dense<0.000000e+00> : vector<16x8xf32>
    %36 = tpu.matmul %35, %25, %cst_19 {dimension_numbers = #tpu.dot_dimension_numbers<[1], [1], [0], [0], [0, 0, 1, 0], [], []>} : vector<16x32xf32>, vector<8x32xf32>, vector<16x8xf32> -> vector<16x8xf32>
    %37 = tpu.concatenate %31, %33 in 0 : vector<16x32xf32>, vector<16x32xf32> -> vector<32x32xf32>
    %38 = tpu.concatenate %28, %18 in 0 : vector<16x32xf32>, vector<16x32xf32> -> vector<32x32xf32>
    %39 = vector.extract_strided_slice %37 {offsets = [0, 0], sizes = [32, 8], strides = [1, 1]} : vector<32x32xf32> to vector<32x8xf32>
    %40 = vector.extract_strided_slice %38 {offsets = [0, 0], sizes = [32, 8], strides = [1, 1]} : vector<32x32xf32> to vector<32x8xf32>
    %cst_20 = arith.constant dense<0.000000e+00> : vector<32x32xf32>
    %41 = tpu.matmul %39, %40, %cst_20 {dimension_numbers = #tpu.dot_dimension_numbers<[1], [1], [0], [0], [0, 0, 1, 0], [], []>} : vector<32x8xf32>, vector<32x8xf32>, vector<32x32xf32> -> vector<32x32xf32>
    %42 = vector.extract_strided_slice %41 {offsets = [0, 0], sizes = [16, 16], strides = [1, 1]} : vector<32x32xf32> to vector<16x16xf32>
    %43 = vector.extract_strided_slice %41 {offsets = [16, 16], sizes = [16, 16], strides = [1, 1]} : vector<32x32xf32> to vector<16x16xf32>
    %44 = vector.extract_strided_slice %37 {offsets = [0, 8], sizes = [32, 8], strides = [1, 1]} : vector<32x32xf32> to vector<32x8xf32>
    %45 = vector.extract_strided_slice %38 {offsets = [0, 8], sizes = [32, 8], strides = [1, 1]} : vector<32x32xf32> to vector<32x8xf32>
    %cst_21 = arith.constant dense<0.000000e+00> : vector<32x32xf32>
    %46 = tpu.matmul %44, %45, %cst_21 {dimension_numbers = #tpu.dot_dimension_numbers<[1], [1], [0], [0], [0, 0, 1, 0], [], []>} : vector<32x8xf32>, vector<32x8xf32>, vector<32x32xf32> -> vector<32x32xf32>
    %47 = vector.extract_strided_slice %46 {offsets = [0, 0], sizes = [16, 16], strides = [1, 1]} : vector<32x32xf32> to vector<16x16xf32>
    %48 = vector.extract_strided_slice %46 {offsets = [16, 16], sizes = [16, 16], strides = [1, 1]} : vector<32x32xf32> to vector<16x16xf32>
    %49 = vector.extract_strided_slice %37 {offsets = [0, 16], sizes = [32, 8], strides = [1, 1]} : vector<32x32xf32> to vector<32x8xf32>
    %50 = vector.extract_strided_slice %38 {offsets = [0, 16], sizes = [32, 8], strides = [1, 1]} : vector<32x32xf32> to vector<32x8xf32>
    %cst_22 = arith.constant dense<0.000000e+00> : vector<32x32xf32>
    %51 = tpu.matmul %49, %50, %cst_22 {dimension_numbers = #tpu.dot_dimension_numbers<[1], [1], [0], [0], [0, 0, 1, 0], [], []>} : vector<32x8xf32>, vector<32x8xf32>, vector<32x32xf32> -> vector<32x32xf32>
    %52 = vector.extract_strided_slice %51 {offsets = [0, 0], sizes = [16, 16], strides = [1, 1]} : vector<32x32xf32> to vector<16x16xf32>
    %53 = vector.extract_strided_slice %51 {offsets = [16, 16], sizes = [16, 16], strides = [1, 1]} : vector<32x32xf32> to vector<16x16xf32>
    %54 = vector.extract_strided_slice %37 {offsets = [0, 24], sizes = [32, 8], strides = [1, 1]} : vector<32x32xf32> to vector<32x8xf32>
    %55 = vector.extract_strided_slice %38 {offsets = [0, 24], sizes = [32, 8], strides = [1, 1]} : vector<32x32xf32> to vector<32x8xf32>
    %cst_23 = arith.constant dense<0.000000e+00> : vector<32x32xf32>
    %56 = tpu.matmul %54, %55, %cst_23 {dimension_numbers = #tpu.dot_dimension_numbers<[1], [1], [0], [0], [0, 0, 1, 0], [], []>} : vector<32x8xf32>, vector<32x8xf32>, vector<32x32xf32> -> vector<32x32xf32>
    %57 = vector.extract_strided_slice %56 {offsets = [0, 0], sizes = [16, 16], strides = [1, 1]} : vector<32x32xf32> to vector<16x16xf32>
    %58 = vector.extract_strided_slice %56 {offsets = [16, 16], sizes = [16, 16], strides = [1, 1]} : vector<32x32xf32> to vector<16x16xf32>
    %59 = tpu.concatenate %43, %48, %53, %58 in 0 : vector<16x16xf32>, vector<16x16xf32>, vector<16x16xf32>, vector<16x16xf32> -> vector<64x16xf32>
    %60 = vector.extract_strided_slice %59 {offsets = [0, 15], sizes = [64, 1], strides = [1, 1]} : vector<64x16xf32> to vector<64x1xf32>
    %61 = vector.extract_strided_slice %59 {offsets = [0, 0], sizes = [64, 15], strides = [1, 1]} : vector<64x16xf32> to vector<64x15xf32>
    %62 = tpu.concatenate %60, %61 in 1 : vector<64x1xf32>, vector<64x15xf32> -> vector<64x16xf32>
    %c1_i32 = arith.constant 1 : i32
    %63 = vector.broadcast %c1_i32 : i32 to vector<64x1xi32>
    %64 = arith.andi %19, %63 : vector<64x1xi32>
    %c0_i32 = arith.constant 0 : i32
    %65 = vector.broadcast %c0_i32 : i32 to vector<64x1xi32>
    %66 = arith.cmpi ne, %64, %65 : vector<64x1xi32>
    %67 = vector.shape_cast %66 : vector<64x1xi1> to vector<64x1xi1>
    %68 = vector.broadcast %67 : vector<64x1xi1> to vector<64x16xi1>
    %69 = arith.select %68, %62, %59 : vector<64x16xi1>, vector<64x16xf32>
    %70 = vector.extract_strided_slice %69 {offsets = [0, 14], sizes = [64, 2], strides = [1, 1]} : vector<64x16xf32> to vector<64x2xf32>
    %71 = vector.extract_strided_slice %69 {offsets = [0, 0], sizes = [64, 14], strides = [1, 1]} : vector<64x16xf32> to vector<64x14xf32>
    %72 = tpu.concatenate %70, %71 in 1 : vector<64x2xf32>, vector<64x14xf32> -> vector<64x16xf32>
    %c2_i32 = arith.constant 2 : i32
    %73 = vector.broadcast %c2_i32 : i32 to vector<64x1xi32>
    %74 = arith.andi %19, %73 : vector<64x1xi32>
    %c0_i32_24 = arith.constant 0 : i32
    %75 = vector.broadcast %c0_i32_24 : i32 to vector<64x1xi32>
    %76 = arith.cmpi ne, %74, %75 : vector<64x1xi32>
    %77 = vector.shape_cast %76 : vector<64x1xi1> to vector<64x1xi1>
    %78 = vector.broadcast %77 : vector<64x1xi1> to vector<64x16xi1>
    %79 = arith.select %78, %72, %69 : vector<64x16xi1>, vector<64x16xf32>
    %80 = vector.extract_strided_slice %79 {offsets = [0, 12], sizes = [64, 4], strides = [1, 1]} : vector<64x16xf32> to vector<64x4xf32>
    %81 = vector.extract_strided_slice %79 {offsets = [0, 0], sizes = [64, 12], strides = [1, 1]} : vector<64x16xf32> to vector<64x12xf32>
    %82 = tpu.concatenate %80, %81 in 1 : vector<64x4xf32>, vector<64x12xf32> -> vector<64x16xf32>
    %c4_i32 = arith.constant 4 : i32
    %83 = vector.broadcast %c4_i32 : i32 to vector<64x1xi32>
    %84 = arith.andi %19, %83 : vector<64x1xi32>
    %c0_i32_25 = arith.constant 0 : i32
    %85 = vector.broadcast %c0_i32_25 : i32 to vector<64x1xi32>
    %86 = arith.cmpi ne, %84, %85 : vector<64x1xi32>
    %87 = vector.shape_cast %86 : vector<64x1xi1> to vector<64x1xi1>
    %88 = vector.broadcast %87 : vector<64x1xi1> to vector<64x16xi1>
    %89 = arith.select %88, %82, %79 : vector<64x16xi1>, vector<64x16xf32>
    %90 = vector.extract_strided_slice %89 {offsets = [0, 8], sizes = [64, 8], strides = [1, 1]} : vector<64x16xf32> to vector<64x8xf32>
    %91 = tpu.concatenate %90, %90 in 1 : vector<64x8xf32>, vector<64x8xf32> -> vector<64x16xf32>
    %92 = vector.extract_strided_slice %36 {offsets = [0, 0], sizes = [16, 1], strides = [1, 1]} : vector<16x8xf32> to vector<16x1xf32>
    %93 = vector.extract_strided_slice %36 {offsets = [0, 4], sizes = [16, 1], strides = [1, 1]} : vector<16x8xf32> to vector<16x1xf32>
    %94 = arith.subf %92, %93 : vector<16x1xf32>
    %95 = vector.broadcast %94 : vector<16x1xf32> to vector<16x16xf32>
    %96 = arith.mulf %4, %95 : vector<16x16xf32>
    %97 = vector.broadcast %93 : vector<16x1xf32> to vector<16x16xf32>
    %98 = arith.addf %97, %96 : vector<16x16xf32>
    %99 = vector.extract_strided_slice %91 {offsets = [0, 0], sizes = [16, 16], strides = [1, 1]} : vector<64x16xf32> to vector<16x16xf32>
    %100 = arith.addf %42, %99 : vector<16x16xf32>
    %101 = arith.addf %100, %98 : vector<16x16xf32>
    %cst_26 = arith.constant 0.353553385 : f32
    %102 = vector.broadcast %cst_26 : f32 to vector<16x16xf32>
    %103 = arith.mulf %101, %102 : vector<16x16xf32>
    %104 = arith.addf %103, %6 : vector<16x16xf32>
    %cst_27 = arith.constant dense<0xFF800000> : vector<16xf32>
    %105 = vector.multi_reduction <maximumf>, %104, %cst_27 [1] : vector<16x16xf32> to vector<16xf32>
    %106 = vector.shape_cast %105 : vector<16xf32> to vector<16x1xf32>
    %107 = vector.broadcast %106 : vector<16x1xf32> to vector<16x16xf32>
    %108 = arith.subf %104, %107 : vector<16x16xf32>
    %109 = math.exp %108 : vector<16x16xf32>
    %cst_28 = arith.constant dense<0.000000e+00> : vector<16xf32>
    %110 = vector.multi_reduction <add>, %109, %cst_28 [1] : vector<16x16xf32> to vector<16xf32>
    %111 = vector.shape_cast %110 : vector<16xf32> to vector<16x1xf32>
    %112 = vector.broadcast %111 : vector<16x1xf32> to vector<16x16xf32>
    %113 = arith.divf %109, %112 : vector<16x16xf32>
    %114 = vector.extract_strided_slice %29 {offsets = [0, 0], sizes = [16, 8], strides = [1, 1]} : vector<16x32xf32> to vector<16x8xf32>
    %cst_29 = arith.constant dense<0.000000e+00> : vector<16x8xf32>
    %115 = tpu.matmul %113, %114, %cst_29 {dimension_numbers = #tpu.dot_dimension_numbers<[1], [0], [0], [1], [0, 0, 1, 1], [], []>} : vector<16x16xf32>, vector<16x8xf32>, vector<16x8xf32> -> vector<16x8xf32>
    %116 = vector.extract_strided_slice %10 {offsets = [0, 0], sizes = [8, 32], strides = [1, 1]} : vector<32x32xf32> to vector<8x32xf32>
    %cst_30 = arith.constant dense<0.000000e+00> : vector<16x32xf32>
    %117 = tpu.matmul %115, %116, %cst_30 {dimension_numbers = #tpu.dot_dimension_numbers<[1], [0], [0], [1], [0, 0, 1, 1], [], []>} : vector<16x8xf32>, vector<8x32xf32>, vector<16x32xf32> -> vector<16x32xf32>
    %118 = vector.extract_strided_slice %36 {offsets = [0, 1], sizes = [16, 1], strides = [1, 1]} : vector<16x8xf32> to vector<16x1xf32>
    %119 = vector.extract_strided_slice %36 {offsets = [0, 5], sizes = [16, 1], strides = [1, 1]} : vector<16x8xf32> to vector<16x1xf32>
    %120 = arith.subf %118, %119 : vector<16x1xf32>
    %121 = vector.broadcast %120 : vector<16x1xf32> to vector<16x16xf32>
    %122 = arith.mulf %4, %121 : vector<16x16xf32>
    %123 = vector.broadcast %119 : vector<16x1xf32> to vector<16x16xf32>
    %124 = arith.addf %123, %122 : vector<16x16xf32>
    %125 = vector.extract_strided_slice %91 {offsets = [16, 0], sizes = [16, 16], strides = [1, 1]} : vector<64x16xf32> to vector<16x16xf32>
    %126 = arith.addf %47, %125 : vector<16x16xf32>
    %127 = arith.addf %126, %124 : vector<16x16xf32>
    %cst_31 = arith.constant 0.353553385 : f32
    %128 = vector.broadcast %cst_31 : f32 to vector<16x16xf32>
    %129 = arith.mulf %127, %128 : vector<16x16xf32>
    %130 = arith.addf %129, %6 : vector<16x16xf32>
    %cst_32 = arith.constant dense<0xFF800000> : vector<16xf32>
    %131 = vector.multi_reduction <maximumf>, %130, %cst_32 [1] : vector<16x16xf32> to vector<16xf32>
    %132 = vector.shape_cast %131 : vector<16xf32> to vector<16x1xf32>
    %133 = vector.broadcast %132 : vector<16x1xf32> to vector<16x16xf32>
    %134 = arith.subf %130, %133 : vector<16x16xf32>
    %135 = math.exp %134 : vector<16x16xf32>
    %cst_33 = arith.constant dense<0.000000e+00> : vector<16xf32>
    %136 = vector.multi_reduction <add>, %135, %cst_33 [1] : vector<16x16xf32> to vector<16xf32>
    %137 = vector.shape_cast %136 : vector<16xf32> to vector<16x1xf32>
    %138 = vector.broadcast %137 : vector<16x1xf32> to vector<16x16xf32>
    %139 = arith.divf %135, %138 : vector<16x16xf32>
    %140 = vector.extract_strided_slice %29 {offsets = [0, 8], sizes = [16, 8], strides = [1, 1]} : vector<16x32xf32> to vector<16x8xf32>
    %cst_34 = arith.constant dense<0.000000e+00> : vector<16x8xf32>
    %141 = tpu.matmul %139, %140, %cst_34 {dimension_numbers = #tpu.dot_dimension_numbers<[1], [0], [0], [1], [0, 0, 1, 1], [], []>} : vector<16x16xf32>, vector<16x8xf32>, vector<16x8xf32> -> vector<16x8xf32>
    %142 = vector.extract_strided_slice %10 {offsets = [8, 0], sizes = [8, 32], strides = [1, 1]} : vector<32x32xf32> to vector<8x32xf32>
    %cst_35 = arith.constant dense<0.000000e+00> : vector<16x32xf32>
    %143 = tpu.matmul %141, %142, %cst_35 {dimension_numbers = #tpu.dot_dimension_numbers<[1], [0], [0], [1], [0, 0, 1, 1], [], []>} : vector<16x8xf32>, vector<8x32xf32>, vector<16x32xf32> -> vector<16x32xf32>
    %144 = arith.addf %117, %143 : vector<16x32xf32>
    %145 = vector.extract_strided_slice %36 {offsets = [0, 2], sizes = [16, 1], strides = [1, 1]} : vector<16x8xf32> to vector<16x1xf32>
    %146 = vector.extract_strided_slice %36 {offsets = [0, 6], sizes = [16, 1], strides = [1, 1]} : vector<16x8xf32> to vector<16x1xf32>
    %147 = arith.subf %145, %146 : vector<16x1xf32>
    %148 = vector.broadcast %147 : vector<16x1xf32> to vector<16x16xf32>
    %149 = arith.mulf %4, %148 : vector<16x16xf32>
    %150 = vector.broadcast %146 : vector<16x1xf32> to vector<16x16xf32>
    %151 = arith.addf %150, %149 : vector<16x16xf32>
    %152 = vector.extract_strided_slice %91 {offsets = [32, 0], sizes = [16, 16], strides = [1, 1]} : vector<64x16xf32> to vector<16x16xf32>
    %153 = arith.addf %52, %152 : vector<16x16xf32>
    %154 = arith.addf %153, %151 : vector<16x16xf32>
    %cst_36 = arith.constant 0.353553385 : f32
    %155 = vector.broadcast %cst_36 : f32 to vector<16x16xf32>
    %156 = arith.mulf %154, %155 : vector<16x16xf32>
    %157 = arith.addf %156, %6 : vector<16x16xf32>
    %cst_37 = arith.constant dense<0xFF800000> : vector<16xf32>
    %158 = vector.multi_reduction <maximumf>, %157, %cst_37 [1] : vector<16x16xf32> to vector<16xf32>
    %159 = vector.shape_cast %158 : vector<16xf32> to vector<16x1xf32>
    %160 = vector.broadcast %159 : vector<16x1xf32> to vector<16x16xf32>
    %161 = arith.subf %157, %160 : vector<16x16xf32>
    %162 = math.exp %161 : vector<16x16xf32>
    %cst_38 = arith.constant dense<0.000000e+00> : vector<16xf32>
    %163 = vector.multi_reduction <add>, %162, %cst_38 [1] : vector<16x16xf32> to vector<16xf32>
    %164 = vector.shape_cast %163 : vector<16xf32> to vector<16x1xf32>
    %165 = vector.broadcast %164 : vector<16x1xf32> to vector<16x16xf32>
    %166 = arith.divf %162, %165 : vector<16x16xf32>
    %167 = vector.extract_strided_slice %29 {offsets = [0, 16], sizes = [16, 8], strides = [1, 1]} : vector<16x32xf32> to vector<16x8xf32>
    %cst_39 = arith.constant dense<0.000000e+00> : vector<16x8xf32>
    %168 = tpu.matmul %166, %167, %cst_39 {dimension_numbers = #tpu.dot_dimension_numbers<[1], [0], [0], [1], [0, 0, 1, 1], [], []>} : vector<16x16xf32>, vector<16x8xf32>, vector<16x8xf32> -> vector<16x8xf32>
    %169 = vector.extract_strided_slice %10 {offsets = [16, 0], sizes = [8, 32], strides = [1, 1]} : vector<32x32xf32> to vector<8x32xf32>
    %cst_40 = arith.constant dense<0.000000e+00> : vector<16x32xf32>
    %170 = tpu.matmul %168, %169, %cst_40 {dimension_numbers = #tpu.dot_dimension_numbers<[1], [0], [0], [1], [0, 0, 1, 1], [], []>} : vector<16x8xf32>, vector<8x32xf32>, vector<16x32xf32> -> vector<16x32xf32>
    %171 = arith.addf %144, %170 : vector<16x32xf32>
    %172 = vector.extract_strided_slice %36 {offsets = [0, 3], sizes = [16, 1], strides = [1, 1]} : vector<16x8xf32> to vector<16x1xf32>
    %173 = vector.extract_strided_slice %36 {offsets = [0, 7], sizes = [16, 1], strides = [1, 1]} : vector<16x8xf32> to vector<16x1xf32>
    %174 = arith.subf %172, %173 : vector<16x1xf32>
    %175 = vector.broadcast %174 : vector<16x1xf32> to vector<16x16xf32>
    %176 = arith.mulf %4, %175 : vector<16x16xf32>
    %177 = vector.broadcast %173 : vector<16x1xf32> to vector<16x16xf32>
    %178 = arith.addf %177, %176 : vector<16x16xf32>
    %179 = vector.extract_strided_slice %91 {offsets = [48, 0], sizes = [16, 16], strides = [1, 1]} : vector<64x16xf32> to vector<16x16xf32>
    %180 = arith.addf %57, %179 : vector<16x16xf32>
    %181 = arith.addf %180, %178 : vector<16x16xf32>
    %cst_41 = arith.constant 0.353553385 : f32
    %182 = vector.broadcast %cst_41 : f32 to vector<16x16xf32>
    %183 = arith.mulf %181, %182 : vector<16x16xf32>
    %184 = arith.addf %183, %6 : vector<16x16xf32>
    %cst_42 = arith.constant dense<0xFF800000> : vector<16xf32>
    %185 = vector.multi_reduction <maximumf>, %184, %cst_42 [1] : vector<16x16xf32> to vector<16xf32>
    %186 = vector.shape_cast %185 : vector<16xf32> to vector<16x1xf32>
    %187 = vector.broadcast %186 : vector<16x1xf32> to vector<16x16xf32>
    %188 = arith.subf %184, %187 : vector<16x16xf32>
    %189 = math.exp %188 : vector<16x16xf32>
    %cst_43 = arith.constant dense<0.000000e+00> : vector<16xf32>
    %190 = vector.multi_reduction <add>, %189, %cst_43 [1] : vector<16x16xf32> to vector<16xf32>
    %191 = vector.shape_cast %190 : vector<16xf32> to vector<16x1xf32>
    %192 = vector.broadcast %191 : vector<16x1xf32> to vector<16x16xf32>
    %193 = arith.divf %189, %192 : vector<16x16xf32>
    %194 = vector.extract_strided_slice %29 {offsets = [0, 24], sizes = [16, 8], strides = [1, 1]} : vector<16x32xf32> to vector<16x8xf32>
    %cst_44 = arith.constant dense<0.000000e+00> : vector<16x8xf32>
    %195 = tpu.matmul %193, %194, %cst_44 {dimension_numbers = #tpu.dot_dimension_numbers<[1], [0], [0], [1], [0, 0, 1, 1], [], []>} : vector<16x16xf32>, vector<16x8xf32>, vector<16x8xf32> -> vector<16x8xf32>
    %196 = vector.extract_strided_slice %10 {offsets = [24, 0], sizes = [8, 32], strides = [1, 1]} : vector<32x32xf32> to vector<8x32xf32>
    %cst_45 = arith.constant dense<0.000000e+00> : vector<16x32xf32>
    %197 = tpu.matmul %195, %196, %cst_45 {dimension_numbers = #tpu.dot_dimension_numbers<[1], [0], [0], [1], [0, 0, 1, 1], [], []>} : vector<16x8xf32>, vector<8x32xf32>, vector<16x32xf32> -> vector<16x32xf32>
    %198 = arith.addf %171, %197 : vector<16x32xf32>
    %199 = arith.addf %198, %1 : vector<16x32xf32>
    %cst_46 = arith.constant dense<0.000000e+00> : vector<16xf32>
    %200 = vector.multi_reduction <add>, %199, %cst_46 [1] : vector<16x32xf32> to vector<16xf32>
    %201 = vector.shape_cast %200 : vector<16xf32> to vector<16x1xf32>
    %cst_47 = arith.constant 3.200000e+01 : f32
    %202 = vector.broadcast %cst_47 : f32 to vector<16x1xf32>
    %203 = arith.divf %201, %202 : vector<16x1xf32>
    %204 = vector.broadcast %203 : vector<16x1xf32> to vector<16x32xf32>
    %205 = arith.subf %199, %204 : vector<16x32xf32>
    %206 = arith.mulf %205, %205 : vector<16x32xf32>
    %cst_48 = arith.constant dense<0.000000e+00> : vector<16xf32>
    %207 = vector.multi_reduction <add>, %206, %cst_48 [1] : vector<16x32xf32> to vector<16xf32>
    %208 = vector.shape_cast %207 : vector<16xf32> to vector<16x1xf32>
    %cst_49 = arith.constant 3.200000e+01 : f32
    %209 = vector.broadcast %cst_49 : f32 to vector<16x1xf32>
    %210 = arith.divf %208, %209 : vector<16x1xf32>
    %211 = vector.broadcast %203 : vector<16x1xf32> to vector<16x32xf32>
    %212 = arith.subf %199, %211 : vector<16x32xf32>
    %cst_50 = arith.constant 9.99999974E-6 : f32
    %213 = vector.broadcast %cst_50 : f32 to vector<16x1xf32>
    %214 = arith.addf %210, %213 : vector<16x1xf32>
    %215 = math.rsqrt %214 : vector<16x1xf32>
    %216 = vector.broadcast %215 : vector<16x1xf32> to vector<16x32xf32>
    %217 = arith.mulf %212, %216 : vector<16x32xf32>
    %218 = vector.broadcast %12 : vector<1x32xf32> to vector<16x32xf32>
    %219 = arith.mulf %217, %218 : vector<16x32xf32>
    %220 = vector.broadcast %13 : vector<1x32xf32> to vector<16x32xf32>
    %221 = arith.addf %219, %220 : vector<16x32xf32>
    %cst_51 = arith.constant dense<0.000000e+00> : vector<16x32xf32>
    %222 = tpu.matmul %221, %11, %cst_51 {dimension_numbers = #tpu.dot_dimension_numbers<[1], [0], [0], [1], [0, 0, 1, 1], [], []>} : vector<16x32xf32>, vector<32x32xf32>, vector<16x32xf32> -> vector<16x32xf32>
    %223 = vector.broadcast %14 : vector<1x32xf32> to vector<16x32xf32>
    %224 = arith.addf %222, %223 : vector<16x32xf32>
    %cst_52 = arith.constant 0.000000e+00 : f32
    %225 = vector.broadcast %cst_52 : f32 to vector<16x32xf32>
    %226 = arith.maximumf %224, %225 : vector<16x32xf32>
    %227 = arith.addf %226, %221 : vector<16x32xf32>
    %cst_53 = arith.constant dense<0.000000e+00> : vector<16xf32>
    %228 = vector.multi_reduction <add>, %227, %cst_53 [1] : vector<16x32xf32> to vector<16xf32>
    %229 = vector.shape_cast %228 : vector<16xf32> to vector<16x1xf32>
    %cst_54 = arith.constant 3.200000e+01 : f32
    %230 = vector.broadcast %cst_54 : f32 to vector<16x1xf32>
    %231 = arith.divf %229, %230 : vector<16x1xf32>
    %232 = vector.broadcast %231 : vector<16x1xf32> to vector<16x32xf32>
    %233 = arith.subf %227, %232 : vector<16x32xf32>
    %234 = arith.mulf %233, %233 : vector<16x32xf32>
    %cst_55 = arith.constant dense<0.000000e+00> : vector<16xf32>
    %235 = vector.multi_reduction <add>, %234, %cst_55 [1] : vector<16x32xf32> to vector<16xf32>
    %236 = vector.shape_cast %235 : vector<16xf32> to vector<16x1xf32>
    %cst_56 = arith.constant 3.200000e+01 : f32
    %237 = vector.broadcast %cst_56 : f32 to vector<16x1xf32>
    %238 = arith.divf %236, %237 : vector<16x1xf32>
    %239 = vector.broadcast %231 : vector<16x1xf32> to vector<16x32xf32>
    %240 = arith.subf %227, %239 : vector<16x32xf32>
    %cst_57 = arith.constant 9.99999974E-6 : f32
    %241 = vector.broadcast %cst_57 : f32 to vector<16x1xf32>
    %242 = arith.addf %238, %241 : vector<16x1xf32>
    %243 = math.rsqrt %242 : vector<16x1xf32>
    %244 = vector.broadcast %243 : vector<16x1xf32> to vector<16x32xf32>
    %245 = arith.mulf %240, %244 : vector<16x32xf32>
    %246 = vector.broadcast %12 : vector<1x32xf32> to vector<16x32xf32>
    %247 = arith.mulf %245, %246 : vector<16x32xf32>
    %248 = vector.broadcast %13 : vector<1x32xf32> to vector<16x32xf32>
    %249 = arith.addf %247, %248 : vector<16x32xf32>
    %250 = vector.extract_strided_slice %249 {offsets = [4, 0], sizes = [4, 32], strides = [1, 1]} : vector<16x32xf32> to vector<4x32xf32>
    %251 = vector.extract_strided_slice %249 {offsets = [12, 0], sizes = [4, 32], strides = [1, 1]} : vector<16x32xf32> to vector<4x32xf32>
    %252 = tpu.concatenate %250, %251 in 0 : vector<4x32xf32>, vector<4x32xf32> -> vector<8x32xf32>
    %c0_58 = arith.constant 0 : index
    %c0_59 = arith.constant 0 : index
    %c0_60 = arith.constant 0 : index
    %253 = vector.load %arg6[%c0_58, %c0_59, %c0_60] : memref<1x8x32xf32, #tpu.memory_space<vmem>>, vector<1x8x32xf32>
    %254 = vector.shape_cast %253 : vector<1x8x32xf32> to vector<8x32xf32>
    %255 = vector.shape_cast %252 : vector<8x32xf32> to vector<1x8x32xf32>
    tpu.vector_store %arg6[%c0_58, %c0_59, %c0_60], %255 {strides = array<i32>} : memref<1x8x32xf32, #tpu.memory_space<vmem>>, vector<1x8x32xf32>,
    %c1_61 = arith.constant 1 : index
    %c0_62 = arith.constant 0 : index
    %c0_63 = arith.constant 0 : index
    %256 = vector.load %arg3[%c1_61, %c0_62, %c0_63] : memref<2x11x32xf32, #tpu.memory_space<vmem>>, vector<1x11x32xf32>
    %257 = vector.shape_cast %256 : vector<1x11x32xf32> to vector<11x32xf32>
    %258 = vector.extract_strided_slice %257 {offsets = [0, 0], sizes = [1, 32], strides = [1, 1]} : vector<11x32xf32> to vector<1x32xf32>
    %259 = vector.extract_strided_slice %257 {offsets = [1, 0], sizes = [1, 32], strides = [1, 1]} : vector<11x32xf32> to vector<1x32xf32>
    %260 = vector.extract_strided_slice %257 {offsets = [2, 0], sizes = [1, 32], strides = [1, 1]} : vector<11x32xf32> to vector<1x32xf32>
    %261 = vector.extract_strided_slice %257 {offsets = [3, 0], sizes = [8, 32], strides = [1, 1]} : vector<11x32xf32> to vector<8x32xf32>
    %cst_64 = arith.constant dense<0.000000e+00> : vector<16x96xf32>
    %262 = tpu.matmul %249, %8, %cst_64 {dimension_numbers = #tpu.dot_dimension_numbers<[1], [0], [0], [1], [0, 0, 1, 1], [], []>} : vector<16x32xf32>, vector<32x96xf32>, vector<16x96xf32> -> vector<16x96xf32>
    %263 = vector.extract_strided_slice %262 {offsets = [0, 0], sizes = [16, 32], strides = [1, 1]} : vector<16x96xf32> to vector<16x32xf32>
    %264 = vector.extract_strided_slice %262 {offsets = [0, 32], sizes = [16, 32], strides = [1, 1]} : vector<16x96xf32> to vector<16x32xf32>
    %265 = vector.extract_strided_slice %262 {offsets = [0, 64], sizes = [16, 32], strides = [1, 1]} : vector<16x96xf32> to vector<16x32xf32>
    %266 = vector.broadcast %258 : vector<1x32xf32> to vector<16x32xf32>
    %267 = arith.addf %263, %266 : vector<16x32xf32>
    %268 = vector.broadcast %259 : vector<1x32xf32> to vector<16x32xf32>
    %269 = arith.addf %263, %268 : vector<16x32xf32>
    %270 = vector.broadcast %260 : vector<1x32xf32> to vector<16x32xf32>
    %271 = arith.addf %263, %270 : vector<16x32xf32>
    %cst_65 = arith.constant dense<0.000000e+00> : vector<16x8xf32>
    %272 = tpu.matmul %271, %261, %cst_65 {dimension_numbers = #tpu.dot_dimension_numbers<[1], [1], [0], [0], [0, 0, 1, 0], [], []>} : vector<16x32xf32>, vector<8x32xf32>, vector<16x8xf32> -> vector<16x8xf32>
    %273 = tpu.concatenate %267, %269 in 0 : vector<16x32xf32>, vector<16x32xf32> -> vector<32x32xf32>
    %274 = tpu.concatenate %264, %18 in 0 : vector<16x32xf32>, vector<16x32xf32> -> vector<32x32xf32>
    %275 = vector.extract_strided_slice %273 {offsets = [0, 0], sizes = [32, 8], strides = [1, 1]} : vector<32x32xf32> to vector<32x8xf32>
    %276 = vector.extract_strided_slice %274 {offsets = [0, 0], sizes = [32, 8], strides = [1, 1]} : vector<32x32xf32> to vector<32x8xf32>
    %cst_66 = arith.constant dense<0.000000e+00> : vector<32x32xf32>
    %277 = tpu.matmul %275, %276, %cst_66 {dimension_numbers = #tpu.dot_dimension_numbers<[1], [1], [0], [0], [0, 0, 1, 0], [], []>} : vector<32x8xf32>, vector<32x8xf32>, vector<32x32xf32> -> vector<32x32xf32>
    %278 = vector.extract_strided_slice %277 {offsets = [0, 0], sizes = [16, 16], strides = [1, 1]} : vector<32x32xf32> to vector<16x16xf32>
    %279 = vector.extract_strided_slice %277 {offsets = [16, 16], sizes = [16, 16], strides = [1, 1]} : vector<32x32xf32> to vector<16x16xf32>
    %280 = vector.extract_strided_slice %273 {offsets = [0, 8], sizes = [32, 8], strides = [1, 1]} : vector<32x32xf32> to vector<32x8xf32>
    %281 = vector.extract_strided_slice %274 {offsets = [0, 8], sizes = [32, 8], strides = [1, 1]} : vector<32x32xf32> to vector<32x8xf32>
    %cst_67 = arith.constant dense<0.000000e+00> : vector<32x32xf32>
    %282 = tpu.matmul %280, %281, %cst_67 {dimension_numbers = #tpu.dot_dimension_numbers<[1], [1], [0], [0], [0, 0, 1, 0], [], []>} : vector<32x8xf32>, vector<32x8xf32>, vector<32x32xf32> -> vector<32x32xf32>
    %283 = vector.extract_strided_slice %282 {offsets = [0, 0], sizes = [16, 16], strides = [1, 1]} : vector<32x32xf32> to vector<16x16xf32>
    %284 = vector.extract_strided_slice %282 {offsets = [16, 16], sizes = [16, 16], strides = [1, 1]} : vector<32x32xf32> to vector<16x16xf32>
    %285 = vector.extract_strided_slice %273 {offsets = [0, 16], sizes = [32, 8], strides = [1, 1]} : vector<32x32xf32> to vector<32x8xf32>
    %286 = vector.extract_strided_slice %274 {offsets = [0, 16], sizes = [32, 8], strides = [1, 1]} : vector<32x32xf32> to vector<32x8xf32>
    %cst_68 = arith.constant dense<0.000000e+00> : vector<32x32xf32>
    %287 = tpu.matmul %285, %286, %cst_68 {dimension_numbers = #tpu.dot_dimension_numbers<[1], [1], [0], [0], [0, 0, 1, 0], [], []>} : vector<32x8xf32>, vector<32x8xf32>, vector<32x32xf32> -> vector<32x32xf32>
    %288 = vector.extract_strided_slice %287 {offsets = [0, 0], sizes = [16, 16], strides = [1, 1]} : vector<32x32xf32> to vector<16x16xf32>
    %289 = vector.extract_strided_slice %287 {offsets = [16, 16], sizes = [16, 16], strides = [1, 1]} : vector<32x32xf32> to vector<16x16xf32>
    %290 = vector.extract_strided_slice %273 {offsets = [0, 24], sizes = [32, 8], strides = [1, 1]} : vector<32x32xf32> to vector<32x8xf32>
    %291 = vector.extract_strided_slice %274 {offsets = [0, 24], sizes = [32, 8], strides = [1, 1]} : vector<32x32xf32> to vector<32x8xf32>
    %cst_69 = arith.constant dense<0.000000e+00> : vector<32x32xf32>
    %292 = tpu.matmul %290, %291, %cst_69 {dimension_numbers = #tpu.dot_dimension_numbers<[1], [1], [0], [0], [0, 0, 1, 0], [], []>} : vector<32x8xf32>, vector<32x8xf32>, vector<32x32xf32> -> vector<32x32xf32>
    %293 = vector.extract_strided_slice %292 {offsets = [0, 0], sizes = [16, 16], strides = [1, 1]} : vector<32x32xf32> to vector<16x16xf32>
    %294 = vector.extract_strided_slice %292 {offsets = [16, 16], sizes = [16, 16], strides = [1, 1]} : vector<32x32xf32> to vector<16x16xf32>
    %295 = tpu.concatenate %279, %284, %289, %294 in 0 : vector<16x16xf32>, vector<16x16xf32>, vector<16x16xf32>, vector<16x16xf32> -> vector<64x16xf32>
    %296 = vector.extract_strided_slice %295 {offsets = [0, 15], sizes = [64, 1], strides = [1, 1]} : vector<64x16xf32> to vector<64x1xf32>
    %297 = vector.extract_strided_slice %295 {offsets = [0, 0], sizes = [64, 15], strides = [1, 1]} : vector<64x16xf32> to vector<64x15xf32>
    %298 = tpu.concatenate %296, %297 in 1 : vector<64x1xf32>, vector<64x15xf32> -> vector<64x16xf32>
    %c1_i32_70 = arith.constant 1 : i32
    %299 = vector.broadcast %c1_i32_70 : i32 to vector<64x1xi32>
    %300 = arith.andi %19, %299 : vector<64x1xi32>
    %c0_i32_71 = arith.constant 0 : i32
    %301 = vector.broadcast %c0_i32_71 : i32 to vector<64x1xi32>
    %302 = arith.cmpi ne, %300, %301 : vector<64x1xi32>
    %303 = vector.shape_cast %302 : vector<64x1xi1> to vector<64x1xi1>
    %304 = vector.broadcast %303 : vector<64x1xi1> to vector<64x16xi1>
    %305 = arith.select %304, %298, %295 : vector<64x16xi1>, vector<64x16xf32>
    %306 = vector.extract_strided_slice %305 {offsets = [0, 14], sizes = [64, 2], strides = [1, 1]} : vector<64x16xf32> to vector<64x2xf32>
    %307 = vector.extract_strided_slice %305 {offsets = [0, 0], sizes = [64, 14], strides = [1, 1]} : vector<64x16xf32> to vector<64x14xf32>
    %308 = tpu.concatenate %306, %307 in 1 : vector<64x2xf32>, vector<64x14xf32> -> vector<64x16xf32>
    %c2_i32_72 = arith.constant 2 : i32
    %309 = vector.broadcast %c2_i32_72 : i32 to vector<64x1xi32>
    %310 = arith.andi %19, %309 : vector<64x1xi32>
    %c0_i32_73 = arith.constant 0 : i32
    %311 = vector.broadcast %c0_i32_73 : i32 to vector<64x1xi32>
    %312 = arith.cmpi ne, %310, %311 : vector<64x1xi32>
    %313 = vector.shape_cast %312 : vector<64x1xi1> to vector<64x1xi1>
    %314 = vector.broadcast %313 : vector<64x1xi1> to vector<64x16xi1>
    %315 = arith.select %314, %308, %305 : vector<64x16xi1>, vector<64x16xf32>
    %316 = vector.extract_strided_slice %315 {offsets = [0, 12], sizes = [64, 4], strides = [1, 1]} : vector<64x16xf32> to vector<64x4xf32>
    %317 = vector.extract_strided_slice %315 {offsets = [0, 0], sizes = [64, 12], strides = [1, 1]} : vector<64x16xf32> to vector<64x12xf32>
    %318 = tpu.concatenate %316, %317 in 1 : vector<64x4xf32>, vector<64x12xf32> -> vector<64x16xf32>
    %c4_i32_74 = arith.constant 4 : i32
    %319 = vector.broadcast %c4_i32_74 : i32 to vector<64x1xi32>
    %320 = arith.andi %19, %319 : vector<64x1xi32>
    %c0_i32_75 = arith.constant 0 : i32
    %321 = vector.broadcast %c0_i32_75 : i32 to vector<64x1xi32>
    %322 = arith.cmpi ne, %320, %321 : vector<64x1xi32>
    %323 = vector.shape_cast %322 : vector<64x1xi1> to vector<64x1xi1>
    %324 = vector.broadcast %323 : vector<64x1xi1> to vector<64x16xi1>
    %325 = arith.select %324, %318, %315 : vector<64x16xi1>, vector<64x16xf32>
    %326 = vector.extract_strided_slice %325 {offsets = [0, 8], sizes = [64, 8], strides = [1, 1]} : vector<64x16xf32> to vector<64x8xf32>
    %327 = tpu.concatenate %326, %326 in 1 : vector<64x8xf32>, vector<64x8xf32> -> vector<64x16xf32>
    %328 = vector.extract_strided_slice %272 {offsets = [0, 0], sizes = [16, 1], strides = [1, 1]} : vector<16x8xf32> to vector<16x1xf32>
    %329 = vector.extract_strided_slice %272 {offsets = [0, 4], sizes = [16, 1], strides = [1, 1]} : vector<16x8xf32> to vector<16x1xf32>
    %330 = arith.subf %328, %329 : vector<16x1xf32>
    %331 = vector.broadcast %330 : vector<16x1xf32> to vector<16x16xf32>
    %332 = arith.mulf %4, %331 : vector<16x16xf32>
    %333 = vector.broadcast %329 : vector<16x1xf32> to vector<16x16xf32>
    %334 = arith.addf %333, %332 : vector<16x16xf32>
    %335 = vector.extract_strided_slice %327 {offsets = [0, 0], sizes = [16, 16], strides = [1, 1]} : vector<64x16xf32> to vector<16x16xf32>
    %336 = arith.addf %278, %335 : vector<16x16xf32>
    %337 = arith.addf %336, %334 : vector<16x16xf32>
    %cst_76 = arith.constant 0.353553385 : f32
    %338 = vector.broadcast %cst_76 : f32 to vector<16x16xf32>
    %339 = arith.mulf %337, %338 : vector<16x16xf32>
    %340 = arith.addf %339, %6 : vector<16x16xf32>
    %cst_77 = arith.constant dense<0xFF800000> : vector<16xf32>
    %341 = vector.multi_reduction <maximumf>, %340, %cst_77 [1] : vector<16x16xf32> to vector<16xf32>
    %342 = vector.shape_cast %341 : vector<16xf32> to vector<16x1xf32>
    %343 = vector.broadcast %342 : vector<16x1xf32> to vector<16x16xf32>
    %344 = arith.subf %340, %343 : vector<16x16xf32>
    %345 = math.exp %344 : vector<16x16xf32>
    %cst_78 = arith.constant dense<0.000000e+00> : vector<16xf32>
    %346 = vector.multi_reduction <add>, %345, %cst_78 [1] : vector<16x16xf32> to vector<16xf32>
    %347 = vector.shape_cast %346 : vector<16xf32> to vector<16x1xf32>
    %348 = vector.broadcast %347 : vector<16x1xf32> to vector<16x16xf32>
    %349 = arith.divf %345, %348 : vector<16x16xf32>
    %350 = vector.extract_strided_slice %265 {offsets = [0, 0], sizes = [16, 8], strides = [1, 1]} : vector<16x32xf32> to vector<16x8xf32>
    %cst_79 = arith.constant dense<0.000000e+00> : vector<16x8xf32>
    %351 = tpu.matmul %349, %350, %cst_79 {dimension_numbers = #tpu.dot_dimension_numbers<[1], [0], [0], [1], [0, 0, 1, 1], [], []>} : vector<16x16xf32>, vector<16x8xf32>, vector<16x8xf32> -> vector<16x8xf32>
    %352 = vector.extract_strided_slice %10 {offsets = [0, 0], sizes = [8, 32], strides = [1, 1]} : vector<32x32xf32> to vector<8x32xf32>
    %cst_80 = arith.constant dense<0.000000e+00> : vector<16x32xf32>
    %353 = tpu.matmul %351, %352, %cst_80 {dimension_numbers = #tpu.dot_dimension_numbers<[1], [0], [0], [1], [0, 0, 1, 1], [], []>} : vector<16x8xf32>, vector<8x32xf32>, vector<16x32xf32> -> vector<16x32xf32>
    %354 = vector.extract_strided_slice %272 {offsets = [0, 1], sizes = [16, 1], strides = [1, 1]} : vector<16x8xf32> to vector<16x1xf32>
    %355 = vector.extract_strided_slice %272 {offsets = [0, 5], sizes = [16, 1], strides = [1, 1]} : vector<16x8xf32> to vector<16x1xf32>
    %356 = arith.subf %354, %355 : vector<16x1xf32>
    %357 = vector.broadcast %356 : vector<16x1xf32> to vector<16x16xf32>
    %358 = arith.mulf %4, %357 : vector<16x16xf32>
    %359 = vector.broadcast %355 : vector<16x1xf32> to vector<16x16xf32>
    %360 = arith.addf %359, %358 : vector<16x16xf32>
    %361 = vector.extract_strided_slice %327 {offsets = [16, 0], sizes = [16, 16], strides = [1, 1]} : vector<64x16xf32> to vector<16x16xf32>
    %362 = arith.addf %283, %361 : vector<16x16xf32>
    %363 = arith.addf %362, %360 : vector<16x16xf32>
    %cst_81 = arith.constant 0.353553385 : f32
    %364 = vector.broadcast %cst_81 : f32 to vector<16x16xf32>
    %365 = arith.mulf %363, %364 : vector<16x16xf32>
    %366 = arith.addf %365, %6 : vector<16x16xf32>
    %cst_82 = arith.constant dense<0xFF800000> : vector<16xf32>
    %367 = vector.multi_reduction <maximumf>, %366, %cst_82 [1] : vector<16x16xf32> to vector<16xf32>
    %368 = vector.shape_cast %367 : vector<16xf32> to vector<16x1xf32>
    %369 = vector.broadcast %368 : vector<16x1xf32> to vector<16x16xf32>
    %370 = arith.subf %366, %369 : vector<16x16xf32>
    %371 = math.exp %370 : vector<16x16xf32>
    %cst_83 = arith.constant dense<0.000000e+00> : vector<16xf32>
    %372 = vector.multi_reduction <add>, %371, %cst_83 [1] : vector<16x16xf32> to vector<16xf32>
    %373 = vector.shape_cast %372 : vector<16xf32> to vector<16x1xf32>
    %374 = vector.broadcast %373 : vector<16x1xf32> to vector<16x16xf32>
    %375 = arith.divf %371, %374 : vector<16x16xf32>
    %376 = vector.extract_strided_slice %265 {offsets = [0, 8], sizes = [16, 8], strides = [1, 1]} : vector<16x32xf32> to vector<16x8xf32>
    %cst_84 = arith.constant dense<0.000000e+00> : vector<16x8xf32>
    %377 = tpu.matmul %375, %376, %cst_84 {dimension_numbers = #tpu.dot_dimension_numbers<[1], [0], [0], [1], [0, 0, 1, 1], [], []>} : vector<16x16xf32>, vector<16x8xf32>, vector<16x8xf32> -> vector<16x8xf32>
    %378 = vector.extract_strided_slice %10 {offsets = [8, 0], sizes = [8, 32], strides = [1, 1]} : vector<32x32xf32> to vector<8x32xf32>
    %cst_85 = arith.constant dense<0.000000e+00> : vector<16x32xf32>
    %379 = tpu.matmul %377, %378, %cst_85 {dimension_numbers = #tpu.dot_dimension_numbers<[1], [0], [0], [1], [0, 0, 1, 1], [], []>} : vector<16x8xf32>, vector<8x32xf32>, vector<16x32xf32> -> vector<16x32xf32>
    %380 = arith.addf %353, %379 : vector<16x32xf32>
    %381 = vector.extract_strided_slice %272 {offsets = [0, 2], sizes = [16, 1], strides = [1, 1]} : vector<16x8xf32> to vector<16x1xf32>
    %382 = vector.extract_strided_slice %272 {offsets = [0, 6], sizes = [16, 1], strides = [1, 1]} : vector<16x8xf32> to vector<16x1xf32>
    %383 = arith.subf %381, %382 : vector<16x1xf32>
    %384 = vector.broadcast %383 : vector<16x1xf32> to vector<16x16xf32>
    %385 = arith.mulf %4, %384 : vector<16x16xf32>
    %386 = vector.broadcast %382 : vector<16x1xf32> to vector<16x16xf32>
    %387 = arith.addf %386, %385 : vector<16x16xf32>
    %388 = vector.extract_strided_slice %327 {offsets = [32, 0], sizes = [16, 16], strides = [1, 1]} : vector<64x16xf32> to vector<16x16xf32>
    %389 = arith.addf %288, %388 : vector<16x16xf32>
    %390 = arith.addf %389, %387 : vector<16x16xf32>
    %cst_86 = arith.constant 0.353553385 : f32
    %391 = vector.broadcast %cst_86 : f32 to vector<16x16xf32>
    %392 = arith.mulf %390, %391 : vector<16x16xf32>
    %393 = arith.addf %392, %6 : vector<16x16xf32>
    %cst_87 = arith.constant dense<0xFF800000> : vector<16xf32>
    %394 = vector.multi_reduction <maximumf>, %393, %cst_87 [1] : vector<16x16xf32> to vector<16xf32>
    %395 = vector.shape_cast %394 : vector<16xf32> to vector<16x1xf32>
    %396 = vector.broadcast %395 : vector<16x1xf32> to vector<16x16xf32>
    %397 = arith.subf %393, %396 : vector<16x16xf32>
    %398 = math.exp %397 : vector<16x16xf32>
    %cst_88 = arith.constant dense<0.000000e+00> : vector<16xf32>
    %399 = vector.multi_reduction <add>, %398, %cst_88 [1] : vector<16x16xf32> to vector<16xf32>
    %400 = vector.shape_cast %399 : vector<16xf32> to vector<16x1xf32>
    %401 = vector.broadcast %400 : vector<16x1xf32> to vector<16x16xf32>
    %402 = arith.divf %398, %401 : vector<16x16xf32>
    %403 = vector.extract_strided_slice %265 {offsets = [0, 16], sizes = [16, 8], strides = [1, 1]} : vector<16x32xf32> to vector<16x8xf32>
    %cst_89 = arith.constant dense<0.000000e+00> : vector<16x8xf32>
    %404 = tpu.matmul %402, %403, %cst_89 {dimension_numbers = #tpu.dot_dimension_numbers<[1], [0], [0], [1], [0, 0, 1, 1], [], []>} : vector<16x16xf32>, vector<16x8xf32>, vector<16x8xf32> -> vector<16x8xf32>
    %405 = vector.extract_strided_slice %10 {offsets = [16, 0], sizes = [8, 32], strides = [1, 1]} : vector<32x32xf32> to vector<8x32xf32>
    %cst_90 = arith.constant dense<0.000000e+00> : vector<16x32xf32>
    %406 = tpu.matmul %404, %405, %cst_90 {dimension_numbers = #tpu.dot_dimension_numbers<[1], [0], [0], [1], [0, 0, 1, 1], [], []>} : vector<16x8xf32>, vector<8x32xf32>, vector<16x32xf32> -> vector<16x32xf32>
    %407 = arith.addf %380, %406 : vector<16x32xf32>
    %408 = vector.extract_strided_slice %272 {offsets = [0, 3], sizes = [16, 1], strides = [1, 1]} : vector<16x8xf32> to vector<16x1xf32>
    %409 = vector.extract_strided_slice %272 {offsets = [0, 7], sizes = [16, 1], strides = [1, 1]} : vector<16x8xf32> to vector<16x1xf32>
    %410 = arith.subf %408, %409 : vector<16x1xf32>
    %411 = vector.broadcast %410 : vector<16x1xf32> to vector<16x16xf32>
    %412 = arith.mulf %4, %411 : vector<16x16xf32>
    %413 = vector.broadcast %409 : vector<16x1xf32> to vector<16x16xf32>
    %414 = arith.addf %413, %412 : vector<16x16xf32>
    %415 = vector.extract_strided_slice %327 {offsets = [48, 0], sizes = [16, 16], strides = [1, 1]} : vector<64x16xf32> to vector<16x16xf32>
    %416 = arith.addf %293, %415 : vector<16x16xf32>
    %417 = arith.addf %416, %414 : vector<16x16xf32>
    %cst_91 = arith.constant 0.353553385 : f32
    %418 = vector.broadcast %cst_91 : f32 to vector<16x16xf32>
    %419 = arith.mulf %417, %418 : vector<16x16xf32>
    %420 = arith.addf %419, %6 : vector<16x16xf32>
    %cst_92 = arith.constant dense<0xFF800000> : vector<16xf32>
    %421 = vector.multi_reduction <maximumf>, %420, %cst_92 [1] : vector<16x16xf32> to vector<16xf32>
    %422 = vector.shape_cast %421 : vector<16xf32> to vector<16x1xf32>
    %423 = vector.broadcast %422 : vector<16x1xf32> to vector<16x16xf32>
    %424 = arith.subf %420, %423 : vector<16x16xf32>
    %425 = math.exp %424 : vector<16x16xf32>
    %cst_93 = arith.constant dense<0.000000e+00> : vector<16xf32>
    %426 = vector.multi_reduction <add>, %425, %cst_93 [1] : vector<16x16xf32> to vector<16xf32>
    %427 = vector.shape_cast %426 : vector<16xf32> to vector<16x1xf32>
    %428 = vector.broadcast %427 : vector<16x1xf32> to vector<16x16xf32>
    %429 = arith.divf %425, %428 : vector<16x16xf32>
    %430 = vector.extract_strided_slice %265 {offsets = [0, 24], sizes = [16, 8], strides = [1, 1]} : vector<16x32xf32> to vector<16x8xf32>
    %cst_94 = arith.constant dense<0.000000e+00> : vector<16x8xf32>
    %431 = tpu.matmul %429, %430, %cst_94 {dimension_numbers = #tpu.dot_dimension_numbers<[1], [0], [0], [1], [0, 0, 1, 1], [], []>} : vector<16x16xf32>, vector<16x8xf32>, vector<16x8xf32> -> vector<16x8xf32>
    %432 = vector.extract_strided_slice %10 {offsets = [24, 0], sizes = [8, 32], strides = [1, 1]} : vector<32x32xf32> to vector<8x32xf32>
    %cst_95 = arith.constant dense<0.000000e+00> : vector<16x32xf32>
    %433 = tpu.matmul %431, %432, %cst_95 {dimension_numbers = #tpu.dot_dimension_numbers<[1], [0], [0], [1], [0, 0, 1, 1], [], []>} : vector<16x8xf32>, vector<8x32xf32>, vector<16x32xf32> -> vector<16x32xf32>
    %434 = arith.addf %407, %433 : vector<16x32xf32>
    %435 = arith.addf %434, %249 : vector<16x32xf32>
    %cst_96 = arith.constant dense<0.000000e+00> : vector<16xf32>
    %436 = vector.multi_reduction <add>, %435, %cst_96 [1] : vector<16x32xf32> to vector<16xf32>
    %437 = vector.shape_cast %436 : vector<16xf32> to vector<16x1xf32>
    %cst_97 = arith.constant 3.200000e+01 : f32
    %438 = vector.broadcast %cst_97 : f32 to vector<16x1xf32>
    %439 = arith.divf %437, %438 : vector<16x1xf32>
    %440 = vector.broadcast %439 : vector<16x1xf32> to vector<16x32xf32>
    %441 = arith.subf %435, %440 : vector<16x32xf32>
    %442 = arith.mulf %441, %441 : vector<16x32xf32>
    %cst_98 = arith.constant dense<0.000000e+00> : vector<16xf32>
    %443 = vector.multi_reduction <add>, %442, %cst_98 [1] : vector<16x32xf32> to vector<16xf32>
    %444 = vector.shape_cast %443 : vector<16xf32> to vector<16x1xf32>
    %cst_99 = arith.constant 3.200000e+01 : f32
    %445 = vector.broadcast %cst_99 : f32 to vector<16x1xf32>
    %446 = arith.divf %444, %445 : vector<16x1xf32>
    %447 = vector.broadcast %439 : vector<16x1xf32> to vector<16x32xf32>
    %448 = arith.subf %435, %447 : vector<16x32xf32>
    %cst_100 = arith.constant 9.99999974E-6 : f32
    %449 = vector.broadcast %cst_100 : f32 to vector<16x1xf32>
    %450 = arith.addf %446, %449 : vector<16x1xf32>
    %451 = math.rsqrt %450 : vector<16x1xf32>
    %452 = vector.broadcast %451 : vector<16x1xf32> to vector<16x32xf32>
    %453 = arith.mulf %448, %452 : vector<16x32xf32>
    %454 = vector.broadcast %12 : vector<1x32xf32> to vector<16x32xf32>
    %455 = arith.mulf %453, %454 : vector<16x32xf32>
    %456 = vector.broadcast %13 : vector<1x32xf32> to vector<16x32xf32>
    %457 = arith.addf %455, %456 : vector<16x32xf32>
    %cst_101 = arith.constant dense<0.000000e+00> : vector<16x32xf32>
    %458 = tpu.matmul %457, %11, %cst_101 {dimension_numbers = #tpu.dot_dimension_numbers<[1], [0], [0], [1], [0, 0, 1, 1], [], []>} : vector<16x32xf32>, vector<32x32xf32>, vector<16x32xf32> -> vector<16x32xf32>
    %459 = vector.broadcast %14 : vector<1x32xf32> to vector<16x32xf32>
    %460 = arith.addf %458, %459 : vector<16x32xf32>
    %cst_102 = arith.constant 0.000000e+00 : f32
    %461 = vector.broadcast %cst_102 : f32 to vector<16x32xf32>
    %462 = arith.maximumf %460, %461 : vector<16x32xf32>
    %463 = arith.addf %462, %457 : vector<16x32xf32>
    %cst_103 = arith.constant dense<0.000000e+00> : vector<16xf32>
    %464 = vector.multi_reduction <add>, %463, %cst_103 [1] : vector<16x32xf32> to vector<16xf32>
    %465 = vector.shape_cast %464 : vector<16xf32> to vector<16x1xf32>
    %cst_104 = arith.constant 3.200000e+01 : f32
    %466 = vector.broadcast %cst_104 : f32 to vector<16x1xf32>
    %467 = arith.divf %465, %466 : vector<16x1xf32>
    %468 = vector.broadcast %467 : vector<16x1xf32> to vector<16x32xf32>
    %469 = arith.subf %463, %468 : vector<16x32xf32>
    %470 = arith.mulf %469, %469 : vector<16x32xf32>
    %cst_105 = arith.constant dense<0.000000e+00> : vector<16xf32>
    %471 = vector.multi_reduction <add>, %470, %cst_105 [1] : vector<16x32xf32> to vector<16xf32>
    %472 = vector.shape_cast %471 : vector<16xf32> to vector<16x1xf32>
    %cst_106 = arith.constant 3.200000e+01 : f32
    %473 = vector.broadcast %cst_106 : f32 to vector<16x1xf32>
    %474 = arith.divf %472, %473 : vector<16x1xf32>
    %475 = vector.broadcast %467 : vector<16x1xf32> to vector<16x32xf32>
    %476 = arith.subf %463, %475 : vector<16x32xf32>
    %cst_107 = arith.constant 9.99999974E-6 : f32
    %477 = vector.broadcast %cst_107 : f32 to vector<16x1xf32>
    %478 = arith.addf %474, %477 : vector<16x1xf32>
    %479 = math.rsqrt %478 : vector<16x1xf32>
    %480 = vector.broadcast %479 : vector<16x1xf32> to vector<16x32xf32>
    %481 = arith.mulf %476, %480 : vector<16x32xf32>
    %482 = vector.broadcast %12 : vector<1x32xf32> to vector<16x32xf32>
    %483 = arith.mulf %481, %482 : vector<16x32xf32>
    %484 = vector.broadcast %13 : vector<1x32xf32> to vector<16x32xf32>
    %485 = arith.addf %483, %484 : vector<16x32xf32>
    %cst_108 = arith.constant dense<0.000000e+00> : vector<16x128xf32>
    %486 = tpu.matmul %485, %16, %cst_108 {dimension_numbers = #tpu.dot_dimension_numbers<[1], [0], [0], [1], [0, 0, 1, 1], [], []>} : vector<16x32xf32>, vector<32x128xf32>, vector<16x128xf32> -> vector<16x128xf32>
    %487 = vector.broadcast %17 : vector<1x128xf32> to vector<16x128xf32>
    %488 = arith.addf %486, %487 : vector<16x128xf32>
    %c0_109 = arith.constant 0 : index
    %c0_110 = arith.constant 0 : index
    %489 = vector.load %arg7[%c0_109, %c0_110] : memref<16x128xf32, #tpu.memory_space<vmem>>, vector<16x128xf32>
    tpu.vector_store %arg7[%c0_109, %c0_110], %488 {strides = array<i32>} : memref<16x128xf32, #tpu.memory_space<vmem>>, vector<16x128xf32>,
    return
  }
}

</mosaic_0001>

<llo_original>
// kernel: xlnet_forward.1
$region0: #{xlnet_forward.1}
  #allocation0 [shape = 'u32[]', space=smem, size = 0x4, offset = 0x4, fixed_abs, tag = 'smem constant byte address 0x4 - core index']
  #allocation1 [shape = 'u32[144,128]{1,0:T(1,128)}', space=vmem, size = 0x12000, scoped, tag = 'internal scratch']
  %s0 = inlined_call_operand.vmem [shape: f32[32,32], index: 0, kind: input, shape index: {}]
  %s1 = inlined_call_operand.vmem [shape: f32[2,16,16], index: 1, kind: input, shape index: {}]
  %s2 = inlined_call_operand.vmem [shape: f32[32,192], index: 2, kind: input, shape index: {}]
  %s3 = inlined_call_operand.vmem [shape: f32[2,11,32], index: 3, kind: input, shape index: {}]
  %s4 = inlined_call_operand.vmem [shape: f32[3,32], index: 4, kind: input, shape index: {}]
  %s5 = inlined_call_operand.vmem [shape: f32[33,128], index: 5, kind: input, shape index: {}]
  %s6 = inlined_call_operand.vmem [shape: f32[1,8,32], index: 6, kind: output, shape index: {0}]
  %s7 = inlined_call_operand.vmem [shape: f32[16,128], index: 7, kind: output, shape index: {1}]
  %8 = xla_tuple %s6, %s7
  %s9 = sld [smem:[#allocation0]]
  $region42: #{xlnet_forward.1} parent=0
    _
  %s11 = ssub.s32 1, %s9
  %s12 = scalar_select 0, %s11, %s9
  // Predicated region
  $region2: #{xlnet_forward.1} parent=0 // pred_check
    _
  $region3: #{xlnet_forward.1} parent=0 // pred_check_branch
    %14 = sbr.rel (0) target = $region5
  $region4: #{xlnet_forward.1} parent=0 // pred_region
    _
  $region5: #{xlnet_forward.1} parent=0 // pred_fallthru
    _
  // Predicated region
  $region6: #{xlnet_forward.1} parent=0 // pred_check
    _
  $region7: #{xlnet_forward.1} parent=0 // pred_check_branch
    %16 = sbr.rel (0) target = $region9
  $region8: #{xlnet_forward.1} parent=0 // pred_region
    _
  $region9: #{xlnet_forward.1} parent=0 // pred_fallthru
    _
  // Predicated region
  $region10: #{xlnet_forward.1} parent=0 // pred_check
    _
  $region11: #{xlnet_forward.1} parent=0 // pred_check_branch
    %18 = sbr.rel (0) target = $region13
  $region12: #{xlnet_forward.1} parent=0 // pred_region
    _
  $region13: #{xlnet_forward.1} parent=0 // pred_fallthru
    _
  // Predicated region
  $region14: #{xlnet_forward.1} parent=0 // pred_check
    _
  $region15: #{xlnet_forward.1} parent=0 // pred_check_branch
    %20 = sbr.rel (0) target = $region17
  $region16: #{xlnet_forward.1} parent=0 // pred_region
    _
  $region17: #{xlnet_forward.1} parent=0 // pred_fallthru
    _
  // Predicated region
  $region18: #{xlnet_forward.1} parent=0 // pred_check
    _
  $region19: #{xlnet_forward.1} parent=0 // pred_check_branch
    %22 = sbr.rel (0) target = $region21
  $region20: #{xlnet_forward.1} parent=0 // pred_region
    _
  $region21: #{xlnet_forward.1} parent=0 // pred_fallthru
    _
  // Predicated region
  $region22: #{xlnet_forward.1} parent=0 // pred_check
    _
  $region23: #{xlnet_forward.1} parent=0 // pred_check_branch
    %24 = sbr.rel (0) target = $region25
  $region24: #{xlnet_forward.1} parent=0 // pred_region
    _
  $region25: #{xlnet_forward.1} parent=0 // pred_fallthru
    _
  %v25 = vld [vmem:[%s0] sm:$0xff]
  %v26 = vld [vmem:[%s0 + $0x8] sm:$0xff]
  %v27 = vld [vmem:[%s0 + $0x10] sm:$0xff]
  %v28 = vld [vmem:[%s0 + $0x18] sm:$0xff]
  %v29 = vld [vmem:[%s1] sm:$0xff]
  %v30 = vld [vmem:[%s1 + $0x8] sm:$0xff]
  %s31 = scalar_lea.vmem %s1, 16
  %v32 = vld [vmem:[%s31] sm:$0xff]
  %v33 = vld [vmem:[%s31 + $0x8] sm:$0xff]
  %v34 = vld [vmem:[%s2] sm:$0xff]
  %v35 = vld [vmem:[%s2 + $0x8] sm:$0xff]
  %v36 = vld [vmem:[%s2 + $0x10] sm:$0xff]
  %v37 = vld [vmem:[%s2 + $0x18] sm:$0xff]
  %v38 = vld [vmem:[%s2 + $0x20] sm:$0xff]
  %v39 = vld [vmem:[%s2 + $0x28] sm:$0xff]
  %v40 = vld [vmem:[%s2 + $0x30] sm:$0xff]
  %v41 = vld [vmem:[%s2 + $0x38] sm:$0xff]
  %v42 = vld [vmem:[%s4] sm:$0x1]
  %v43 = vld [vmem:[%s4 + $0x1] sm:$0x1]
  %v44 = vld [vmem:[%s4 + $0x2] sm:$0x1]
  %v45 = vld [vmem:[%s5] sm:$0xff]
  %v46 = vld [vmem:[%s5 + $0x8] sm:$0xff]
  %v47 = vld [vmem:[%s5 + $0x10] sm:$0xff]
  %v48 = vld [vmem:[%s5 + $0x18] sm:$0xff]
  %v49 = vld [vmem:[%s5 + $0x20] sm:$0x1]
  %54 = vrot.lane.b32.xlu0 %v34, 32
  %v55 = vpop.permute.xlu0 %54
  %56 = vrot.lane.b32.xlu0 %v36, 32
  %v57 = vpop.permute.xlu0 %56
  %58 = vrot.lane.b32.xlu0 %v38, 32
  %v59 = vpop.permute.xlu0 %58
  %60 = vrot.lane.b32.xlu0 %v40, 32
  %v61 = vpop.permute.xlu0 %60
  %vm66 = vcmask 261120
  %v68 = vsel %vm66, %v27, 0
  %v71 = vsel %vm66, %v28, 0
  %73 = vmatprep.subr.mxu0 0.0
  %74 = vmatpush1.msra.mxu0 %v55
  %75 = vmatprep.subr.mxu0 0.0
  %76 = vmatpush1.msra.mxu0 %v57
  %77 = vmatprep.subr.mxu0 0.0
  %78 = vmatpush1.msra.mxu0 %v59
  %79 = vmatprep.subr.mxu0 0.0
  %80 = vmatpush1.msra.mxu0 %v61
  %81 = vmatprep.subr.mxu0 0.0
  %82 = vmatpush1.msra.mxu0 0.0
  %83 = vmatprep.subr.mxu0 0.0
  %84 = vmatpush1.msra.mxu0 0.0
  %85 = vmatprep.subr.mxu0 0.0
  %86 = vmatpush1.msra.mxu0 0.0
  %87 = vmatprep.subr.mxu0 0.0
  %88 = vmatpush1.msra.mxu0 0.0
  %89 = vmatprep.subr.mxu0 0.0
  %90 = vmatpush1.msra.mxu0 0.0
  %91 = vmatprep.subr.mxu0 0.0
  %92 = vmatpush1.msra.mxu0 0.0
  %93 = vmatprep.subr.mxu0 0.0
  %94 = vmatpush1.msra.mxu0 0.0
  %95 = vmatprep.subr.mxu0 0.0
  %96 = vmatpush1.msra.mxu0 0.0
  %97 = vmatprep.subr.mxu0 0.0
  %98 = vmatpush1.msra.mxu0 0.0
  %99 = vmatprep.subr.mxu0 0.0
  %100 = vmatpush1.msra.mxu0 0.0
  %101 = vmatprep.subr.mxu0 0.0
  %102 = vmatpush1.msra.mxu0 0.0
  %103 = vmatprep.subr.mxu0 0.0
  %104 = vmatpush1.msra.mxu0 0.0
  %105 = vmatprep.subr.mxu0 0.0
  %106 = vmatpush1.msra.mxu0 0.0
  %107 = vmatprep.subr.mxu0 0.0
  %108 = vmatpush1.msra.mxu0 0.0
  %109 = vmatprep.subr.mxu0 0.0
  %110 = vmatpush1.msra.mxu0 0.0
  %111 = vmatprep.subr.mxu0 0.0
  %112 = vmatpush1.msra.mxu0 0.0
  %113 = vmatprep.subr.mxu0 0.0
  %114 = vmatpush1.msra.mxu0 0.0
  %115 = vmatprep.subr.mxu0 0.0
  %116 = vmatpush1.msra.mxu0 0.0
  %117 = vmatprep.subr.mxu0 0.0
  %118 = vmatpush1.msra.mxu0 0.0
  %119 = vmatprep.subr.mxu0 0.0
  %120 = vmatpush1.msra.mxu0 0.0
  %121 = vmatprep.subr.mxu0 0.0
  %122 = vmatpush1.msra.mxu0 0.0
  %123 = vmatprep.subr.mxu0 0.0
  %124 = vmatpush1.msra.mxu0 0.0
  %125 = vmatprep.subr.mxu0 0.0
  %126 = vmatpush1.msra.mxu0 0.0
  %127 = vmatprep.subr.mxu0 0.0
  %128 = vmatpush1.msra.mxu0 0.0
  %129 = vmatprep.subr.mxu0 0.0
  %130 = vmatpush1.msra.mxu0 0.0
  %131 = vmatprep.subr.mxu0 0.0
  %132 = vmatpush1.msra.mxu0 0.0
  %133 = vmatprep.subr.mxu0 0.0
  %134 = vmatpush1.msra.mxu0 0.0
  %135 = vmatprep.subr.mxu0 0.0
  %136 = vmatpush1.msra.mxu0 0.0
  %137 = vmatprep.mubr.f32.mxu0 0.0
  %138 = vmatmul.mubr.f32.gmra.mrb[0].mxu0 %v68
  %v139 = vpop.f32.mrb[0].mxu0
  %v140 = vadd.f32 0.0, %v139
  %v141 = vpop.f32.mrb[0].mxu0
  %142 = vmatprep.mubr.f32.mxu0 0.0
  %143 = vmatmul.mubr.f32.gmra.mrb[0].mxu0 %v71
  %v144 = vpop.f32.mrb[0].mxu0
  %v145 = vadd.f32 0.0, %v144
  %v146 = vpop.f32.mrb[0].mxu0
  %147 = vdwg.mxu0
  %v148 = vlaneseq
  %v149 = vshrl.u32 %v148, 7
  %v150 = vadd.s32 %v149, 8
  %v151 = vadd.s32 %v149, 16
  %v152 = vadd.s32 %v149, 24
  %v153 = vadd.s32 %v149, 32
  %v154 = vadd.s32 %v149, 40
  %v155 = vadd.s32 %v149, 48
  %v156 = vadd.s32 %v149, 56
  %v157 = vld [vmem:[%s3] sm:$0xff]
  %v158 = vld [vmem:[%s3 + $0x8] sm:$0x7]
  %v160 = vsel %vm66, %v25, 0
  %v163 = vsel %vm66, %v26, 0
  %165 = vmatprep.subr.mxu0 0.0
  %166 = vmatpush1.msra.mxu0 %v34
  %167 = vmatprep.subr.mxu0 0.0
  %168 = vmatpush1.msra.mxu0 %v36
  %169 = vmatprep.subr.mxu0 0.0
  %170 = vmatpush1.msra.mxu0 %v38
  %171 = vmatprep.subr.mxu0 0.0
  %172 = vmatpush1.msra.mxu0 %v40
  %173 = vmatprep.subr.mxu0 0.0
  %174 = vmatpush1.msra.mxu0 0.0
  %175 = vmatprep.subr.mxu0 0.0
  %176 = vmatpush1.msra.mxu0 0.0
  %177 = vmatprep.subr.mxu0 0.0
  %178 = vmatpush1.msra.mxu0 0.0
  %179 = vmatprep.subr.mxu0 0.0
  %180 = vmatpush1.msra.mxu0 0.0
  %181 = vmatprep.subr.mxu0 0.0
  %182 = vmatpush1.msra.mxu0 0.0
  %183 = vmatprep.subr.mxu0 0.0
  %184 = vmatpush1.msra.mxu0 0.0
  %185 = vmatprep.subr.mxu0 0.0
  %186 = vmatpush1.msra.mxu0 0.0
  %187 = vmatprep.subr.mxu0 0.0
  %188 = vmatpush1.msra.mxu0 0.0
  %189 = vmatprep.subr.mxu0 0.0
  %190 = vmatpush1.msra.mxu0 0.0
  %191 = vmatprep.subr.mxu0 0.0
  %192 = vmatpush1.msra.mxu0 0.0
  %193 = vmatprep.subr.mxu0 0.0
  %194 = vmatpush1.msra.mxu0 0.0
  %195 = vmatprep.subr.mxu0 0.0
  %196 = vmatpush1.msra.mxu0 0.0
  %197 = vmatprep.subr.mxu0 0.0
  %198 = vmatpush1.msra.mxu0 0.0
  %199 = vmatprep.subr.mxu0 0.0
  %200 = vmatpush1.msra.mxu0 0.0
  %201 = vmatprep.subr.mxu0 0.0
  %202 = vmatpush1.msra.mxu0 0.0
  %203 = vmatprep.subr.mxu0 0.0
  %204 = vmatpush1.msra.mxu0 0.0
  %205 = vmatprep.subr.mxu0 0.0
  %206 = vmatpush1.msra.mxu0 0.0
  %207 = vmatprep.subr.mxu0 0.0
  %208 = vmatpush1.msra.mxu0 0.0
  %209 = vmatprep.subr.mxu0 0.0
  %210 = vmatpush1.msra.mxu0 0.0
  %211 = vmatprep.subr.mxu0 0.0
  %212 = vmatpush1.msra.mxu0 0.0
  %213 = vmatprep.subr.mxu0 0.0
  %214 = vmatpush1.msra.mxu0 0.0
  %215 = vmatprep.subr.mxu0 0.0
  %216 = vmatpush1.msra.mxu0 0.0
  %217 = vmatprep.subr.mxu0 0.0
  %218 = vmatpush1.msra.mxu0 0.0
  %219 = vmatprep.subr.mxu0 0.0
  %220 = vmatpush1.msra.mxu0 0.0
  %221 = vmatprep.subr.mxu0 0.0
  %222 = vmatpush1.msra.mxu0 0.0
  %223 = vmatprep.subr.mxu0 0.0
  %224 = vmatpush1.msra.mxu0 0.0
  %225 = vmatprep.subr.mxu0 0.0
  %226 = vmatpush1.msra.mxu0 0.0
  %227 = vmatprep.subr.mxu0 0.0
  %228 = vmatpush1.msra.mxu0 0.0
  %229 = vmatprep.mubr.f32.mxu0 0.0
  %230 = vmatmul.mubr.f32.gmra.mrb[0].mxu0 %v160
  %v231 = vpop.f32.mrb[0].mxu0
  %v232 = vadd.f32 0.0, %v231
  %v233 = vpop.f32.mrb[0].mxu0
  %234 = vmatprep.mubr.f32.mxu0 0.0
  %235 = vmatmul.mubr.f32.gmra.mrb[0].mxu0 %v163
  %v236 = vpop.f32.mrb[0].mxu0
  %v237 = vadd.f32 0.0, %v236
  %v238 = vpop.f32.mrb[0].mxu0
  %239 = vdwg.mxu0
  %v240 = vlaneseq
  %v241 = vshrl.u32 %v240, 7
  %v242 = vsub.s32 0, %v241
  %v243 = vrot.slane %v157, %v242
  %v244 = vadd.f32 %v232, %v243
  %v245 = vadd.f32 %v237, %v243
  %v246 = vlaneseq
  %v247 = vshrl.u32 %v246, 7
  %v248 = vsub.s32 1, %v247
  %v249 = vrot.slane %v157, %v248
  %v250 = vadd.f32 %v232, %v249
  %v251 = vadd.f32 %v237, %v249
  %v252 = vlaneseq
  %v253 = vshrl.u32 %v252, 7
  %v254 = vsub.s32 2, %v253
  %v255 = vrot.slane %v157, %v254
  %v256 = vadd.f32 %v232, %v255
  %v257 = vadd.f32 %v237, %v255
  %vm260 = vcmask 1044480
  %v261 = vrot.slane %v157, 3
  %v262 = vrot.slane %v158, 3
  %v263 = vsel %vm260, %v261, %v262
  %v265 = vsel %vm66, %v256, 0
  %v268 = vsel %vm66, %v257, 0
  %v270 = vsel %vm66, %v263, 0
  %272 = vmatprep.subr.mxu0 0.0
  %273 = vmatpush1.xpose.msra.mxu0 %v270
  %274 = vmatprep.subr.mxu0 0.0
  %275 = vmatpush1.xpose.msra.mxu0 0.0
  %276 = vmatprep.subr.mxu0 0.0
  %277 = vmatpush1.xpose.msra.mxu0 0.0
  %278 = vmatprep.subr.mxu0 0.0
  %279 = vmatpush1.xpose.msra.mxu0 0.0
  %280 = vmatprep.subr.mxu0 0.0
  %281 = vmatpush1.xpose.msra.mxu0 0.0
  %282 = vmatprep.subr.mxu0 0.0
  %283 = vmatpush1.xpose.msra.mxu0 0.0
  %284 = vmatprep.subr.mxu0 0.0
  %285 = vmatpush1.xpose.msra.mxu0 0.0
  %286 = vmatprep.subr.mxu0 0.0
  %287 = vmatpush1.xpose.msra.mxu0 0.0
  %288 = vmatprep.subr.mxu0 0.0
  %289 = vmatpush1.xpose.msra.mxu0 0.0
  %290 = vmatprep.subr.mxu0 0.0
  %291 = vmatpush1.xpose.msra.mxu0 0.0
  %292 = vmatprep.subr.mxu0 0.0
  %293 = vmatpush1.xpose.msra.mxu0 0.0
  %294 = vmatprep.subr.mxu0 0.0
  %295 = vmatpush1.xpose.msra.mxu0 0.0
  %296 = vmatprep.subr.mxu0 0.0
  %297 = vmatpush1.xpose.msra.mxu0 0.0
  %298 = vmatprep.subr.mxu0 0.0
  %299 = vmatpush1.xpose.msra.mxu0 0.0
  %300 = vmatprep.subr.mxu0 0.0
  %301 = vmatpush1.xpose.msra.mxu0 0.0
  %302 = vmatprep.subr.mxu0 0.0
  %303 = vmatpush1.xpose.msra.mxu0 0.0
  %304 = vmatprep.subr.mxu0 0.0
  %305 = vmatpush1.xpose.msra.mxu0 0.0
  %306 = vmatprep.subr.mxu0 0.0
  %307 = vmatpush1.xpose.msra.mxu0 0.0
  %308 = vmatprep.subr.mxu0 0.0
  %309 = vmatpush1.xpose.msra.mxu0 0.0
  %310 = vmatprep.subr.mxu0 0.0
  %311 = vmatpush1.xpose.msra.mxu0 0.0
  %312 = vmatprep.subr.mxu0 0.0
  %313 = vmatpush1.xpose.msra.mxu0 0.0
  %314 = vmatprep.subr.mxu0 0.0
  %315 = vmatpush1.xpose.msra.mxu0 0.0
  %316 = vmatprep.subr.mxu0 0.0
  %317 = vmatpush1.xpose.msra.mxu0 0.0
  %318 = vmatprep.subr.mxu0 0.0
  %319 = vmatpush1.xpose.msra.mxu0 0.0
  %320 = vmatprep.subr.mxu0 0.0
  %321 = vmatpush1.xpose.msra.mxu0 0.0
  %322 = vmatprep.subr.mxu0 0.0
  %323 = vmatpush1.xpose.msra.mxu0 0.0
  %324 = vmatprep.subr.mxu0 0.0
  %325 = vmatpush1.xpose.msra.mxu0 0.0
  %326 = vmatprep.subr.mxu0 0.0
  %327 = vmatpush1.xpose.msra.mxu0 0.0
  %328 = vmatprep.subr.mxu0 0.0
  %329 = vmatpush1.xpose.msra.mxu0 0.0
  %330 = vmatprep.subr.mxu0 0.0
  %331 = vmatpush1.xpose.msra.mxu0 0.0
  %332 = vmatprep.subr.mxu0 0.0
  %333 = vmatpush1.xpose.msra.mxu0 0.0
  %334 = vmatprep.subr.mxu0 0.0
  %335 = vmatpush1.xpose.msra.mxu0 0.0
  %336 = vmatprep.mubr.f32.mxu0 0.0
  %337 = vmatmul.mubr.f32.gmra.mrb[0].mxu0 %v265
  %v338 = vpop.f32.mrb[0].mxu0
  %v339 = vadd.f32 0.0, %v338
  %v340 = vpop.f32.mrb[0].mxu0
  %341 = vmatprep.mubr.f32.mxu0 0.0
  %342 = vmatmul.mubr.f32.gmra.mrb[0].mxu0 %v268
  %v343 = vpop.f32.mrb[0].mxu0
  %v344 = vadd.f32 0.0, %v343
  %v345 = vpop.f32.mrb[0].mxu0
  %346 = vdwg.mxu0
  %349 = vrot.lane.b32.xlu0 %v140, 32
  %v350 = vpop.permute.xlu0 %349
  %351 = vrot.lane.b32.xlu0 %v145, 32
  %v352 = vpop.permute.xlu0 %351
  %355 = vrot.lane.b32.xlu0 %v232, 96
  %v356 = vpop.permute.xlu0 %355
  %357 = vrot.lane.b32.xlu0 %v237, 96
  %v358 = vpop.permute.xlu0 %357
  %359 = vrot.lane.b32.xlu0 %v350, 96
  %v360 = vpop.permute.xlu0 %359
  %361 = vrot.lane.b32.xlu0 %v352, 96
  %v362 = vpop.permute.xlu0 %361
  %vm363 = vcmask 64512
  %v365 = vsel %vm363, %v244, 0
  %v368 = vsel %vm363, %v245, 0
  %v371 = vsel %vm363, %v250, 0
  %v374 = vsel %vm363, %v251, 0
  %v376 = vsel %vm363, %v356, 0
  %v378 = vsel %vm363, %v358, 0
  %v380 = vsel %vm363, %v360, 0
  %v382 = vsel %vm363, %v362, 0
  %384 = vmatprep.subr.mxu0 0.0
  %385 = vmatpush1.xpose.msra.mxu0 %v376
  %386 = vmatprep.subr.mxu0 0.0
  %387 = vmatpush1.xpose.msra.mxu0 %v378
  %388 = vmatprep.subr.mxu0 0.0
  %389 = vmatpush1.xpose.msra.mxu0 %v380
  %390 = vmatprep.subr.mxu0 0.0
  %391 = vmatpush1.xpose.msra.mxu0 %v382
  %392 = vmatprep.subr.mxu0 0.0
  %393 = vmatpush1.xpose.msra.mxu0 0.0
  %394 = vmatprep.subr.mxu0 0.0
  %395 = vmatpush1.xpose.msra.mxu0 0.0
  %396 = vmatprep.subr.mxu0 0.0
  %397 = vmatpush1.xpose.msra.mxu0 0.0
  %398 = vmatprep.subr.mxu0 0.0
  %399 = vmatpush1.xpose.msra.mxu0 0.0
  %400 = vmatprep.subr.mxu0 0.0
  %401 = vmatpush1.xpose.msra.mxu0 0.0
  %402 = vmatprep.subr.mxu0 0.0
  %403 = vmatpush1.xpose.msra.mxu0 0.0
  %404 = vmatprep.subr.mxu0 0.0
  %405 = vmatpush1.xpose.msra.mxu0 0.0
  %406 = vmatprep.subr.mxu0 0.0
  %407 = vmatpush1.xpose.msra.mxu0 0.0
  %408 = vmatprep.subr.mxu0 0.0
  %409 = vmatpush1.xpose.msra.mxu0 0.0
  %410 = vmatprep.subr.mxu0 0.0
  %411 = vmatpush1.xpose.msra.mxu0 0.0
  %412 = vmatprep.subr.mxu0 0.0
  %413 = vmatpush1.xpose.msra.mxu0 0.0
  %414 = vmatprep.subr.mxu0 0.0
  %415 = vmatpush1.xpose.msra.mxu0 0.0
  %416 = vmatprep.subr.mxu0 0.0
  %417 = vmatpush1.xpose.msra.mxu0 0.0
  %418 = vmatprep.subr.mxu0 0.0
  %419 = vmatpush1.xpose.msra.mxu0 0.0
  %420 = vmatprep.subr.mxu0 0.0
  %421 = vmatpush1.xpose.msra.mxu0 0.0
  %422 = vmatprep.subr.mxu0 0.0
  %423 = vmatpush1.xpose.msra.mxu0 0.0
  %424 = vmatprep.subr.mxu0 0.0
  %425 = vmatpush1.xpose.msra.mxu0 0.0
  %426 = vmatprep.subr.mxu0 0.0
  %427 = vmatpush1.xpose.msra.mxu0 0.0
  %428 = vmatprep.subr.mxu0 0.0
  %429 = vmatpush1.xpose.msra.mxu0 0.0
  %430 = vmatprep.subr.mxu0 0.0
  %431 = vmatpush1.xpose.msra.mxu0 0.0
  %432 = vmatprep.subr.mxu0 0.0
  %433 = vmatpush1.xpose.msra.mxu0 0.0
  %434 = vmatprep.subr.mxu0 0.0
  %435 = vmatpush1.xpose.msra.mxu0 0.0
  %436 = vmatprep.subr.mxu0 0.0
  %437 = vmatpush1.xpose.msra.mxu0 0.0
  %438 = vmatprep.subr.mxu0 0.0
  %439 = vmatpush1.xpose.msra.mxu0 0.0
  %440 = vmatprep.subr.mxu0 0.0
  %441 = vmatpush1.xpose.msra.mxu0 0.0
  %442 = vmatprep.subr.mxu0 0.0
  %443 = vmatpush1.xpose.msra.mxu0 0.0
  %444 = vmatprep.subr.mxu0 0.0
  %445 = vmatpush1.xpose.msra.mxu0 0.0
  %446 = vmatprep.subr.mxu0 0.0
  %447 = vmatpush1.xpose.msra.mxu0 0.0
  %448 = vmatprep.mubr.f32.mxu0 0.0
  %449 = vmatmul.mubr.f32.gmra.mrb[0].mxu0 %v365
  %v450 = vpop.f32.mrb[0].mxu0
  %v451 = vadd.f32 0.0, %v450
  %v452 = vpop.f32.mrb[0].mxu0
  %453 = vmatprep.mubr.f32.mxu0 0.0
  %454 = vmatmul.mubr.f32.gmra.mrb[0].mxu0 %v368
  %v455 = vpop.f32.mrb[0].mxu0
  %v456 = vadd.f32 0.0, %v455
  %v457 = vpop.f32.mrb[0].mxu0
  %458 = vmatprep.mubr.f32.mxu0 0.0
  %459 = vmatmul.mubr.f32.gmra.mrb[0].mxu0 %v371
  %v460 = vpop.f32.mrb[0].mxu0
  %v461 = vadd.f32 0.0, %v460
  %v462 = vpop.f32.mrb[0].mxu0
  %463 = vmatprep.mubr.f32.mxu0 0.0
  %464 = vmatmul.mubr.f32.gmra.mrb[0].mxu0 %v374
  %v465 = vpop.f32.mrb[0].mxu0
  %v466 = vadd.f32 0.0, %v465
  %v467 = vpop.f32.mrb[0].mxu0
  %468 = vdwg.mxu0
  %469 = vrot.lane.b32.xlu0 %v244, 120
  %v470 = vpop.permute.xlu0 %469
  %471 = vrot.lane.b32.xlu0 %v245, 120
  %v472 = vpop.permute.xlu0 %471
  %473 = vrot.lane.b32.xlu0 %v250, 120
  %v474 = vpop.permute.xlu0 %473
  %475 = vrot.lane.b32.xlu0 %v251, 120
  %v476 = vpop.permute.xlu0 %475
  %477 = vrot.lane.b32.xlu0 %v232, 88
  %v478 = vpop.permute.xlu0 %477
  %479 = vrot.lane.b32.xlu0 %v237, 88
  %v480 = vpop.permute.xlu0 %479
  %481 = vrot.lane.b32.xlu0 %v350, 88
  %v482 = vpop.permute.xlu0 %481
  %483 = vrot.lane.b32.xlu0 %v352, 88
  %v484 = vpop.permute.xlu0 %483
  %v485 = vsel %vm363, %v470, 0
  %v487 = vsel %vm363, %v472, 0
  %v489 = vsel %vm363, %v474, 0
  %v491 = vsel %vm363, %v476, 0
  %v493 = vsel %vm363, %v478, 0
  %v495 = vsel %vm363, %v480, 0
  %v497 = vsel %vm363, %v482, 0
  %v499 = vsel %vm363, %v484, 0
  %501 = vmatprep.subr.mxu0 0.0
  %502 = vmatpush1.xpose.msra.mxu0 %v493
  %503 = vmatprep.subr.mxu0 0.0
  %504 = vmatpush1.xpose.msra.mxu0 %v495
  %505 = vmatprep.subr.mxu0 0.0
  %506 = vmatpush1.xpose.msra.mxu0 %v497
  %507 = vmatprep.subr.mxu0 0.0
  %508 = vmatpush1.xpose.msra.mxu0 %v499
  %509 = vmatprep.subr.mxu0 0.0
  %510 = vmatpush1.xpose.msra.mxu0 0.0
  %511 = vmatprep.subr.mxu0 0.0
  %512 = vmatpush1.xpose.msra.mxu0 0.0
  %513 = vmatprep.subr.mxu0 0.0
  %514 = vmatpush1.xpose.msra.mxu0 0.0
  %515 = vmatprep.subr.mxu0 0.0
  %516 = vmatpush1.xpose.msra.mxu0 0.0
  %517 = vmatprep.subr.mxu0 0.0
  %518 = vmatpush1.xpose.msra.mxu0 0.0
  %519 = vmatprep.subr.mxu0 0.0
  %520 = vmatpush1.xpose.msra.mxu0 0.0
  %521 = vmatprep.subr.mxu0 0.0
  %522 = vmatpush1.xpose.msra.mxu0 0.0
  %523 = vmatprep.subr.mxu0 0.0
  %524 = vmatpush1.xpose.msra.mxu0 0.0
  %525 = vmatprep.subr.mxu0 0.0
  %526 = vmatpush1.xpose.msra.mxu0 0.0
  %527 = vmatprep.subr.mxu0 0.0
  %528 = vmatpush1.xpose.msra.mxu0 0.0
  %529 = vmatprep.subr.mxu0 0.0
  %530 = vmatpush1.xpose.msra.mxu0 0.0
  %531 = vmatprep.subr.mxu0 0.0
  %532 = vmatpush1.xpose.msra.mxu0 0.0
  %533 = vmatprep.subr.mxu0 0.0
  %534 = vmatpush1.xpose.msra.mxu0 0.0
  %535 = vmatprep.subr.mxu0 0.0
  %536 = vmatpush1.xpose.msra.mxu0 0.0
  %537 = vmatprep.subr.mxu0 0.0
  %538 = vmatpush1.xpose.msra.mxu0 0.0
  %539 = vmatprep.subr.mxu0 0.0
  %540 = vmatpush1.xpose.msra.mxu0 0.0
  %541 = vmatprep.subr.mxu0 0.0
  %542 = vmatpush1.xpose.msra.mxu0 0.0
  %543 = vmatprep.subr.mxu0 0.0
  %544 = vmatpush1.xpose.msra.mxu0 0.0
  %545 = vmatprep.subr.mxu0 0.0
  %546 = vmatpush1.xpose.msra.mxu0 0.0
  %547 = vmatprep.subr.mxu0 0.0
  %548 = vmatpush1.xpose.msra.mxu0 0.0
  %549 = vmatprep.subr.mxu0 0.0
  %550 = vmatpush1.xpose.msra.mxu0 0.0
  %551 = vmatprep.subr.mxu0 0.0
  %552 = vmatpush1.xpose.msra.mxu0 0.0
  %553 = vmatprep.subr.mxu0 0.0
  %554 = vmatpush1.xpose.msra.mxu0 0.0
  %555 = vmatprep.subr.mxu0 0.0
  %556 = vmatpush1.xpose.msra.mxu0 0.0
  %557 = vmatprep.subr.mxu0 0.0
  %558 = vmatpush1.xpose.msra.mxu0 0.0
  %559 = vmatprep.subr.mxu0 0.0
  %560 = vmatpush1.xpose.msra.mxu0 0.0
  %561 = vmatprep.subr.mxu0 0.0
  %562 = vmatpush1.xpose.msra.mxu0 0.0
  %563 = vmatprep.subr.mxu0 0.0
  %564 = vmatpush1.xpose.msra.mxu0 0.0
  %565 = vmatprep.mubr.f32.mxu0 0.0
  %566 = vmatmul.mubr.f32.gmra.mrb[0].mxu0 %v485
  %v567 = vpop.f32.mrb[0].mxu0
  %v568 = vadd.f32 0.0, %v567
  %v569 = vpop.f32.mrb[0].mxu0
  %570 = vmatprep.mubr.f32.mxu0 0.0
  %571 = vmatmul.mubr.f32.gmra.mrb[0].mxu0 %v487
  %v572 = vpop.f32.mrb[0].mxu0
  %v573 = vadd.f32 0.0, %v572
  %v574 = vpop.f32.mrb[0].mxu0
  %575 = vmatprep.mubr.f32.mxu0 0.0
  %576 = vmatmul.mubr.f32.gmra.mrb[0].mxu0 %v489
  %v577 = vpop.f32.mrb[0].mxu0
  %v578 = vadd.f32 0.0, %v577
  %v579 = vpop.f32.mrb[0].mxu0
  %580 = vmatprep.mubr.f32.mxu0 0.0
  %581 = vmatmul.mubr.f32.gmra.mrb[0].mxu0 %v491
  %v582 = vpop.f32.mrb[0].mxu0
  %v583 = vadd.f32 0.0, %v582
  %v584 = vpop.f32.mrb[0].mxu0
  %585 = vdwg.mxu0
  %586 = vrot.lane.b32.xlu0 %v244, 112
  %v587 = vpop.permute.xlu0 %586
  %588 = vrot.lane.b32.xlu0 %v245, 112
  %v589 = vpop.permute.xlu0 %588
  %590 = vrot.lane.b32.xlu0 %v250, 112
  %v591 = vpop.permute.xlu0 %590
  %592 = vrot.lane.b32.xlu0 %v251, 112
  %v593 = vpop.permute.xlu0 %592
  %594 = vrot.lane.b32.xlu0 %v232, 80
  %v595 = vpop.permute.xlu0 %594
  %596 = vrot.lane.b32.xlu0 %v237, 80
  %v597 = vpop.permute.xlu0 %596
  %598 = vrot.lane.b32.xlu0 %v350, 80
  %v599 = vpop.permute.xlu0 %598
  %600 = vrot.lane.b32.xlu0 %v352, 80
  %v601 = vpop.permute.xlu0 %600
  %v602 = vsel %vm363, %v587, 0
  %v604 = vsel %vm363, %v589, 0
  %v606 = vsel %vm363, %v591, 0
  %v608 = vsel %vm363, %v593, 0
  %v610 = vsel %vm363, %v595, 0
  %v612 = vsel %vm363, %v597, 0
  %v614 = vsel %vm363, %v599, 0
  %v616 = vsel %vm363, %v601, 0
  %618 = vmatprep.subr.mxu0 0.0
  %619 = vmatpush1.xpose.msra.mxu0 %v610
  %620 = vmatprep.subr.mxu0 0.0
  %621 = vmatpush1.xpose.msra.mxu0 %v612
  %622 = vmatprep.subr.mxu0 0.0
  %623 = vmatpush1.xpose.msra.mxu0 %v614
  %624 = vmatprep.subr.mxu0 0.0
  %625 = vmatpush1.xpose.msra.mxu0 %v616
  %626 = vmatprep.subr.mxu0 0.0
  %627 = vmatpush1.xpose.msra.mxu0 0.0
  %628 = vmatprep.subr.mxu0 0.0
  %629 = vmatpush1.xpose.msra.mxu0 0.0
  %630 = vmatprep.subr.mxu0 0.0
  %631 = vmatpush1.xpose.msra.mxu0 0.0
  %632 = vmatprep.subr.mxu0 0.0
  %633 = vmatpush1.xpose.msra.mxu0 0.0
  %634 = vmatprep.subr.mxu0 0.0
  %635 = vmatpush1.xpose.msra.mxu0 0.0
  %636 = vmatprep.subr.mxu0 0.0
  %637 = vmatpush1.xpose.msra.mxu0 0.0
  %638 = vmatprep.subr.mxu0 0.0
  %639 = vmatpush1.xpose.msra.mxu0 0.0
  %640 = vmatprep.subr.mxu0 0.0
  %641 = vmatpush1.xpose.msra.mxu0 0.0
  %642 = vmatprep.subr.mxu0 0.0
  %643 = vmatpush1.xpose.msra.mxu0 0.0
  %644 = vmatprep.subr.mxu0 0.0
  %645 = vmatpush1.xpose.msra.mxu0 0.0
  %646 = vmatprep.subr.mxu0 0.0
  %647 = vmatpush1.xpose.msra.mxu0 0.0
  %648 = vmatprep.subr.mxu0 0.0
  %649 = vmatpush1.xpose.msra.mxu0 0.0
  %650 = vmatprep.subr.mxu0 0.0
  %651 = vmatpush1.xpose.msra.mxu0 0.0
  %652 = vmatprep.subr.mxu0 0.0
  %653 = vmatpush1.xpose.msra.mxu0 0.0
  %654 = vmatprep.subr.mxu0 0.0
  %655 = vmatpush1.xpose.msra.mxu0 0.0
  %656 = vmatprep.subr.mxu0 0.0
  %657 = vmatpush1.xpose.msra.mxu0 0.0
  %658 = vmatprep.subr.mxu0 0.0
  %659 = vmatpush1.xpose.msra.mxu0 0.0
  %660 = vmatprep.subr.mxu0 0.0
  %661 = vmatpush1.xpose.msra.mxu0 0.0
  %662 = vmatprep.subr.mxu0 0.0
  %663 = vmatpush1.xpose.msra.mxu0 0.0
  %664 = vmatprep.subr.mxu0 0.0
  %665 = vmatpush1.xpose.msra.mxu0 0.0
  %666 = vmatprep.subr.mxu0 0.0
  %667 = vmatpush1.xpose.msra.mxu0 0.0
  %668 = vmatprep.subr.mxu0 0.0
  %669 = vmatpush1.xpose.msra.mxu0 0.0
  %670 = vmatprep.subr.mxu0 0.0
  %671 = vmatpush1.xpose.msra.mxu0 0.0
  %672 = vmatprep.subr.mxu0 0.0
  %673 = vmatpush1.xpose.msra.mxu0 0.0
  %674 = vmatprep.subr.mxu0 0.0
  %675 = vmatpush1.xpose.msra.mxu0 0.0
  %676 = vmatprep.subr.mxu0 0.0
  %677 = vmatpush1.xpose.msra.mxu0 0.0
  %678 = vmatprep.subr.mxu0 0.0
  %679 = vmatpush1.xpose.msra.mxu0 0.0
  %680 = vmatprep.subr.mxu0 0.0
  %681 = vmatpush1.xpose.msra.mxu0 0.0
  %682 = vmatprep.mubr.f32.mxu0 0.0
  %683 = vmatmul.mubr.f32.gmra.mrb[0].mxu0 %v602
  %v684 = vpop.f32.mrb[0].mxu0
  %v685 = vadd.f32 0.0, %v684
  %v686 = vpop.f32.mrb[0].mxu0
  %687 = vmatprep.mubr.f32.mxu0 0.0
  %688 = vmatmul.mubr.f32.gmra.mrb[0].mxu0 %v604
  %v689 = vpop.f32.mrb[0].mxu0
  %v690 = vadd.f32 0.0, %v689
  %v691 = vpop.f32.mrb[0].mxu0
  %692 = vmatprep.mubr.f32.mxu0 0.0
  %693 = vmatmul.mubr.f32.gmra.mrb[0].mxu0 %v606
  %v694 = vpop.f32.mrb[0].mxu0
  %v695 = vadd.f32 0.0, %v694
  %v696 = vpop.f32.mrb[0].mxu0
  %697 = vmatprep.mubr.f32.mxu0 0.0
  %698 = vmatmul.mubr.f32.gmra.mrb[0].mxu0 %v608
  %v699 = vpop.f32.mrb[0].mxu0
  %v700 = vadd.f32 0.0, %v699
  %v701 = vpop.f32.mrb[0].mxu0
  %702 = vdwg.mxu0
  %703 = vrot.lane.b32.xlu0 %v244, 104
  %v704 = vpop.permute.xlu0 %703
  %705 = vrot.lane.b32.xlu0 %v245, 104
  %v706 = vpop.permute.xlu0 %705
  %707 = vrot.lane.b32.xlu0 %v250, 104
  %v708 = vpop.permute.xlu0 %707
  %709 = vrot.lane.b32.xlu0 %v251, 104
  %v710 = vpop.permute.xlu0 %709
  %711 = vrot.lane.b32.xlu0 %v232, 72
  %v712 = vpop.permute.xlu0 %711
  %713 = vrot.lane.b32.xlu0 %v237, 72
  %v714 = vpop.permute.xlu0 %713
  %715 = vrot.lane.b32.xlu0 %v350, 72
  %v716 = vpop.permute.xlu0 %715
  %717 = vrot.lane.b32.xlu0 %v352, 72
  %v718 = vpop.permute.xlu0 %717
  %v719 = vsel %vm363, %v704, 0
  %v721 = vsel %vm363, %v706, 0
  %v723 = vsel %vm363, %v708, 0
  %v725 = vsel %vm363, %v710, 0
  %v727 = vsel %vm363, %v712, 0
  %v729 = vsel %vm363, %v714, 0
  %v731 = vsel %vm363, %v716, 0
  %v733 = vsel %vm363, %v718, 0
  %735 = vmatprep.subr.mxu0 0.0
  %736 = vmatpush1.xpose.msra.mxu0 %v727
  %737 = vmatprep.subr.mxu0 0.0
  %738 = vmatpush1.xpose.msra.mxu0 %v729
  %739 = vmatprep.subr.mxu0 0.0
  %740 = vmatpush1.xpose.msra.mxu0 %v731
  %741 = vmatprep.subr.mxu0 0.0
  %742 = vmatpush1.xpose.msra.mxu0 %v733
  %743 = vmatprep.subr.mxu0 0.0
  %744 = vmatpush1.xpose.msra.mxu0 0.0
  %745 = vmatprep.subr.mxu0 0.0
  %746 = vmatpush1.xpose.msra.mxu0 0.0
  %747 = vmatprep.subr.mxu0 0.0
  %748 = vmatpush1.xpose.msra.mxu0 0.0
  %749 = vmatprep.subr.mxu0 0.0
  %750 = vmatpush1.xpose.msra.mxu0 0.0
  %751 = vmatprep.subr.mxu0 0.0
  %752 = vmatpush1.xpose.msra.mxu0 0.0
  %753 = vmatprep.subr.mxu0 0.0
  %754 = vmatpush1.xpose.msra.mxu0 0.0
  %755 = vmatprep.subr.mxu0 0.0
  %756 = vmatpush1.xpose.msra.mxu0 0.0
  %757 = vmatprep.subr.mxu0 0.0
  %758 = vmatpush1.xpose.msra.mxu0 0.0
  %759 = vmatprep.subr.mxu0 0.0
  %760 = vmatpush1.xpose.msra.mxu0 0.0
  %761 = vmatprep.subr.mxu0 0.0
  %762 = vmatpush1.xpose.msra.mxu0 0.0
  %763 = vmatprep.subr.mxu0 0.0
  %764 = vmatpush1.xpose.msra.mxu0 0.0
  %765 = vmatprep.subr.mxu0 0.0
  %766 = vmatpush1.xpose.msra.mxu0 0.0
  %767 = vmatprep.subr.mxu0 0.0
  %768 = vmatpush1.xpose.msra.mxu0 0.0
  %769 = vmatprep.subr.mxu0 0.0
  %770 = vmatpush1.xpose.msra.mxu0 0.0
  %771 = vmatprep.subr.mxu0 0.0
  %772 = vmatpush1.xpose.msra.mxu0 0.0
  %773 = vmatprep.subr.mxu0 0.0
  %774 = vmatpush1.xpose.msra.mxu0 0.0
  %775 = vmatprep.subr.mxu0 0.0
  %776 = vmatpush1.xpose.msra.mxu0 0.0
  %777 = vmatprep.subr.mxu0 0.0
  %778 = vmatpush1.xpose.msra.mxu0 0.0
  %779 = vmatprep.subr.mxu0 0.0
  %780 = vmatpush1.xpose.msra.mxu0 0.0
  %781 = vmatprep.subr.mxu0 0.0
  %782 = vmatpush1.xpose.msra.mxu0 0.0
  %783 = vmatprep.subr.mxu0 0.0
  %784 = vmatpush1.xpose.msra.mxu0 0.0
  %785 = vmatprep.subr.mxu0 0.0
  %786 = vmatpush1.xpose.msra.mxu0 0.0
  %787 = vmatprep.subr.mxu0 0.0
  %788 = vmatpush1.xpose.msra.mxu0 0.0
  %789 = vmatprep.subr.mxu0 0.0
  %790 = vmatpush1.xpose.msra.mxu0 0.0
  %791 = vmatprep.subr.mxu0 0.0
  %792 = vmatpush1.xpose.msra.mxu0 0.0
  %793 = vmatprep.subr.mxu0 0.0
  %794 = vmatpush1.xpose.msra.mxu0 0.0
  %795 = vmatprep.subr.mxu0 0.0
  %796 = vmatpush1.xpose.msra.mxu0 0.0
  %797 = vmatprep.subr.mxu0 0.0
  %798 = vmatpush1.xpose.msra.mxu0 0.0
  %799 = vmatprep.mubr.f32.mxu0 0.0
  %800 = vmatmul.mubr.f32.gmra.mrb[0].mxu0 %v719
  %v801 = vpop.f32.mrb[0].mxu0
  %v802 = vadd.f32 0.0, %v801
  %v803 = vpop.f32.mrb[0].mxu0
  %804 = vmatprep.mubr.f32.mxu0 0.0
  %805 = vmatmul.mubr.f32.gmra.mrb[0].mxu0 %v721
  %v806 = vpop.f32.mrb[0].mxu0
  %v807 = vadd.f32 0.0, %v806
  %v808 = vpop.f32.mrb[0].mxu0
  %809 = vmatprep.mubr.f32.mxu0 0.0
  %810 = vmatmul.mubr.f32.gmra.mrb[0].mxu0 %v723
  %v811 = vpop.f32.mrb[0].mxu0
  %v812 = vadd.f32 0.0, %v811
  %v813 = vpop.f32.mrb[0].mxu0
  %814 = vmatprep.mubr.f32.mxu0 0.0
  %815 = vmatmul.mubr.f32.gmra.mrb[0].mxu0 %v725
  %v816 = vpop.f32.mrb[0].mxu0
  %v817 = vadd.f32 0.0, %v816
  %v818 = vpop.f32.mrb[0].mxu0
  %819 = vdwg.mxu0
  %828 = vrot.lane.b32.xlu0 %v461, 97
  %v829 = vpop.permute.xlu0 %828
  %830 = vrot.lane.b32.xlu0 %v466, 97
  %v831 = vpop.permute.xlu0 %830
  %832 = vrot.lane.b32.xlu0 %v578, 97
  %v833 = vpop.permute.xlu0 %832
  %834 = vrot.lane.b32.xlu0 %v583, 97
  %v835 = vpop.permute.xlu0 %834
  %836 = vrot.lane.b32.xlu0 %v695, 97
  %v837 = vpop.permute.xlu0 %836
  %838 = vrot.lane.b32.xlu0 %v700, 97
  %v839 = vpop.permute.xlu0 %838
  %840 = vrot.lane.b32.xlu0 %v812, 97
  %v841 = vpop.permute.xlu0 %840
  %842 = vrot.lane.b32.xlu0 %v817, 97
  %v843 = vpop.permute.xlu0 %842
  %852 = vrot.lane.b32.xlu0 %v461, 113
  %v853 = vpop.permute.xlu0 %852
  %854 = vrot.lane.b32.xlu0 %v466, 113
  %v855 = vpop.permute.xlu0 %854
  %856 = vrot.lane.b32.xlu0 %v578, 113
  %v857 = vpop.permute.xlu0 %856
  %858 = vrot.lane.b32.xlu0 %v583, 113
  %v859 = vpop.permute.xlu0 %858
  %860 = vrot.lane.b32.xlu0 %v695, 113
  %v861 = vpop.permute.xlu0 %860
  %862 = vrot.lane.b32.xlu0 %v700, 113
  %v863 = vpop.permute.xlu0 %862
  %864 = vrot.lane.b32.xlu0 %v812, 113
  %v865 = vpop.permute.xlu0 %864
  %866 = vrot.lane.b32.xlu0 %v817, 113
  %v867 = vpop.permute.xlu0 %866
  %vm876 = vcmask 7168
  %v877 = vsel %vm876, %v829, %v853
  %v878 = vsel %vm876, %v831, %v855
  %v879 = vsel %vm876, %v833, %v857
  %v880 = vsel %vm876, %v835, %v859
  %v881 = vsel %vm876, %v837, %v861
  %v882 = vsel %vm876, %v839, %v863
  %v883 = vsel %vm876, %v841, %v865
  %v884 = vsel %vm876, %v843, %v867
  %v885 = vand.u32 %v149, 1
  %v886 = vand.u32 %v150, 1
  %v887 = vand.u32 %v151, 1
  %v888 = vand.u32 %v152, 1
  %v889 = vand.u32 %v153, 1
  %v890 = vand.u32 %v154, 1
  %v891 = vand.u32 %v155, 1
  %v892 = vand.u32 %v156, 1
  %vm893 = vcmp.ne.s32.totalorder %v885, 0
  %vm894 = vcmp.ne.s32.totalorder %v886, 0
  %vm895 = vcmp.ne.s32.totalorder %v887, 0
  %vm896 = vcmp.ne.s32.totalorder %v888, 0
  %vm897 = vcmp.ne.s32.totalorder %v889, 0
  %vm898 = vcmp.ne.s32.totalorder %v890, 0
  %vm899 = vcmp.ne.s32.totalorder %v891, 0
  %vm900 = vcmp.ne.s32.totalorder %v892, 0
  %v901 = vsel %vm893, 1, 0
  %v902 = vsel %vm894, 1, 0
  %v903 = vsel %vm895, 1, 0
  %v904 = vsel %vm896, 1, 0
  %v905 = vsel %vm897, 1, 0
  %v906 = vsel %vm898, 1, 0
  %v907 = vsel %vm899, 1, 0
  %v908 = vsel %vm900, 1, 0
  %vm909 = vcmp.eq.s32.totalorder %v901, 1
  %vm910 = vcmp.eq.s32.totalorder %v902, 1
  %vm911 = vcmp.eq.s32.totalorder %v903, 1
  %vm912 = vcmp.eq.s32.totalorder %v904, 1
  %vm913 = vcmp.eq.s32.totalorder %v905, 1
  %vm914 = vcmp.eq.s32.totalorder %v906, 1
  %vm915 = vcmp.eq.s32.totalorder %v907, 1
  %vm916 = vcmp.eq.s32.totalorder %v908, 1
  %917 = vrot.lane.b32.xlu0 %v461, 112
  %v918 = vpop.permute.xlu0 %917
  %919 = vrot.lane.b32.xlu0 %v466, 112
  %v920 = vpop.permute.xlu0 %919
  %921 = vrot.lane.b32.xlu0 %v578, 112
  %v922 = vpop.permute.xlu0 %921
  %923 = vrot.lane.b32.xlu0 %v583, 112
  %v924 = vpop.permute.xlu0 %923
  %925 = vrot.lane.b32.xlu0 %v695, 112
  %v926 = vpop.permute.xlu0 %925
  %927 = vrot.lane.b32.xlu0 %v700, 112
  %v928 = vpop.permute.xlu0 %927
  %929 = vrot.lane.b32.xlu0 %v812, 112
  %v930 = vpop.permute.xlu0 %929
  %931 = vrot.lane.b32.xlu0 %v817, 112
  %v932 = vpop.permute.xlu0 %931
  %v941 = vsel %vm909, %v877, %v918
  %v942 = vsel %vm910, %v878, %v920
  %v943 = vsel %vm911, %v879, %v922
  %v944 = vsel %vm912, %v880, %v924
  %v945 = vsel %vm913, %v881, %v926
  %v946 = vsel %vm914, %v882, %v928
  %v947 = vsel %vm915, %v883, %v930
  %v948 = vsel %vm916, %v884, %v932
  %957 = vrot.lane.b32.xlu0 %v941, 114
  %v958 = vpop.permute.xlu0 %957
  %959 = vrot.lane.b32.xlu0 %v942, 114
  %v960 = vpop.permute.xlu0 %959
  %961 = vrot.lane.b32.xlu0 %v943, 114
  %v962 = vpop.permute.xlu0 %961
  %963 = vrot.lane.b32.xlu0 %v944, 114
  %v964 = vpop.permute.xlu0 %963
  %965 = vrot.lane.b32.xlu0 %v945, 114
  %v966 = vpop.permute.xlu0 %965
  %967 = vrot.lane.b32.xlu0 %v946, 114
  %v968 = vpop.permute.xlu0 %967
  %969 = vrot.lane.b32.xlu0 %v947, 114
  %v970 = vpop.permute.xlu0 %969
  %971 = vrot.lane.b32.xlu0 %v948, 114
  %v972 = vpop.permute.xlu0 %971
  %981 = vrot.lane.b32.xlu0 %v941, 2
  %v982 = vpop.permute.xlu0 %981
  %983 = vrot.lane.b32.xlu0 %v942, 2
  %v984 = vpop.permute.xlu0 %983
  %985 = vrot.lane.b32.xlu0 %v943, 2
  %v986 = vpop.permute.xlu0 %985
  %987 = vrot.lane.b32.xlu0 %v944, 2
  %v988 = vpop.permute.xlu0 %987
  %989 = vrot.lane.b32.xlu0 %v945, 2
  %v990 = vpop.permute.xlu0 %989
  %991 = vrot.lane.b32.xlu0 %v946, 2
  %v992 = vpop.permute.xlu0 %991
  %993 = vrot.lane.b32.xlu0 %v947, 2
  %v994 = vpop.permute.xlu0 %993
  %995 = vrot.lane.b32.xlu0 %v948, 2
  %v996 = vpop.permute.xlu0 %995
  %vm1005 = vcmask 15360
  %v1006 = vsel %vm1005, %v958, %v982
  %v1007 = vsel %vm1005, %v960, %v984
  %v1008 = vsel %vm1005, %v962, %v986
  %v1009 = vsel %vm1005, %v964, %v988
  %v1010 = vsel %vm1005, %v966, %v990
  %v1011 = vsel %vm1005, %v968, %v992
  %v1012 = vsel %vm1005, %v970, %v994
  %v1013 = vsel %vm1005, %v972, %v996
  %v1014 = vand.u32 %v149, 2
  %v1015 = vand.u32 %v150, 2
  %v1016 = vand.u32 %v151, 2
  %v1017 = vand.u32 %v152, 2
  %v1018 = vand.u32 %v153, 2
  %v1019 = vand.u32 %v154, 2
  %v1020 = vand.u32 %v155, 2
  %v1021 = vand.u32 %v156, 2
  %vm1022 = vcmp.ne.s32.totalorder %v1014, 0
  %vm1023 = vcmp.ne.s32.totalorder %v1015, 0
  %vm1024 = vcmp.ne.s32.totalorder %v1016, 0
  %vm1025 = vcmp.ne.s32.totalorder %v1017, 0
  %vm1026 = vcmp.ne.s32.totalorder %v1018, 0
  %vm1027 = vcmp.ne.s32.totalorder %v1019, 0
  %vm1028 = vcmp.ne.s32.totalorder %v1020, 0
  %vm1029 = vcmp.ne.s32.totalorder %v1021, 0
  %v1030 = vsel %vm1022, 1, 0
  %v1031 = vsel %vm1023, 1, 0
  %v1032 = vsel %vm1024, 1, 0
  %v1033 = vsel %vm1025, 1, 0
  %v1034 = vsel %vm1026, 1, 0
  %v1035 = vsel %vm1027, 1, 0
  %v1036 = vsel %vm1028, 1, 0
  %v1037 = vsel %vm1029, 1, 0
  %vm1038 = vcmp.eq.s32.totalorder %v1030, 1
  %vm1039 = vcmp.eq.s32.totalorder %v1031, 1
  %vm1040 = vcmp.eq.s32.totalorder %v1032, 1
  %vm1041 = vcmp.eq.s32.totalorder %v1033, 1
  %vm1042 = vcmp.eq.s32.totalorder %v1034, 1
  %vm1043 = vcmp.eq.s32.totalorder %v1035, 1
  %vm1044 = vcmp.eq.s32.totalorder %v1036, 1
  %vm1045 = vcmp.eq.s32.totalorder %v1037, 1
  %v1046 = vsel %vm1038, %v1006, %v941
  %v1047 = vsel %vm1039, %v1007, %v942
  %v1048 = vsel %vm1040, %v1008, %v943
  %v1049 = vsel %vm1041, %v1009, %v944
  %v1050 = vsel %vm1042, %v1010, %v945
  %v1051 = vsel %vm1043, %v1011, %v946
  %v1052 = vsel %vm1044, %v1012, %v947
  %v1053 = vsel %vm1045, %v1013, %v948
  %1062 = vrot.lane.b32.xlu0 %v1046, 116
  %v1063 = vpop.permute.xlu0 %1062
  %1064 = vrot.lane.b32.xlu0 %v1047, 116
  %v1065 = vpop.permute.xlu0 %1064
  %1066 = vrot.lane.b32.xlu0 %v1048, 116
  %v1067 = vpop.permute.xlu0 %1066
  %1068 = vrot.lane.b32.xlu0 %v1049, 116
  %v1069 = vpop.permute.xlu0 %1068
  %1070 = vrot.lane.b32.xlu0 %v1050, 116
  %v1071 = vpop.permute.xlu0 %1070
  %1072 = vrot.lane.b32.xlu0 %v1051, 116
  %v1073 = vpop.permute.xlu0 %1072
  %1074 = vrot.lane.b32.xlu0 %v1052, 116
  %v1075 = vpop.permute.xlu0 %1074
  %1076 = vrot.lane.b32.xlu0 %v1053, 116
  %v1077 = vpop.permute.xlu0 %1076
  %1086 = vrot.lane.b32.xlu0 %v1046, 4
  %v1087 = vpop.permute.xlu0 %1086
  %1088 = vrot.lane.b32.xlu0 %v1047, 4
  %v1089 = vpop.permute.xlu0 %1088
  %1090 = vrot.lane.b32.xlu0 %v1048, 4
  %v1091 = vpop.permute.xlu0 %1090
  %1092 = vrot.lane.b32.xlu0 %v1049, 4
  %v1093 = vpop.permute.xlu0 %1092
  %1094 = vrot.lane.b32.xlu0 %v1050, 4
  %v1095 = vpop.permute.xlu0 %1094
  %1096 = vrot.lane.b32.xlu0 %v1051, 4
  %v1097 = vpop.permute.xlu0 %1096
  %1098 = vrot.lane.b32.xlu0 %v1052, 4
  %v1099 = vpop.permute.xlu0 %1098
  %1100 = vrot.lane.b32.xlu0 %v1053, 4
  %v1101 = vpop.permute.xlu0 %1100
  %vm1110 = vcmask 31744
  %v1111 = vsel %vm1110, %v1063, %v1087
  %v1112 = vsel %vm1110, %v1065, %v1089
  %v1113 = vsel %vm1110, %v1067, %v1091
  %v1114 = vsel %vm1110, %v1069, %v1093
  %v1115 = vsel %vm1110, %v1071, %v1095
  %v1116 = vsel %vm1110, %v1073, %v1097
  %v1117 = vsel %vm1110, %v1075, %v1099
  %v1118 = vsel %vm1110, %v1077, %v1101
  %v1119 = vand.u32 %v149, 4
  %v1120 = vand.u32 %v150, 4
  %v1121 = vand.u32 %v151, 4
  %v1122 = vand.u32 %v152, 4
  %v1123 = vand.u32 %v153, 4
  %v1124 = vand.u32 %v154, 4
  %v1125 = vand.u32 %v155, 4
  %v1126 = vand.u32 %v156, 4
  %vm1127 = vcmp.ne.s32.totalorder %v1119, 0
  %vm1128 = vcmp.ne.s32.totalorder %v1120, 0
  %vm1129 = vcmp.ne.s32.totalorder %v1121, 0
  %vm1130 = vcmp.ne.s32.totalorder %v1122, 0
  %vm1131 = vcmp.ne.s32.totalorder %v1123, 0
  %vm1132 = vcmp.ne.s32.totalorder %v1124, 0
  %vm1133 = vcmp.ne.s32.totalorder %v1125, 0
  %vm1134 = vcmp.ne.s32.totalorder %v1126, 0
  %v1135 = vsel %vm1127, 1, 0
  %v1136 = vsel %vm1128, 1, 0
  %v1137 = vsel %vm1129, 1, 0
  %v1138 = vsel %vm1130, 1, 0
  %v1139 = vsel %vm1131, 1, 0
  %v1140 = vsel %vm1132, 1, 0
  %v1141 = vsel %vm1133, 1, 0
  %v1142 = vsel %vm1134, 1, 0
  %vm1143 = vcmp.eq.s32.totalorder %v1135, 1
  %vm1144 = vcmp.eq.s32.totalorder %v1136, 1
  %vm1145 = vcmp.eq.s32.totalorder %v1137, 1
  %vm1146 = vcmp.eq.s32.totalorder %v1138, 1
  %vm1147 = vcmp.eq.s32.totalorder %v1139, 1
  %vm1148 = vcmp.eq.s32.totalorder %v1140, 1
  %vm1149 = vcmp.eq.s32.totalorder %v1141, 1
  %vm1150 = vcmp.eq.s32.totalorder %v1142, 1
  %v1151 = vsel %vm1143, %v1111, %v1046
  %v1152 = vsel %vm1144, %v1112, %v1047
  %v1153 = vsel %vm1145, %v1113, %v1048
  %v1154 = vsel %vm1146, %v1114, %v1049
  %v1155 = vsel %vm1147, %v1115, %v1050
  %v1156 = vsel %vm1148, %v1116, %v1051
  %v1157 = vsel %vm1149, %v1117, %v1052
  %v1158 = vsel %vm1150, %v1118, %v1053
  %1167 = vrot.lane.b32.xlu0 %v1151, 120
  %v1168 = vpop.permute.xlu0 %1167
  %1169 = vrot.lane.b32.xlu0 %v1152, 120
  %v1170 = vpop.permute.xlu0 %1169
  %1171 = vrot.lane.b32.xlu0 %v1153, 120
  %v1172 = vpop.permute.xlu0 %1171
  %1173 = vrot.lane.b32.xlu0 %v1154, 120
  %v1174 = vpop.permute.xlu0 %1173
  %1175 = vrot.lane.b32.xlu0 %v1155, 120
  %v1176 = vpop.permute.xlu0 %1175
  %1177 = vrot.lane.b32.xlu0 %v1156, 120
  %v1178 = vpop.permute.xlu0 %1177
  %1179 = vrot.lane.b32.xlu0 %v1157, 120
  %v1180 = vpop.permute.xlu0 %1179
  %1181 = vrot.lane.b32.xlu0 %v1158, 120
  %v1182 = vpop.permute.xlu0 %1181
  %v1191 = vsel %vm363, %v1168, %v1151
  %v1192 = vsel %vm363, %v1170, %v1152
  %v1193 = vsel %vm363, %v1172, %v1153
  %v1194 = vsel %vm363, %v1174, %v1154
  %v1195 = vsel %vm363, %v1176, %v1155
  %v1196 = vsel %vm363, %v1178, %v1156
  %v1197 = vsel %vm363, %v1180, %v1157
  %v1198 = vsel %vm363, %v1182, %v1158
  %1201 = vrot.lane.b32.xlu0 %v339, 124
  %v1202 = vpop.permute.xlu0 %1201
  %1203 = vrot.lane.b32.xlu0 %v344, 124
  %v1204 = vpop.permute.xlu0 %1203
  %v1207 = vsub.f32 %v339, %v1202
  %v1208 = vsub.f32 %v344, %v1204
  %1210 = vset.pattern.permute.xlu0 0
  %1211 = vperm.xlu0 %1210, %v1207
  %v1212 = vpop.permute.xlu0 %1211
  %1215 = vset.pattern.permute.xlu0 0
  %1216 = vperm.xlu0 %1215, %v1208
  %v1217 = vpop.permute.xlu0 %1216
  %v1219 = vmul.f32 %v29, %v1212
  %v1220 = vmul.f32 %v30, %v1217
  %1221 = vset.pattern.permute.xlu0 4
  %1222 = vperm.xlu0 %1221, %v339
  %v1223 = vpop.permute.xlu0 %1222
  %1225 = vset.pattern.permute.xlu0 4
  %1226 = vperm.xlu0 %1225, %v344
  %v1227 = vpop.permute.xlu0 %1226
  %v1229 = vadd.f32 %v1223, %v1219
  %v1230 = vadd.f32 %v1227, %v1220
  %v1231 = vadd.f32 %v451, %v1191
  %v1232 = vadd.f32 %v456, %v1192
  %v1233 = vadd.f32 %v1231, %v1229
  %v1234 = vadd.f32 %v1232, %v1230
  %v1235 = vmul.f32 %v1233, 0.35355338
  %v1236 = vmul.f32 %v1234, 0.35355338
  %v1237 = vadd.f32 %v1235, %v32
  %v1238 = vadd.f32 %v1236, %v33
  %vm1239 = vcmask 130048
  %v1240 = vsel %vm1239, %v1237, -inf
  %1241 = vmax.xlane.f32.xlu0 %v1240
  %v1242 = vpop.xlane.xlu0 %1241
  %v1243 = vsel %vm1239, %v1238, -inf
  %1244 = vmax.xlane.f32.xlu0 %v1243
  %v1245 = vpop.xlane.xlu0 %1244
  %v1246 = vsub.f32 %v1237, %v1242
  %v1247 = vsub.f32 %v1238, %v1245
  %v1248 = vmul.f32 %v1246, 1.442695
  %v1249 = vpow.pop %v1248
  %v1250 = vmul.f32 %v1247, 1.442695
  %v1251 = vpow.pop %v1250
  %v1252 = vsel %vm1239, %v1249, 0.0
  %1253 = vadd.xlane.f32.xlu0 %v1252
  %v1254 = vpop.xlane.xlu0 %1253
  %v1255 = vsel %vm1239, %v1251, 0.0
  %1256 = vadd.xlane.f32.xlu0 %v1255
  %v1257 = vpop.xlane.xlu0 %1256
  %v1258 = vrcp.pop %v1254
  %v1259 = vmul.f32 %v1249, %v1258
  %v1260 = vrcp.pop %v1257
  %v1261 = vmul.f32 %v1251, %v1260
  %1262 = vrot.lane.b32.xlu0 %v232, 64
  %v1263 = vpop.permute.xlu0 %1262
  %1264 = vrot.lane.b32.xlu0 %v237, 64
  %v1265 = vpop.permute.xlu0 %1264
  %v1269 = vsel %vm1239, %v1259, 0
  %v1272 = vsel %vm1239, %v1261, 0
  %1274 = vmatprep.subr.mxu0 0.0
  %1275 = vmatpush1.msra.mxu0 %v1263
  %1276 = vmatprep.subr.mxu0 0.0
  %1277 = vmatpush1.msra.mxu0 %v1265
  %1278 = vmatprep.subr.mxu0 0.0
  %1279 = vmatpush1.msra.mxu0 0.0
  %1280 = vmatprep.subr.mxu0 0.0
  %1281 = vmatpush1.msra.mxu0 0.0
  %1282 = vmatprep.subr.mxu0 0.0
  %1283 = vmatpush1.msra.mxu0 0.0
  %1284 = vmatprep.subr.mxu0 0.0
  %1285 = vmatpush1.msra.mxu0 0.0
  %1286 = vmatprep.subr.mxu0 0.0
  %1287 = vmatpush1.msra.mxu0 0.0
  %1288 = vmatprep.subr.mxu0 0.0
  %1289 = vmatpush1.msra.mxu0 0.0
  %1290 = vmatprep.subr.mxu0 0.0
  %1291 = vmatpush1.msra.mxu0 0.0
  %1292 = vmatprep.subr.mxu0 0.0
  %1293 = vmatpush1.msra.mxu0 0.0
  %1294 = vmatprep.subr.mxu0 0.0
  %1295 = vmatpush1.msra.mxu0 0.0
  %1296 = vmatprep.subr.mxu0 0.0
  %1297 = vmatpush1.msra.mxu0 0.0
  %1298 = vmatprep.subr.mxu0 0.0
  %1299 = vmatpush1.msra.mxu0 0.0
  %1300 = vmatprep.subr.mxu0 0.0
  %1301 = vmatpush1.msra.mxu0 0.0
  %1302 = vmatprep.subr.mxu0 0.0
  %1303 = vmatpush1.msra.mxu0 0.0
  %1304 = vmatprep.subr.mxu0 0.0
  %1305 = vmatpush1.msra.mxu0 0.0
  %1306 = vmatprep.subr.mxu0 0.0
  %1307 = vmatpush1.msra.mxu0 0.0
  %1308 = vmatprep.subr.mxu0 0.0
  %1309 = vmatpush1.msra.mxu0 0.0
  %1310 = vmatprep.subr.mxu0 0.0
  %1311 = vmatpush1.msra.mxu0 0.0
  %1312 = vmatprep.subr.mxu0 0.0
  %1313 = vmatpush1.msra.mxu0 0.0
  %1314 = vmatprep.subr.mxu0 0.0
  %1315 = vmatpush1.msra.mxu0 0.0
  %1316 = vmatprep.subr.mxu0 0.0
  %1317 = vmatpush1.msra.mxu0 0.0
  %1318 = vmatprep.subr.mxu0 0.0
  %1319 = vmatpush1.msra.mxu0 0.0
  %1320 = vmatprep.subr.mxu0 0.0
  %1321 = vmatpush1.msra.mxu0 0.0
  %1322 = vmatprep.subr.mxu0 0.0
  %1323 = vmatpush1.msra.mxu0 0.0
  %1324 = vmatprep.subr.mxu0 0.0
  %1325 = vmatpush1.msra.mxu0 0.0
  %1326 = vmatprep.subr.mxu0 0.0
  %1327 = vmatpush1.msra.mxu0 0.0
  %1328 = vmatprep.subr.mxu0 0.0
  %1329 = vmatpush1.msra.mxu0 0.0
  %1330 = vmatprep.subr.mxu0 0.0
  %1331 = vmatpush1.msra.mxu0 0.0
  %1332 = vmatprep.subr.mxu0 0.0
  %1333 = vmatpush1.msra.mxu0 0.0
  %1334 = vmatprep.subr.mxu0 0.0
  %1335 = vmatpush1.msra.mxu0 0.0
  %1336 = vmatprep.subr.mxu0 0.0
  %1337 = vmatpush1.msra.mxu0 0.0
  %1338 = vmatprep.mubr.f32.mxu0 0.0
  %1339 = vmatmul.mubr.f32.gmra.mrb[0].mxu0 %v1269
  %v1340 = vpop.f32.mrb[0].mxu0
  %v1341 = vadd.f32 0.0, %v1340
  %v1342 = vpop.f32.mrb[0].mxu0
  %1343 = vmatprep.mubr.f32.mxu0 0.0
  %1344 = vmatmul.mubr.f32.gmra.mrb[0].mxu0 %v1272
  %v1345 = vpop.f32.mrb[0].mxu0
  %v1346 = vadd.f32 0.0, %v1345
  %v1347 = vpop.f32.mrb[0].mxu0
  %1348 = vdwg.mxu0
  %1349 = vset.pattern.permute.xlu0 1
  %1350 = vperm.xlu0 %1349, %v1207
  %v1351 = vpop.permute.xlu0 %1350
  %1353 = vset.pattern.permute.xlu0 1
  %1354 = vperm.xlu0 %1353, %v1208
  %v1355 = vpop.permute.xlu0 %1354
  %v1357 = vmul.f32 %v29, %v1351
  %v1358 = vmul.f32 %v30, %v1355
  %1359 = vset.pattern.permute.xlu0 5
  %1360 = vperm.xlu0 %1359, %v339
  %v1361 = vpop.permute.xlu0 %1360
  %1363 = vset.pattern.permute.xlu0 5
  %1364 = vperm.xlu0 %1363, %v344
  %v1365 = vpop.permute.xlu0 %1364
  %v1367 = vadd.f32 %v1361, %v1357
  %v1368 = vadd.f32 %v1365, %v1358
  %v1369 = vadd.f32 %v568, %v1193
  %v1370 = vadd.f32 %v573, %v1194
  %v1371 = vadd.f32 %v1369, %v1367
  %v1372 = vadd.f32 %v1370, %v1368
  %v1373 = vmul.f32 %v1371, 0.35355338
  %v1374 = vmul.f32 %v1372, 0.35355338
  %v1375 = vadd.f32 %v1373, %v32
  %v1376 = vadd.f32 %v1374, %v33
  %v1377 = vsel %vm1239, %v1375, -inf
  %1378 = vmax.xlane.f32.xlu0 %v1377
  %v1379 = vpop.xlane.xlu0 %1378
  %v1380 = vsel %vm1239, %v1376, -inf
  %1381 = vmax.xlane.f32.xlu0 %v1380
  %v1382 = vpop.xlane.xlu0 %1381
  %v1383 = vsub.f32 %v1375, %v1379
  %v1384 = vsub.f32 %v1376, %v1382
  %v1385 = vmul.f32 %v1383, 1.442695
  %v1386 = vpow.pop %v1385
  %v1387 = vmul.f32 %v1384, 1.442695
  %v1388 = vpow.pop %v1387
  %v1389 = vsel %vm1239, %v1386, 0.0
  %1390 = vadd.xlane.f32.xlu0 %v1389
  %v1391 = vpop.xlane.xlu0 %1390
  %v1392 = vsel %vm1239, %v1388, 0.0
  %1393 = vadd.xlane.f32.xlu0 %v1392
  %v1394 = vpop.xlane.xlu0 %1393
  %v1395 = vrcp.pop %v1391
  %v1396 = vmul.f32 %v1386, %v1395
  %v1397 = vrcp.pop %v1394
  %v1398 = vmul.f32 %v1388, %v1397
  %1399 = vrot.lane.b32.xlu0 %v232, 56
  %v1400 = vpop.permute.xlu0 %1399
  %1401 = vrot.lane.b32.xlu0 %v237, 56
  %v1402 = vpop.permute.xlu0 %1401
  %v1406 = vsel %vm1239, %v1396, 0
  %v1409 = vsel %vm1239, %v1398, 0
  %1411 = vmatprep.subr.mxu0 0.0
  %1412 = vmatpush1.msra.mxu0 %v1400
  %1413 = vmatprep.subr.mxu0 0.0
  %1414 = vmatpush1.msra.mxu0 %v1402
  %1415 = vmatprep.subr.mxu0 0.0
  %1416 = vmatpush1.msra.mxu0 0.0
  %1417 = vmatprep.subr.mxu0 0.0
  %1418 = vmatpush1.msra.mxu0 0.0
  %1419 = vmatprep.subr.mxu0 0.0
  %1420 = vmatpush1.msra.mxu0 0.0
  %1421 = vmatprep.subr.mxu0 0.0
  %1422 = vmatpush1.msra.mxu0 0.0
  %1423 = vmatprep.subr.mxu0 0.0
  %1424 = vmatpush1.msra.mxu0 0.0
  %1425 = vmatprep.subr.mxu0 0.0
  %1426 = vmatpush1.msra.mxu0 0.0
  %1427 = vmatprep.subr.mxu0 0.0
  %1428 = vmatpush1.msra.mxu0 0.0
  %1429 = vmatprep.subr.mxu0 0.0
  %1430 = vmatpush1.msra.mxu0 0.0
  %1431 = vmatprep.subr.mxu0 0.0
  %1432 = vmatpush1.msra.mxu0 0.0
  %1433 = vmatprep.subr.mxu0 0.0
  %1434 = vmatpush1.msra.mxu0 0.0
  %1435 = vmatprep.subr.mxu0 0.0
  %1436 = vmatpush1.msra.mxu0 0.0
  %1437 = vmatprep.subr.mxu0 0.0
  %1438 = vmatpush1.msra.mxu0 0.0
  %1439 = vmatprep.subr.mxu0 0.0
  %1440 = vmatpush1.msra.mxu0 0.0
  %1441 = vmatprep.subr.mxu0 0.0
  %1442 = vmatpush1.msra.mxu0 0.0
  %1443 = vmatprep.subr.mxu0 0.0
  %1444 = vmatpush1.msra.mxu0 0.0
  %1445 = vmatprep.subr.mxu0 0.0
  %1446 = vmatpush1.msra.mxu0 0.0
  %1447 = vmatprep.subr.mxu0 0.0
  %1448 = vmatpush1.msra.mxu0 0.0
  %1449 = vmatprep.subr.mxu0 0.0
  %1450 = vmatpush1.msra.mxu0 0.0
  %1451 = vmatprep.subr.mxu0 0.0
  %1452 = vmatpush1.msra.mxu0 0.0
  %1453 = vmatprep.subr.mxu0 0.0
  %1454 = vmatpush1.msra.mxu0 0.0
  %1455 = vmatprep.subr.mxu0 0.0
  %1456 = vmatpush1.msra.mxu0 0.0
  %1457 = vmatprep.subr.mxu0 0.0
  %1458 = vmatpush1.msra.mxu0 0.0
  %1459 = vmatprep.subr.mxu0 0.0
  %1460 = vmatpush1.msra.mxu0 0.0
  %1461 = vmatprep.subr.mxu0 0.0
  %1462 = vmatpush1.msra.mxu0 0.0
  %1463 = vmatprep.subr.mxu0 0.0
  %1464 = vmatpush1.msra.mxu0 0.0
  %1465 = vmatprep.subr.mxu0 0.0
  %1466 = vmatpush1.msra.mxu0 0.0
  %1467 = vmatprep.subr.mxu0 0.0
  %1468 = vmatpush1.msra.mxu0 0.0
  %1469 = vmatprep.subr.mxu0 0.0
  %1470 = vmatpush1.msra.mxu0 0.0
  %1471 = vmatprep.subr.mxu0 0.0
  %1472 = vmatpush1.msra.mxu0 0.0
  %1473 = vmatprep.subr.mxu0 0.0
  %1474 = vmatpush1.msra.mxu0 0.0
  %1475 = vmatprep.mubr.f32.mxu0 0.0
  %1476 = vmatmul.mubr.f32.gmra.mrb[0].mxu0 %v1406
  %v1477 = vpop.f32.mrb[0].mxu0
  %v1478 = vadd.f32 0.0, %v1477
  %v1479 = vpop.f32.mrb[0].mxu0
  %1480 = vmatprep.mubr.f32.mxu0 0.0
  %1481 = vmatmul.mubr.f32.gmra.mrb[0].mxu0 %v1409
  %v1482 = vpop.f32.mrb[0].mxu0
  %v1483 = vadd.f32 0.0, %v1482
  %v1484 = vpop.f32.mrb[0].mxu0
  %1485 = vdwg.mxu0
  %v1487 = vsel %vm363, %v1478, 0
  %v1490 = vsel %vm363, %v1483, 0
  %1492 = vmatprep.subr.mxu0 0.0
  %1493 = vmatpush1.msra.mxu0 %v37
  %1494 = vmatprep.subr.mxu0 0.0
  %1495 = vmatpush1.msra.mxu0 0.0
  %1496 = vmatprep.subr.mxu0 0.0
  %1497 = vmatpush1.msra.mxu0 0.0
  %1498 = vmatprep.subr.mxu0 0.0
  %1499 = vmatpush1.msra.mxu0 0.0
  %1500 = vmatprep.subr.mxu0 0.0
  %1501 = vmatpush1.msra.mxu0 0.0
  %1502 = vmatprep.subr.mxu0 0.0
  %1503 = vmatpush1.msra.mxu0 0.0
  %1504 = vmatprep.subr.mxu0 0.0
  %1505 = vmatpush1.msra.mxu0 0.0
  %1506 = vmatprep.subr.mxu0 0.0
  %1507 = vmatpush1.msra.mxu0 0.0
  %1508 = vmatprep.subr.mxu0 0.0
  %1509 = vmatpush1.msra.mxu0 0.0
  %1510 = vmatprep.subr.mxu0 0.0
  %1511 = vmatpush1.msra.mxu0 0.0
  %1512 = vmatprep.subr.mxu0 0.0
  %1513 = vmatpush1.msra.mxu0 0.0
  %1514 = vmatprep.subr.mxu0 0.0
  %1515 = vmatpush1.msra.mxu0 0.0
  %1516 = vmatprep.subr.mxu0 0.0
  %1517 = vmatpush1.msra.mxu0 0.0
  %1518 = vmatprep.subr.mxu0 0.0
  %1519 = vmatpush1.msra.mxu0 0.0
  %1520 = vmatprep.subr.mxu0 0.0
  %1521 = vmatpush1.msra.mxu0 0.0
  %1522 = vmatprep.subr.mxu0 0.0
  %1523 = vmatpush1.msra.mxu0 0.0
  %1524 = vmatprep.subr.mxu0 0.0
  %1525 = vmatpush1.msra.mxu0 0.0
  %1526 = vmatprep.subr.mxu0 0.0
  %1527 = vmatpush1.msra.mxu0 0.0
  %1528 = vmatprep.subr.mxu0 0.0
  %1529 = vmatpush1.msra.mxu0 0.0
  %1530 = vmatprep.subr.mxu0 0.0
  %1531 = vmatpush1.msra.mxu0 0.0
  %1532 = vmatprep.subr.mxu0 0.0
  %1533 = vmatpush1.msra.mxu0 0.0
  %1534 = vmatprep.subr.mxu0 0.0
  %1535 = vmatpush1.msra.mxu0 0.0
  %1536 = vmatprep.subr.mxu0 0.0
  %1537 = vmatpush1.msra.mxu0 0.0
  %1538 = vmatprep.subr.mxu0 0.0
  %1539 = vmatpush1.msra.mxu0 0.0
  %1540 = vmatprep.subr.mxu0 0.0
  %1541 = vmatpush1.msra.mxu0 0.0
  %1542 = vmatprep.subr.mxu0 0.0
  %1543 = vmatpush1.msra.mxu0 0.0
  %1544 = vmatprep.subr.mxu0 0.0
  %1545 = vmatpush1.msra.mxu0 0.0
  %1546 = vmatprep.subr.mxu0 0.0
  %1547 = vmatpush1.msra.mxu0 0.0
  %1548 = vmatprep.subr.mxu0 0.0
  %1549 = vmatpush1.msra.mxu0 0.0
  %1550 = vmatprep.subr.mxu0 0.0
  %1551 = vmatpush1.msra.mxu0 0.0
  %1552 = vmatprep.subr.mxu0 0.0
  %1553 = vmatpush1.msra.mxu0 0.0
  %1554 = vmatprep.subr.mxu0 0.0
  %1555 = vmatpush1.msra.mxu0 0.0
  %1556 = vmatprep.mubr.f32.mxu0 0.0
  %1557 = vmatmul.mubr.f32.gmra.mrb[0].mxu0 %v1487
  %v1558 = vpop.f32.mrb[0].mxu0
  %v1559 = vadd.f32 0.0, %v1558
  %v1560 = vpop.f32.mrb[0].mxu0
  %1561 = vmatprep.mubr.f32.mxu0 0.0
  %1562 = vmatmul.mubr.f32.gmra.mrb[0].mxu0 %v1490
  %v1563 = vpop.f32.mrb[0].mxu0
  %v1564 = vadd.f32 0.0, %v1563
  %v1565 = vpop.f32.mrb[0].mxu0
  %1566 = vdwg.mxu0
  %v1568 = vsel %vm363, %v1341, 0
  %v1571 = vsel %vm363, %v1346, 0
  %1573 = vmatprep.subr.mxu0 0.0
  %1574 = vmatpush1.msra.mxu0 %v35
  %1575 = vmatprep.subr.mxu0 0.0
  %1576 = vmatpush1.msra.mxu0 0.0
  %1577 = vmatprep.subr.mxu0 0.0
  %1578 = vmatpush1.msra.mxu0 0.0
  %1579 = vmatprep.subr.mxu0 0.0
  %1580 = vmatpush1.msra.mxu0 0.0
  %1581 = vmatprep.subr.mxu0 0.0
  %1582 = vmatpush1.msra.mxu0 0.0
  %1583 = vmatprep.subr.mxu0 0.0
  %1584 = vmatpush1.msra.mxu0 0.0
  %1585 = vmatprep.subr.mxu0 0.0
  %1586 = vmatpush1.msra.mxu0 0.0
  %1587 = vmatprep.subr.mxu0 0.0
  %1588 = vmatpush1.msra.mxu0 0.0
  %1589 = vmatprep.subr.mxu0 0.0
  %1590 = vmatpush1.msra.mxu0 0.0
  %1591 = vmatprep.subr.mxu0 0.0
  %1592 = vmatpush1.msra.mxu0 0.0
  %1593 = vmatprep.subr.mxu0 0.0
  %1594 = vmatpush1.msra.mxu0 0.0
  %1595 = vmatprep.subr.mxu0 0.0
  %1596 = vmatpush1.msra.mxu0 0.0
  %1597 = vmatprep.subr.mxu0 0.0
  %1598 = vmatpush1.msra.mxu0 0.0
  %1599 = vmatprep.subr.mxu0 0.0
  %1600 = vmatpush1.msra.mxu0 0.0
  %1601 = vmatprep.subr.mxu0 0.0
  %1602 = vmatpush1.msra.mxu0 0.0
  %1603 = vmatprep.subr.mxu0 0.0
  %1604 = vmatpush1.msra.mxu0 0.0
  %1605 = vmatprep.subr.mxu0 0.0
  %1606 = vmatpush1.msra.mxu0 0.0
  %1607 = vmatprep.subr.mxu0 0.0
  %1608 = vmatpush1.msra.mxu0 0.0
  %1609 = vmatprep.subr.mxu0 0.0
  %1610 = vmatpush1.msra.mxu0 0.0
  %1611 = vmatprep.subr.mxu0 0.0
  %1612 = vmatpush1.msra.mxu0 0.0
  %1613 = vmatprep.subr.mxu0 0.0
  %1614 = vmatpush1.msra.mxu0 0.0
  %1615 = vmatprep.subr.mxu0 0.0
  %1616 = vmatpush1.msra.mxu0 0.0
  %1617 = vmatprep.subr.mxu0 0.0
  %1618 = vmatpush1.msra.mxu0 0.0
  %1619 = vmatprep.subr.mxu0 0.0
  %1620 = vmatpush1.msra.mxu0 0.0
  %1621 = vmatprep.subr.mxu0 0.0
  %1622 = vmatpush1.msra.mxu0 0.0
  %1623 = vmatprep.subr.mxu0 0.0
  %1624 = vmatpush1.msra.mxu0 0.0
  %1625 = vmatprep.subr.mxu0 0.0
  %1626 = vmatpush1.msra.mxu0 0.0
  %1627 = vmatprep.subr.mxu0 0.0
  %1628 = vmatpush1.msra.mxu0 0.0
  %1629 = vmatprep.subr.mxu0 0.0
  %1630 = vmatpush1.msra.mxu0 0.0
  %1631 = vmatprep.subr.mxu0 0.0
  %1632 = vmatpush1.msra.mxu0 0.0
  %1633 = vmatprep.subr.mxu0 0.0
  %1634 = vmatpush1.msra.mxu0 0.0
  %1635 = vmatprep.subr.mxu0 0.0
  %1636 = vmatpush1.msra.mxu0 0.0
  %1637 = vmatprep.mubr.f32.mxu0 0.0
  %1638 = vmatmul.mubr.f32.gmra.mrb[0].mxu0 %v1568
  %v1639 = vpop.f32.mrb[0].mxu0
  %v1640 = vadd.f32 %v1559, %v1639
  %v1641 = vpop.f32.mrb[0].mxu0
  %1642 = vmatprep.mubr.f32.mxu0 0.0
  %1643 = vmatmul.mubr.f32.gmra.mrb[0].mxu0 %v1571
  %v1644 = vpop.f32.mrb[0].mxu0
  %v1645 = vadd.f32 %v1564, %v1644
  %v1646 = vpop.f32.mrb[0].mxu0
  %1647 = vdwg.mxu0
  %1648 = vset.pattern.permute.xlu0 2
  %1649 = vperm.xlu0 %1648, %v1207
  %v1650 = vpop.permute.xlu0 %1649
  %1652 = vset.pattern.permute.xlu0 2
  %1653 = vperm.xlu0 %1652, %v1208
  %v1654 = vpop.permute.xlu0 %1653
  %v1656 = vmul.f32 %v29, %v1650
  %v1657 = vmul.f32 %v30, %v1654
  %1658 = vset.pattern.permute.xlu0 6
  %1659 = vperm.xlu0 %1658, %v339
  %v1660 = vpop.permute.xlu0 %1659
  %1662 = vset.pattern.permute.xlu0 6
  %1663 = vperm.xlu0 %1662, %v344
  %v1664 = vpop.permute.xlu0 %1663
  %v1666 = vadd.f32 %v1660, %v1656
  %v1667 = vadd.f32 %v1664, %v1657
  %v1668 = vadd.f32 %v685, %v1195
  %v1669 = vadd.f32 %v690, %v1196
  %v1670 = vadd.f32 %v1668, %v1666
  %v1671 = vadd.f32 %v1669, %v1667
  %v1672 = vmul.f32 %v1670, 0.35355338
  %v1673 = vmul.f32 %v1671, 0.35355338
  %v1674 = vadd.f32 %v1672, %v32
  %v1675 = vadd.f32 %v1673, %v33
  %v1676 = vsel %vm1239, %v1674, -inf
  %1677 = vmax.xlane.f32.xlu0 %v1676
  %v1678 = vpop.xlane.xlu0 %1677
  %v1679 = vsel %vm1239, %v1675, -inf
  %1680 = vmax.xlane.f32.xlu0 %v1679
  %v1681 = vpop.xlane.xlu0 %1680
  %v1682 = vsub.f32 %v1674, %v1678
  %v1683 = vsub.f32 %v1675, %v1681
  %v1684 = vmul.f32 %v1682, 1.442695
  %v1685 = vpow.pop %v1684
  %v1686 = vmul.f32 %v1683, 1.442695
  %v1687 = vpow.pop %v1686
  %v1688 = vsel %vm1239, %v1685, 0.0
  %1689 = vadd.xlane.f32.xlu0 %v1688
  %v1690 = vpop.xlane.xlu0 %1689
  %v1691 = vsel %vm1239, %v1687, 0.0
  %1692 = vadd.xlane.f32.xlu0 %v1691
  %v1693 = vpop.xlane.xlu0 %1692
  %v1694 = vrcp.pop %v1690
  %v1695 = vmul.f32 %v1685, %v1694
  %v1696 = vrcp.pop %v1693
  %v1697 = vmul.f32 %v1687, %v1696
  %1698 = vrot.lane.b32.xlu0 %v232, 48
  %v1699 = vpop.permute.xlu0 %1698
  %1700 = vrot.lane.b32.xlu0 %v237, 48
  %v1701 = vpop.permute.xlu0 %1700
  %v1705 = vsel %vm1239, %v1695, 0
  %v1708 = vsel %vm1239, %v1697, 0
  %1710 = vmatprep.subr.mxu0 0.0
  %1711 = vmatpush1.msra.mxu0 %v1699
  %1712 = vmatprep.subr.mxu0 0.0
  %1713 = vmatpush1.msra.mxu0 %v1701
  %1714 = vmatprep.subr.mxu0 0.0
  %1715 = vmatpush1.msra.mxu0 0.0
  %1716 = vmatprep.subr.mxu0 0.0
  %1717 = vmatpush1.msra.mxu0 0.0
  %1718 = vmatprep.subr.mxu0 0.0
  %1719 = vmatpush1.msra.mxu0 0.0
  %1720 = vmatprep.subr.mxu0 0.0
  %1721 = vmatpush1.msra.mxu0 0.0
  %1722 = vmatprep.subr.mxu0 0.0
  %1723 = vmatpush1.msra.mxu0 0.0
  %1724 = vmatprep.subr.mxu0 0.0
  %1725 = vmatpush1.msra.mxu0 0.0
  %1726 = vmatprep.subr.mxu0 0.0
  %1727 = vmatpush1.msra.mxu0 0.0
  %1728 = vmatprep.subr.mxu0 0.0
  %1729 = vmatpush1.msra.mxu0 0.0
  %1730 = vmatprep.subr.mxu0 0.0
  %1731 = vmatpush1.msra.mxu0 0.0
  %1732 = vmatprep.subr.mxu0 0.0
  %1733 = vmatpush1.msra.mxu0 0.0
  %1734 = vmatprep.subr.mxu0 0.0
  %1735 = vmatpush1.msra.mxu0 0.0
  %1736 = vmatprep.subr.mxu0 0.0
  %1737 = vmatpush1.msra.mxu0 0.0
  %1738 = vmatprep.subr.mxu0 0.0
  %1739 = vmatpush1.msra.mxu0 0.0
  %1740 = vmatprep.subr.mxu0 0.0
  %1741 = vmatpush1.msra.mxu0 0.0
  %1742 = vmatprep.subr.mxu0 0.0
  %1743 = vmatpush1.msra.mxu0 0.0
  %1744 = vmatprep.subr.mxu0 0.0
  %1745 = vmatpush1.msra.mxu0 0.0
  %1746 = vmatprep.subr.mxu0 0.0
  %1747 = vmatpush1.msra.mxu0 0.0
  %1748 = vmatprep.subr.mxu0 0.0
  %1749 = vmatpush1.msra.mxu0 0.0
  %1750 = vmatprep.subr.mxu0 0.0
  %1751 = vmatpush1.msra.mxu0 0.0
  %1752 = vmatprep.subr.mxu0 0.0
  %1753 = vmatpush1.msra.mxu0 0.0
  %1754 = vmatprep.subr.mxu0 0.0
  %1755 = vmatpush1.msra.mxu0 0.0
  %1756 = vmatprep.subr.mxu0 0.0
  %1757 = vmatpush1.msra.mxu0 0.0
  %1758 = vmatprep.subr.mxu0 0.0
  %1759 = vmatpush1.msra.mxu0 0.0
  %1760 = vmatprep.subr.mxu0 0.0
  %1761 = vmatpush1.msra.mxu0 0.0
  %1762 = vmatprep.subr.mxu0 0.0
  %1763 = vmatpush1.msra.mxu0 0.0
  %1764 = vmatprep.subr.mxu0 0.0
  %1765 = vmatpush1.msra.mxu0 0.0
  %1766 = vmatprep.subr.mxu0 0.0
  %1767 = vmatpush1.msra.mxu0 0.0
  %1768 = vmatprep.subr.mxu0 0.0
  %1769 = vmatpush1.msra.mxu0 0.0
  %1770 = vmatprep.subr.mxu0 0.0
  %1771 = vmatpush1.msra.mxu0 0.0
  %1772 = vmatprep.subr.mxu0 0.0
  %1773 = vmatpush1.msra.mxu0 0.0
  %1774 = vmatprep.mubr.f32.mxu0 0.0
  %1775 = vmatmul.mubr.f32.gmra.mrb[0].mxu0 %v1705
  %v1776 = vpop.f32.mrb[0].mxu0
  %v1777 = vadd.f32 0.0, %v1776
  %v1778 = vpop.f32.mrb[0].mxu0
  %1779 = vmatprep.mubr.f32.mxu0 0.0
  %1780 = vmatmul.mubr.f32.gmra.mrb[0].mxu0 %v1708
  %v1781 = vpop.f32.mrb[0].mxu0
  %v1782 = vadd.f32 0.0, %v1781
  %v1783 = vpop.f32.mrb[0].mxu0
  %1784 = vdwg.mxu0
  %v1786 = vsel %vm363, %v1777, 0
  %v1789 = vsel %vm363, %v1782, 0
  %1791 = vmatprep.subr.mxu0 0.0
  %1792 = vmatpush1.msra.mxu0 %v39
  %1793 = vmatprep.subr.mxu0 0.0
  %1794 = vmatpush1.msra.mxu0 0.0
  %1795 = vmatprep.subr.mxu0 0.0
  %1796 = vmatpush1.msra.mxu0 0.0
  %1797 = vmatprep.subr.mxu0 0.0
  %1798 = vmatpush1.msra.mxu0 0.0
  %1799 = vmatprep.subr.mxu0 0.0
  %1800 = vmatpush1.msra.mxu0 0.0
  %1801 = vmatprep.subr.mxu0 0.0
  %1802 = vmatpush1.msra.mxu0 0.0
  %1803 = vmatprep.subr.mxu0 0.0
  %1804 = vmatpush1.msra.mxu0 0.0
  %1805 = vmatprep.subr.mxu0 0.0
  %1806 = vmatpush1.msra.mxu0 0.0
  %1807 = vmatprep.subr.mxu0 0.0
  %1808 = vmatpush1.msra.mxu0 0.0
  %1809 = vmatprep.subr.mxu0 0.0
  %1810 = vmatpush1.msra.mxu0 0.0
  %1811 = vmatprep.subr.mxu0 0.0
  %1812 = vmatpush1.msra.mxu0 0.0
  %1813 = vmatprep.subr.mxu0 0.0
  %1814 = vmatpush1.msra.mxu0 0.0
  %1815 = vmatprep.subr.mxu0 0.0
  %1816 = vmatpush1.msra.mxu0 0.0
  %1817 = vmatprep.subr.mxu0 0.0
  %1818 = vmatpush1.msra.mxu0 0.0
  %1819 = vmatprep.subr.mxu0 0.0
  %1820 = vmatpush1.msra.mxu0 0.0
  %1821 = vmatprep.subr.mxu0 0.0
  %1822 = vmatpush1.msra.mxu0 0.0
  %1823 = vmatprep.subr.mxu0 0.0
  %1824 = vmatpush1.msra.mxu0 0.0
  %1825 = vmatprep.subr.mxu0 0.0
  %1826 = vmatpush1.msra.mxu0 0.0
  %1827 = vmatprep.subr.mxu0 0.0
  %1828 = vmatpush1.msra.mxu0 0.0
  %1829 = vmatprep.subr.mxu0 0.0
  %1830 = vmatpush1.msra.mxu0 0.0
  %1831 = vmatprep.subr.mxu0 0.0
  %1832 = vmatpush1.msra.mxu0 0.0
  %1833 = vmatprep.subr.mxu0 0.0
  %1834 = vmatpush1.msra.mxu0 0.0
  %1835 = vmatprep.subr.mxu0 0.0
  %1836 = vmatpush1.msra.mxu0 0.0
  %1837 = vmatprep.subr.mxu0 0.0
  %1838 = vmatpush1.msra.mxu0 0.0
  %1839 = vmatprep.subr.mxu0 0.0
  %1840 = vmatpush1.msra.mxu0 0.0
  %1841 = vmatprep.subr.mxu0 0.0
  %1842 = vmatpush1.msra.mxu0 0.0
  %1843 = vmatprep.subr.mxu0 0.0
  %1844 = vmatpush1.msra.mxu0 0.0
  %1845 = vmatprep.subr.mxu0 0.0
  %1846 = vmatpush1.msra.mxu0 0.0
  %1847 = vmatprep.subr.mxu0 0.0
  %1848 = vmatpush1.msra.mxu0 0.0
  %1849 = vmatprep.subr.mxu0 0.0
  %1850 = vmatpush1.msra.mxu0 0.0
  %1851 = vmatprep.subr.mxu0 0.0
  %1852 = vmatpush1.msra.mxu0 0.0
  %1853 = vmatprep.subr.mxu0 0.0
  %1854 = vmatpush1.msra.mxu0 0.0
  %1855 = vmatprep.mubr.f32.mxu0 0.0
  %1856 = vmatmul.mubr.f32.gmra.mrb[0].mxu0 %v1786
  %v1857 = vpop.f32.mrb[0].mxu0
  %v1858 = vadd.f32 0.0, %v1857
  %v1859 = vpop.f32.mrb[0].mxu0
  %1860 = vmatprep.mubr.f32.mxu0 0.0
  %1861 = vmatmul.mubr.f32.gmra.mrb[0].mxu0 %v1789
  %v1862 = vpop.f32.mrb[0].mxu0
  %v1863 = vadd.f32 0.0, %v1862
  %v1864 = vpop.f32.mrb[0].mxu0
  %1865 = vdwg.mxu0
  %v1866 = vadd.f32 %v1640, %v1858
  %v1867 = vadd.f32 %v1645, %v1863
  %1868 = vset.pattern.permute.xlu0 3
  %1869 = vperm.xlu0 %1868, %v1207
  %v1870 = vpop.permute.xlu0 %1869
  %1872 = vset.pattern.permute.xlu0 3
  %1873 = vperm.xlu0 %1872, %v1208
  %v1874 = vpop.permute.xlu0 %1873
  %v1876 = vmul.f32 %v29, %v1870
  %v1877 = vmul.f32 %v30, %v1874
  %1878 = vset.pattern.permute.xlu0 7
  %1879 = vperm.xlu0 %1878, %v339
  %v1880 = vpop.permute.xlu0 %1879
  %1882 = vset.pattern.permute.xlu0 7
  %1883 = vperm.xlu0 %1882, %v344
  %v1884 = vpop.permute.xlu0 %1883
  %v1886 = vadd.f32 %v1880, %v1876
  %v1887 = vadd.f32 %v1884, %v1877
  %v1888 = vadd.f32 %v802, %v1197
  %v1889 = vadd.f32 %v807, %v1198
  %v1890 = vadd.f32 %v1888, %v1886
  %v1891 = vadd.f32 %v1889, %v1887
  %v1892 = vmul.f32 %v1890, 0.35355338
  %v1893 = vmul.f32 %v1891, 0.35355338
  %v1894 = vadd.f32 %v1892, %v32
  %v1895 = vadd.f32 %v1893, %v33
  %v1896 = vsel %vm1239, %v1894, -inf
  %1897 = vmax.xlane.f32.xlu0 %v1896
  %v1898 = vpop.xlane.xlu0 %1897
  %v1899 = vsel %vm1239, %v1895, -inf
  %1900 = vmax.xlane.f32.xlu0 %v1899
  %v1901 = vpop.xlane.xlu0 %1900
  %v1902 = vsub.f32 %v1894, %v1898
  %v1903 = vsub.f32 %v1895, %v1901
  %v1904 = vmul.f32 %v1902, 1.442695
  %v1905 = vpow.pop %v1904
  %v1906 = vmul.f32 %v1903, 1.442695
  %v1907 = vpow.pop %v1906
  %v1908 = vsel %vm1239, %v1905, 0.0
  %1909 = vadd.xlane.f32.xlu0 %v1908
  %v1910 = vpop.xlane.xlu0 %1909
  %v1911 = vsel %vm1239, %v1907, 0.0
  %1912 = vadd.xlane.f32.xlu0 %v1911
  %v1913 = vpop.xlane.xlu0 %1912
  %v1914 = vrcp.pop %v1910
  %v1915 = vmul.f32 %v1905, %v1914
  %v1916 = vrcp.pop %v1913
  %v1917 = vmul.f32 %v1907, %v1916
  %1918 = vrot.lane.b32.xlu0 %v232, 40
  %v1919 = vpop.permute.xlu0 %1918
  %1920 = vrot.lane.b32.xlu0 %v237, 40
  %v1921 = vpop.permute.xlu0 %1920
  %v1925 = vsel %vm1239, %v1915, 0
  %v1928 = vsel %vm1239, %v1917, 0
  %1930 = vmatprep.subr.mxu0 0.0
  %1931 = vmatpush1.msra.mxu0 %v1919
  %1932 = vmatprep.subr.mxu0 0.0
  %1933 = vmatpush1.msra.mxu0 %v1921
  %1934 = vmatprep.subr.mxu0 0.0
  %1935 = vmatpush1.msra.mxu0 0.0
  %1936 = vmatprep.subr.mxu0 0.0
  %1937 = vmatpush1.msra.mxu0 0.0
  %1938 = vmatprep.subr.mxu0 0.0
  %1939 = vmatpush1.msra.mxu0 0.0
  %1940 = vmatprep.subr.mxu0 0.0
  %1941 = vmatpush1.msra.mxu0 0.0
  %1942 = vmatprep.subr.mxu0 0.0
  %1943 = vmatpush1.msra.mxu0 0.0
  %1944 = vmatprep.subr.mxu0 0.0
  %1945 = vmatpush1.msra.mxu0 0.0
  %1946 = vmatprep.subr.mxu0 0.0
  %1947 = vmatpush1.msra.mxu0 0.0
  %1948 = vmatprep.subr.mxu0 0.0
  %1949 = vmatpush1.msra.mxu0 0.0
  %1950 = vmatprep.subr.mxu0 0.0
  %1951 = vmatpush1.msra.mxu0 0.0
  %1952 = vmatprep.subr.mxu0 0.0
  %1953 = vmatpush1.msra.mxu0 0.0
  %1954 = vmatprep.subr.mxu0 0.0
  %1955 = vmatpush1.msra.mxu0 0.0
  %1956 = vmatprep.subr.mxu0 0.0
  %1957 = vmatpush1.msra.mxu0 0.0
  %1958 = vmatprep.subr.mxu0 0.0
  %1959 = vmatpush1.msra.mxu0 0.0
  %1960 = vmatprep.subr.mxu0 0.0
  %1961 = vmatpush1.msra.mxu0 0.0
  %1962 = vmatprep.subr.mxu0 0.0
  %1963 = vmatpush1.msra.mxu0 0.0
  %1964 = vmatprep.subr.mxu0 0.0
  %1965 = vmatpush1.msra.mxu0 0.0
  %1966 = vmatprep.subr.mxu0 0.0
  %1967 = vmatpush1.msra.mxu0 0.0
  %1968 = vmatprep.subr.mxu0 0.0
  %1969 = vmatpush1.msra.mxu0 0.0
  %1970 = vmatprep.subr.mxu0 0.0
  %1971 = vmatpush1.msra.mxu0 0.0
  %1972 = vmatprep.subr.mxu0 0.0
  %1973 = vmatpush1.msra.mxu0 0.0
  %1974 = vmatprep.subr.mxu0 0.0
  %1975 = vmatpush1.msra.mxu0 0.0
  %1976 = vmatprep.subr.mxu0 0.0
  %1977 = vmatpush1.msra.mxu0 0.0
  %1978 = vmatprep.subr.mxu0 0.0
  %1979 = vmatpush1.msra.mxu0 0.0
  %1980 = vmatprep.subr.mxu0 0.0
  %1981 = vmatpush1.msra.mxu0 0.0
  %1982 = vmatprep.subr.mxu0 0.0
  %1983 = vmatpush1.msra.mxu0 0.0
  %1984 = vmatprep.subr.mxu0 0.0
  %1985 = vmatpush1.msra.mxu0 0.0
  %1986 = vmatprep.subr.mxu0 0.0
  %1987 = vmatpush1.msra.mxu0 0.0
  %1988 = vmatprep.subr.mxu0 0.0
  %1989 = vmatpush1.msra.mxu0 0.0
  %1990 = vmatprep.subr.mxu0 0.0
  %1991 = vmatpush1.msra.mxu0 0.0
  %1992 = vmatprep.subr.mxu0 0.0
  %1993 = vmatpush1.msra.mxu0 0.0
  %1994 = vmatprep.mubr.f32.mxu0 0.0
  %1995 = vmatmul.mubr.f32.gmra.mrb[0].mxu0 %v1925
  %v1996 = vpop.f32.mrb[0].mxu0
  %v1997 = vadd.f32 0.0, %v1996
  %v1998 = vpop.f32.mrb[0].mxu0
  %1999 = vmatprep.mubr.f32.mxu0 0.0
  %2000 = vmatmul.mubr.f32.gmra.mrb[0].mxu0 %v1928
  %v2001 = vpop.f32.mrb[0].mxu0
  %v2002 = vadd.f32 0.0, %v2001
  %v2003 = vpop.f32.mrb[0].mxu0
  %2004 = vdwg.mxu0
  %v2006 = vsel %vm363, %v1997, 0
  %v2009 = vsel %vm363, %v2002, 0
  %2011 = vmatprep.subr.mxu0 0.0
  %2012 = vmatpush1.msra.mxu0 %v41
  %2013 = vmatprep.subr.mxu0 0.0
  %2014 = vmatpush1.msra.mxu0 0.0
  %2015 = vmatprep.subr.mxu0 0.0
  %2016 = vmatpush1.msra.mxu0 0.0
  %2017 = vmatprep.subr.mxu0 0.0
  %2018 = vmatpush1.msra.mxu0 0.0
  %2019 = vmatprep.subr.mxu0 0.0
  %2020 = vmatpush1.msra.mxu0 0.0
  %2021 = vmatprep.subr.mxu0 0.0
  %2022 = vmatpush1.msra.mxu0 0.0
  %2023 = vmatprep.subr.mxu0 0.0
  %2024 = vmatpush1.msra.mxu0 0.0
  %2025 = vmatprep.subr.mxu0 0.0
  %2026 = vmatpush1.msra.mxu0 0.0
  %2027 = vmatprep.subr.mxu0 0.0
  %2028 = vmatpush1.msra.mxu0 0.0
  %2029 = vmatprep.subr.mxu0 0.0
  %2030 = vmatpush1.msra.mxu0 0.0
  %2031 = vmatprep.subr.mxu0 0.0
  %2032 = vmatpush1.msra.mxu0 0.0
  %2033 = vmatprep.subr.mxu0 0.0
  %2034 = vmatpush1.msra.mxu0 0.0
  %2035 = vmatprep.subr.mxu0 0.0
  %2036 = vmatpush1.msra.mxu0 0.0
  %2037 = vmatprep.subr.mxu0 0.0
  %2038 = vmatpush1.msra.mxu0 0.0
  %2039 = vmatprep.subr.mxu0 0.0
  %2040 = vmatpush1.msra.mxu0 0.0
  %2041 = vmatprep.subr.mxu0 0.0
  %2042 = vmatpush1.msra.mxu0 0.0
  %2043 = vmatprep.subr.mxu0 0.0
  %2044 = vmatpush1.msra.mxu0 0.0
  %2045 = vmatprep.subr.mxu0 0.0
  %2046 = vmatpush1.msra.mxu0 0.0
  %2047 = vmatprep.subr.mxu0 0.0
  %2048 = vmatpush1.msra.mxu0 0.0
  %2049 = vmatprep.subr.mxu0 0.0
  %2050 = vmatpush1.msra.mxu0 0.0
  %2051 = vmatprep.subr.mxu0 0.0
  %2052 = vmatpush1.msra.mxu0 0.0
  %2053 = vmatprep.subr.mxu0 0.0
  %2054 = vmatpush1.msra.mxu0 0.0
  %2055 = vmatprep.subr.mxu0 0.0
  %2056 = vmatpush1.msra.mxu0 0.0
  %2057 = vmatprep.subr.mxu0 0.0
  %2058 = vmatpush1.msra.mxu0 0.0
  %2059 = vmatprep.subr.mxu0 0.0
  %2060 = vmatpush1.msra.mxu0 0.0
  %2061 = vmatprep.subr.mxu0 0.0
  %2062 = vmatpush1.msra.mxu0 0.0
  %2063 = vmatprep.subr.mxu0 0.0
  %2064 = vmatpush1.msra.mxu0 0.0
  %2065 = vmatprep.subr.mxu0 0.0
  %2066 = vmatpush1.msra.mxu0 0.0
  %2067 = vmatprep.subr.mxu0 0.0
  %2068 = vmatpush1.msra.mxu0 0.0
  %2069 = vmatprep.subr.mxu0 0.0
  %2070 = vmatpush1.msra.mxu0 0.0
  %2071 = vmatprep.subr.mxu0 0.0
  %2072 = vmatpush1.msra.mxu0 0.0
  %2073 = vmatprep.subr.mxu0 0.0
  %2074 = vmatpush1.msra.mxu0 0.0
  %2075 = vmatprep.mubr.f32.mxu0 0.0
  %2076 = vmatmul.mubr.f32.gmra.mrb[0].mxu0 %v2006
  %v2077 = vpop.f32.mrb[0].mxu0
  %v2078 = vadd.f32 0.0, %v2077
  %v2079 = vpop.f32.mrb[0].mxu0
  %2080 = vmatprep.mubr.f32.mxu0 0.0
  %2081 = vmatmul.mubr.f32.gmra.mrb[0].mxu0 %v2009
  %v2082 = vpop.f32.mrb[0].mxu0
  %v2083 = vadd.f32 0.0, %v2082
  %v2084 = vpop.f32.mrb[0].mxu0
  %2085 = vdwg.mxu0
  %v2086 = vadd.f32 %v1866, %v2078
  %v2087 = vadd.f32 %v1867, %v2083
  %v2088 = vadd.f32 %v2086, %v25
  %v2089 = vadd.f32 %v2087, %v26
  %v2090 = vsel %vm66, %v2088, 0.0
  %2091 = vadd.xlane.f32.xlu0 %v2090
  %v2092 = vpop.xlane.xlu0 %2091
  %v2093 = vsel %vm66, %v2089, 0.0
  %2094 = vadd.xlane.f32.xlu0 %v2093
  %v2095 = vpop.xlane.xlu0 %2094
  %v2096 = vrcp.pop 32.0
  %v2097 = vmul.f32 %v2092, %v2096
  %v2098 = vmul.f32 %v2095, %v2096
  %v2099 = vsub.f32 %v2088, %v2097
  %v2100 = vsub.f32 %v2089, %v2098
  %v2101 = vmul.f32 %v2099, %v2099
  %v2102 = vmul.f32 %v2100, %v2100
  %v2103 = vsel %vm66, %v2101, 0.0
  %2104 = vadd.xlane.f32.xlu0 %v2103
  %v2105 = vpop.xlane.xlu0 %2104
  %v2106 = vsel %vm66, %v2102, 0.0
  %2107 = vadd.xlane.f32.xlu0 %v2106
  %v2108 = vpop.xlane.xlu0 %2107
  %v2109 = vmul.f32 %v2105, %v2096
  %v2110 = vmul.f32 %v2108, %v2096
  %v2111 = vadd.f32 %v2109, 1e-05
  %v2112 = vadd.f32 %v2110, 1e-05
  %v2113 = vrsqrt.pop %v2111
  %v2114 = vrsqrt.pop %v2112
  %v2115 = vmul.f32 %v2099, %v2113
  %v2116 = vmul.f32 %v2100, %v2114
  %v2117 = vlaneseq
  %v2118 = vshrl.u32 %v2117, 7
  %v2119 = vsub.s32 0, %v2118
  %v2120 = vrot.slane %v42, %v2119
  %v2121 = vmul.f32 %v2115, %v2120
  %v2122 = vmul.f32 %v2116, %v2120
  %v2123 = vlaneseq
  %v2124 = vshrl.u32 %v2123, 7
  %v2125 = vsub.s32 0, %v2124
  %v2126 = vrot.slane %v43, %v2125
  %v2127 = vadd.f32 %v2121, %v2126
  %v2128 = vadd.f32 %v2122, %v2126
  %v2129 = vlaneseq
  %v2130 = vshrl.u32 %v2129, 7
  %v2131 = vsub.s32 0, %v2130
  %v2132 = vrot.slane %v44, %v2131
  %2137 = vrot.lane.b32.xlu0 %v35, 96
  %v2138 = vpop.permute.xlu0 %2137
  %2139 = vrot.lane.b32.xlu0 %v37, 96
  %v2140 = vpop.permute.xlu0 %2139
  %2141 = vrot.lane.b32.xlu0 %v39, 96
  %v2142 = vpop.permute.xlu0 %2141
  %2143 = vrot.lane.b32.xlu0 %v41, 96
  %v2144 = vpop.permute.xlu0 %2143
  %v2150 = vsel %vm66, %v2127, 0
  %v2153 = vsel %vm66, %v2128, 0
  %2155 = vmatprep.subr.mxu0 0.0
  %2156 = vmatpush1.msra.mxu0 %v2138
  %2157 = vmatprep.subr.mxu0 0.0
  %2158 = vmatpush1.msra.mxu0 %v2140
  %2159 = vmatprep.subr.mxu0 0.0
  %2160 = vmatpush1.msra.mxu0 %v2142
  %2161 = vmatprep.subr.mxu0 0.0
  %2162 = vmatpush1.msra.mxu0 %v2144
  %2163 = vmatprep.subr.mxu0 0.0
  %2164 = vmatpush1.msra.mxu0 0.0
  %2165 = vmatprep.subr.mxu0 0.0
  %2166 = vmatpush1.msra.mxu0 0.0
  %2167 = vmatprep.subr.mxu0 0.0
  %2168 = vmatpush1.msra.mxu0 0.0
  %2169 = vmatprep.subr.mxu0 0.0
  %2170 = vmatpush1.msra.mxu0 0.0
  %2171 = vmatprep.subr.mxu0 0.0
  %2172 = vmatpush1.msra.mxu0 0.0
  %2173 = vmatprep.subr.mxu0 0.0
  %2174 = vmatpush1.msra.mxu0 0.0
  %2175 = vmatprep.subr.mxu0 0.0
  %2176 = vmatpush1.msra.mxu0 0.0
  %2177 = vmatprep.subr.mxu0 0.0
  %2178 = vmatpush1.msra.mxu0 0.0
  %2179 = vmatprep.subr.mxu0 0.0
  %2180 = vmatpush1.msra.mxu0 0.0
  %2181 = vmatprep.subr.mxu0 0.0
  %2182 = vmatpush1.msra.mxu0 0.0
  %2183 = vmatprep.subr.mxu0 0.0
  %2184 = vmatpush1.msra.mxu0 0.0
  %2185 = vmatprep.subr.mxu0 0.0
  %2186 = vmatpush1.msra.mxu0 0.0
  %2187 = vmatprep.subr.mxu0 0.0
  %2188 = vmatpush1.msra.mxu0 0.0
  %2189 = vmatprep.subr.mxu0 0.0
  %2190 = vmatpush1.msra.mxu0 0.0
  %2191 = vmatprep.subr.mxu0 0.0
  %2192 = vmatpush1.msra.mxu0 0.0
  %2193 = vmatprep.subr.mxu0 0.0
  %2194 = vmatpush1.msra.mxu0 0.0
  %2195 = vmatprep.subr.mxu0 0.0
  %2196 = vmatpush1.msra.mxu0 0.0
  %2197 = vmatprep.subr.mxu0 0.0
  %2198 = vmatpush1.msra.mxu0 0.0
  %2199 = vmatprep.subr.mxu0 0.0
  %2200 = vmatpush1.msra.mxu0 0.0
  %2201 = vmatprep.subr.mxu0 0.0
  %2202 = vmatpush1.msra.mxu0 0.0
  %2203 = vmatprep.subr.mxu0 0.0
  %2204 = vmatpush1.msra.mxu0 0.0
  %2205 = vmatprep.subr.mxu0 0.0
  %2206 = vmatpush1.msra.mxu0 0.0
  %2207 = vmatprep.subr.mxu0 0.0
  %2208 = vmatpush1.msra.mxu0 0.0
  %2209 = vmatprep.subr.mxu0 0.0
  %2210 = vmatpush1.msra.mxu0 0.0
  %2211 = vmatprep.subr.mxu0 0.0
  %2212 = vmatpush1.msra.mxu0 0.0
  %2213 = vmatprep.subr.mxu0 0.0
  %2214 = vmatpush1.msra.mxu0 0.0
  %2215 = vmatprep.subr.mxu0 0.0
  %2216 = vmatpush1.msra.mxu0 0.0
  %2217 = vmatprep.subr.mxu0 0.0
  %2218 = vmatpush1.msra.mxu0 0.0
  %2219 = vmatprep.mubr.f32.mxu0 0.0
  %2220 = vmatmul.mubr.f32.gmra.mrb[0].mxu0 %v2150
  %v2221 = vpop.f32.mrb[0].mxu0
  %v2222 = vadd.f32 %v2132, %v2221
  %v2223 = vpop.f32.mrb[0].mxu0
  %2224 = vmatprep.mubr.f32.mxu0 0.0
  %2225 = vmatmul.mubr.f32.gmra.mrb[0].mxu0 %v2153
  %v2226 = vpop.f32.mrb[0].mxu0
  %v2227 = vadd.f32 %v2132, %v2226
  %v2228 = vpop.f32.mrb[0].mxu0
  %2229 = vdwg.mxu0
  %v2230 = vmax.f32 %v2222, 0.0
  %v2231 = vmax.f32 %v2227, 0.0
  %v2232 = vadd.f32 %v2230, %v2127
  %v2233 = vadd.f32 %v2231, %v2128
  %v2234 = vsel %vm66, %v2232, 0.0
  %2235 = vadd.xlane.f32.xlu0 %v2234
  %v2236 = vpop.xlane.xlu0 %2235
  %v2237 = vsel %vm66, %v2233, 0.0
  %2238 = vadd.xlane.f32.xlu0 %v2237
  %v2239 = vpop.xlane.xlu0 %2238
  %v2240 = vmul.f32 %v2236, %v2096
  %v2241 = vmul.f32 %v2239, %v2096
  %v2242 = vsub.f32 %v2232, %v2240
  %v2243 = vsub.f32 %v2233, %v2241
  %v2244 = vmul.f32 %v2242, %v2242
  %v2245 = vmul.f32 %v2243, %v2243
  %v2246 = vsel %vm66, %v2244, 0.0
  %2247 = vadd.xlane.f32.xlu0 %v2246
  %v2248 = vpop.xlane.xlu0 %2247
  %v2249 = vsel %vm66, %v2245, 0.0
  %2250 = vadd.xlane.f32.xlu0 %v2249
  %v2251 = vpop.xlane.xlu0 %2250
  %v2252 = vmul.f32 %v2248, %v2096
  %v2253 = vmul.f32 %v2251, %v2096
  %v2254 = vadd.f32 %v2252, 1e-05
  %v2255 = vadd.f32 %v2253, 1e-05
  %v2256 = vrsqrt.pop %v2254
  %v2257 = vrsqrt.pop %v2255
  %v2258 = vmul.f32 %v2242, %v2256
  %v2259 = vmul.f32 %v2243, %v2257
  %v2260 = vmul.f32 %v2258, %v2120
  %v2261 = vmul.f32 %v2259, %v2120
  %v2262 = vadd.f32 %v2260, %v2126
  %v2263 = vadd.f32 %v2261, %v2126
  %v2265 = vrot.slane %v2262, 4
  %vm2267 = vcmask 1043456
  %v2268 = vsel %vm2267, %v2265, %v2263
  %2269 = vst.msk [vmem:[%s6] sm:$0xff] %vm66, %v2268
  %s2270 = scalar_lea.vmem %s3, 16
  %v2271 = vld [vmem:[%s2270] sm:$0xff]
  %v2272 = vld [vmem:[%s2270 + $0x8] sm:$0x7]
  %v2273 = vsel %vm66, %v2262, 0
  %v2276 = vsel %vm66, %v2263, 0
  %2278 = vmatprep.subr.mxu0 0.0
  %2279 = vmatpush1.msra.mxu0 %v34
  %2280 = vmatprep.subr.mxu0 0.0
  %2281 = vmatpush1.msra.mxu0 %v36
  %2282 = vmatprep.subr.mxu0 0.0
  %2283 = vmatpush1.msra.mxu0 %v38
  %2284 = vmatprep.subr.mxu0 0.0
  %2285 = vmatpush1.msra.mxu0 %v40
  %2286 = vmatprep.subr.mxu0 0.0
  %2287 = vmatpush1.msra.mxu0 0.0
  %2288 = vmatprep.subr.mxu0 0.0
  %2289 = vmatpush1.msra.mxu0 0.0
  %2290 = vmatprep.subr.mxu0 0.0
  %2291 = vmatpush1.msra.mxu0 0.0
  %2292 = vmatprep.subr.mxu0 0.0
  %2293 = vmatpush1.msra.mxu0 0.0
  %2294 = vmatprep.subr.mxu0 0.0
  %2295 = vmatpush1.msra.mxu0 0.0
  %2296 = vmatprep.subr.mxu0 0.0
  %2297 = vmatpush1.msra.mxu0 0.0
  %2298 = vmatprep.subr.mxu0 0.0
  %2299 = vmatpush1.msra.mxu0 0.0
  %2300 = vmatprep.subr.mxu0 0.0
  %2301 = vmatpush1.msra.mxu0 0.0
  %2302 = vmatprep.subr.mxu0 0.0
  %2303 = vmatpush1.msra.mxu0 0.0
  %2304 = vmatprep.subr.mxu0 0.0
  %2305 = vmatpush1.msra.mxu0 0.0
  %2306 = vmatprep.subr.mxu0 0.0
  %2307 = vmatpush1.msra.mxu0 0.0
  %2308 = vmatprep.subr.mxu0 0.0
  %2309 = vmatpush1.msra.mxu0 0.0
  %2310 = vmatprep.subr.mxu0 0.0
  %2311 = vmatpush1.msra.mxu0 0.0
  %2312 = vmatprep.subr.mxu0 0.0
  %2313 = vmatpush1.msra.mxu0 0.0
  %2314 = vmatprep.subr.mxu0 0.0
  %2315 = vmatpush1.msra.mxu0 0.0
  %2316 = vmatprep.subr.mxu0 0.0
  %2317 = vmatpush1.msra.mxu0 0.0
  %2318 = vmatprep.subr.mxu0 0.0
  %2319 = vmatpush1.msra.mxu0 0.0
  %2320 = vmatprep.subr.mxu0 0.0
  %2321 = vmatpush1.msra.mxu0 0.0
  %2322 = vmatprep.subr.mxu0 0.0
  %2323 = vmatpush1.msra.mxu0 0.0
  %2324 = vmatprep.subr.mxu0 0.0
  %2325 = vmatpush1.msra.mxu0 0.0
  %2326 = vmatprep.subr.mxu0 0.0
  %2327 = vmatpush1.msra.mxu0 0.0
  %2328 = vmatprep.subr.mxu0 0.0
  %2329 = vmatpush1.msra.mxu0 0.0
  %2330 = vmatprep.subr.mxu0 0.0
  %2331 = vmatpush1.msra.mxu0 0.0
  %2332 = vmatprep.subr.mxu0 0.0
  %2333 = vmatpush1.msra.mxu0 0.0
  %2334 = vmatprep.subr.mxu0 0.0
  %2335 = vmatpush1.msra.mxu0 0.0
  %2336 = vmatprep.subr.mxu0 0.0
  %2337 = vmatpush1.msra.mxu0 0.0
  %2338 = vmatprep.subr.mxu0 0.0
  %2339 = vmatpush1.msra.mxu0 0.0
  %2340 = vmatprep.subr.mxu0 0.0
  %2341 = vmatpush1.msra.mxu0 0.0
  %2342 = vmatprep.mubr.f32.mxu0 0.0
  %2343 = vmatmul.mubr.f32.gmra.mrb[0].mxu0 %v2273
  %v2344 = vpop.f32.mrb[0].mxu0
  %v2345 = vadd.f32 0.0, %v2344
  %v2346 = vpop.f32.mrb[0].mxu0
  %2347 = vmatprep.mubr.f32.mxu0 0.0
  %2348 = vmatmul.mubr.f32.gmra.mrb[0].mxu0 %v2276
  %v2349 = vpop.f32.mrb[0].mxu0
  %v2350 = vadd.f32 0.0, %v2349
  %v2351 = vpop.f32.mrb[0].mxu0
  %2352 = vdwg.mxu0
  %v2353 = vlaneseq
  %v2354 = vshrl.u32 %v2353, 7
  %v2355 = vsub.s32 0, %v2354
  %v2356 = vrot.slane %v2271, %v2355
  %v2357 = vadd.f32 %v2345, %v2356
  %v2358 = vadd.f32 %v2350, %v2356
  %v2359 = vlaneseq
  %v2360 = vshrl.u32 %v2359, 7
  %v2361 = vsub.s32 1, %v2360
  %v2362 = vrot.slane %v2271, %v2361
  %v2363 = vadd.f32 %v2345, %v2362
  %v2364 = vadd.f32 %v2350, %v2362
  %v2365 = vlaneseq
  %v2366 = vshrl.u32 %v2365, 7
  %v2367 = vsub.s32 2, %v2366
  %v2368 = vrot.slane %v2271, %v2367
  %v2369 = vadd.f32 %v2345, %v2368
  %v2370 = vadd.f32 %v2350, %v2368
  %v2373 = vrot.slane %v2271, 3
  %v2374 = vrot.slane %v2272, 3
  %v2375 = vsel %vm260, %v2373, %v2374
  %v2377 = vsel %vm66, %v2369, 0
  %v2380 = vsel %vm66, %v2370, 0
  %v2382 = vsel %vm66, %v2375, 0
  %2384 = vmatprep.subr.mxu0 0.0
  %2385 = vmatpush1.xpose.msra.mxu0 %v2382
  %2386 = vmatprep.subr.mxu0 0.0
  %2387 = vmatpush1.xpose.msra.mxu0 0.0
  %2388 = vmatprep.subr.mxu0 0.0
  %2389 = vmatpush1.xpose.msra.mxu0 0.0
  %2390 = vmatprep.subr.mxu0 0.0
  %2391 = vmatpush1.xpose.msra.mxu0 0.0
  %2392 = vmatprep.subr.mxu0 0.0
  %2393 = vmatpush1.xpose.msra.mxu0 0.0
  %2394 = vmatprep.subr.mxu0 0.0
  %2395 = vmatpush1.xpose.msra.mxu0 0.0
  %2396 = vmatprep.subr.mxu0 0.0
  %2397 = vmatpush1.xpose.msra.mxu0 0.0
  %2398 = vmatprep.subr.mxu0 0.0
  %2399 = vmatpush1.xpose.msra.mxu0 0.0
  %2400 = vmatprep.subr.mxu0 0.0
  %2401 = vmatpush1.xpose.msra.mxu0 0.0
  %2402 = vmatprep.subr.mxu0 0.0
  %2403 = vmatpush1.xpose.msra.mxu0 0.0
  %2404 = vmatprep.subr.mxu0 0.0
  %2405 = vmatpush1.xpose.msra.mxu0 0.0
  %2406 = vmatprep.subr.mxu0 0.0
  %2407 = vmatpush1.xpose.msra.mxu0 0.0
  %2408 = vmatprep.subr.mxu0 0.0
  %2409 = vmatpush1.xpose.msra.mxu0 0.0
  %2410 = vmatprep.subr.mxu0 0.0
  %2411 = vmatpush1.xpose.msra.mxu0 0.0
  %2412 = vmatprep.subr.mxu0 0.0
  %2413 = vmatpush1.xpose.msra.mxu0 0.0
  %2414 = vmatprep.subr.mxu0 0.0
  %2415 = vmatpush1.xpose.msra.mxu0 0.0
  %2416 = vmatprep.subr.mxu0 0.0
  %2417 = vmatpush1.xpose.msra.mxu0 0.0
  %2418 = vmatprep.subr.mxu0 0.0
  %2419 = vmatpush1.xpose.msra.mxu0 0.0
  %2420 = vmatprep.subr.mxu0 0.0
  %2421 = vmatpush1.xpose.msra.mxu0 0.0
  %2422 = vmatprep.subr.mxu0 0.0
  %2423 = vmatpush1.xpose.msra.mxu0 0.0
  %2424 = vmatprep.subr.mxu0 0.0
  %2425 = vmatpush1.xpose.msra.mxu0 0.0
  %2426 = vmatprep.subr.mxu0 0.0
  %2427 = vmatpush1.xpose.msra.mxu0 0.0
  %2428 = vmatprep.subr.mxu0 0.0
  %2429 = vmatpush1.xpose.msra.mxu0 0.0
  %2430 = vmatprep.subr.mxu0 0.0
  %2431 = vmatpush1.xpose.msra.mxu0 0.0
  %2432 = vmatprep.subr.mxu0 0.0
  %2433 = vmatpush1.xpose.msra.mxu0 0.0
  %2434 = vmatprep.subr.mxu0 0.0
  %2435 = vmatpush1.xpose.msra.mxu0 0.0
  %2436 = vmatprep.subr.mxu0 0.0
  %2437 = vmatpush1.xpose.msra.mxu0 0.0
  %2438 = vmatprep.subr.mxu0 0.0
  %2439 = vmatpush1.xpose.msra.mxu0 0.0
  %2440 = vmatprep.subr.mxu0 0.0
  %2441 = vmatpush1.xpose.msra.mxu0 0.0
  %2442 = vmatprep.subr.mxu0 0.0
  %2443 = vmatpush1.xpose.msra.mxu0 0.0
  %2444 = vmatprep.subr.mxu0 0.0
  %2445 = vmatpush1.xpose.msra.mxu0 0.0
  %2446 = vmatprep.subr.mxu0 0.0
  %2447 = vmatpush1.xpose.msra.mxu0 0.0
  %2448 = vmatprep.mubr.f32.mxu0 0.0
  %2449 = vmatmul.mubr.f32.gmra.mrb[0].mxu0 %v2377
  %v2450 = vpop.f32.mrb[0].mxu0
  %v2451 = vadd.f32 0.0, %v2450
  %v2452 = vpop.f32.mrb[0].mxu0
  %2453 = vmatprep.mubr.f32.mxu0 0.0
  %2454 = vmatmul.mubr.f32.gmra.mrb[0].mxu0 %v2380
  %v2455 = vpop.f32.mrb[0].mxu0
  %v2456 = vadd.f32 0.0, %v2455
  %v2457 = vpop.f32.mrb[0].mxu0
  %2458 = vdwg.mxu0
  %2461 = vrot.lane.b32.xlu0 %v2345, 96
  %v2462 = vpop.permute.xlu0 %2461
  %2463 = vrot.lane.b32.xlu0 %v2350, 96
  %v2464 = vpop.permute.xlu0 %2463
  %v2466 = vsel %vm363, %v2357, 0
  %v2469 = vsel %vm363, %v2358, 0
  %v2472 = vsel %vm363, %v2363, 0
  %v2475 = vsel %vm363, %v2364, 0
  %v2477 = vsel %vm363, %v2462, 0
  %v2479 = vsel %vm363, %v2464, 0
  %2481 = vmatprep.subr.mxu0 0.0
  %2482 = vmatpush1.xpose.msra.mxu0 %v2477
  %2483 = vmatprep.subr.mxu0 0.0
  %2484 = vmatpush1.xpose.msra.mxu0 %v2479
  %2485 = vmatprep.subr.mxu0 0.0
  %2486 = vmatpush1.xpose.msra.mxu0 %v380
  %2487 = vmatprep.subr.mxu0 0.0
  %2488 = vmatpush1.xpose.msra.mxu0 %v382
  %2489 = vmatprep.subr.mxu0 0.0
  %2490 = vmatpush1.xpose.msra.mxu0 0.0
  %2491 = vmatprep.subr.mxu0 0.0
  %2492 = vmatpush1.xpose.msra.mxu0 0.0
  %2493 = vmatprep.subr.mxu0 0.0
  %2494 = vmatpush1.xpose.msra.mxu0 0.0
  %2495 = vmatprep.subr.mxu0 0.0
  %2496 = vmatpush1.xpose.msra.mxu0 0.0
  %2497 = vmatprep.subr.mxu0 0.0
  %2498 = vmatpush1.xpose.msra.mxu0 0.0
  %2499 = vmatprep.subr.mxu0 0.0
  %2500 = vmatpush1.xpose.msra.mxu0 0.0
  %2501 = vmatprep.subr.mxu0 0.0
  %2502 = vmatpush1.xpose.msra.mxu0 0.0
  %2503 = vmatprep.subr.mxu0 0.0
  %2504 = vmatpush1.xpose.msra.mxu0 0.0
  %2505 = vmatprep.subr.mxu0 0.0
  %2506 = vmatpush1.xpose.msra.mxu0 0.0
  %2507 = vmatprep.subr.mxu0 0.0
  %2508 = vmatpush1.xpose.msra.mxu0 0.0
  %2509 = vmatprep.subr.mxu0 0.0
  %2510 = vmatpush1.xpose.msra.mxu0 0.0
  %2511 = vmatprep.subr.mxu0 0.0
  %2512 = vmatpush1.xpose.msra.mxu0 0.0
  %2513 = vmatprep.subr.mxu0 0.0
  %2514 = vmatpush1.xpose.msra.mxu0 0.0
  %2515 = vmatprep.subr.mxu0 0.0
  %2516 = vmatpush1.xpose.msra.mxu0 0.0
  %2517 = vmatprep.subr.mxu0 0.0
  %2518 = vmatpush1.xpose.msra.mxu0 0.0
  %2519 = vmatprep.subr.mxu0 0.0
  %2520 = vmatpush1.xpose.msra.mxu0 0.0
  %2521 = vmatprep.subr.mxu0 0.0
  %2522 = vmatpush1.xpose.msra.mxu0 0.0
  %2523 = vmatprep.subr.mxu0 0.0
  %2524 = vmatpush1.xpose.msra.mxu0 0.0
  %2525 = vmatprep.subr.mxu0 0.0
  %2526 = vmatpush1.xpose.msra.mxu0 0.0
  %2527 = vmatprep.subr.mxu0 0.0
  %2528 = vmatpush1.xpose.msra.mxu0 0.0
  %2529 = vmatprep.subr.mxu0 0.0
  %2530 = vmatpush1.xpose.msra.mxu0 0.0
  %2531 = vmatprep.subr.mxu0 0.0
  %2532 = vmatpush1.xpose.msra.mxu0 0.0
  %2533 = vmatprep.subr.mxu0 0.0
  %2534 = vmatpush1.xpose.msra.mxu0 0.0
  %2535 = vmatprep.subr.mxu0 0.0
  %2536 = vmatpush1.xpose.msra.mxu0 0.0
  %2537 = vmatprep.subr.mxu0 0.0
  %2538 = vmatpush1.xpose.msra.mxu0 0.0
  %2539 = vmatprep.subr.mxu0 0.0
  %2540 = vmatpush1.xpose.msra.mxu0 0.0
  %2541 = vmatprep.subr.mxu0 0.0
  %2542 = vmatpush1.xpose.msra.mxu0 0.0
  %2543 = vmatprep.subr.mxu0 0.0
  %2544 = vmatpush1.xpose.msra.mxu0 0.0
  %2545 = vmatprep.mubr.f32.mxu0 0.0
  %2546 = vmatmul.mubr.f32.gmra.mrb[0].mxu0 %v2466
  %v2547 = vpop.f32.mrb[0].mxu0
  %v2548 = vadd.f32 0.0, %v2547
  %v2549 = vpop.f32.mrb[0].mxu0
  %2550 = vmatprep.mubr.f32.mxu0 0.0
  %2551 = vmatmul.mubr.f32.gmra.mrb[0].mxu0 %v2469
  %v2552 = vpop.f32.mrb[0].mxu0
  %v2553 = vadd.f32 0.0, %v2552
  %v2554 = vpop.f32.mrb[0].mxu0
  %2555 = vmatprep.mubr.f32.mxu0 0.0
  %2556 = vmatmul.mubr.f32.gmra.mrb[0].mxu0 %v2472
  %v2557 = vpop.f32.mrb[0].mxu0
  %v2558 = vadd.f32 0.0, %v2557
  %v2559 = vpop.f32.mrb[0].mxu0
  %2560 = vmatprep.mubr.f32.mxu0 0.0
  %2561 = vmatmul.mubr.f32.gmra.mrb[0].mxu0 %v2475
  %v2562 = vpop.f32.mrb[0].mxu0
  %v2563 = vadd.f32 0.0, %v2562
  %v2564 = vpop.f32.mrb[0].mxu0
  %2565 = vdwg.mxu0
  %2566 = vrot.lane.b32.xlu0 %v2357, 120
  %v2567 = vpop.permute.xlu0 %2566
  %2568 = vrot.lane.b32.xlu0 %v2358, 120
  %v2569 = vpop.permute.xlu0 %2568
  %2570 = vrot.lane.b32.xlu0 %v2363, 120
  %v2571 = vpop.permute.xlu0 %2570
  %2572 = vrot.lane.b32.xlu0 %v2364, 120
  %v2573 = vpop.permute.xlu0 %2572
  %2574 = vrot.lane.b32.xlu0 %v2345, 88
  %v2575 = vpop.permute.xlu0 %2574
  %2576 = vrot.lane.b32.xlu0 %v2350, 88
  %v2577 = vpop.permute.xlu0 %2576
  %v2578 = vsel %vm363, %v2567, 0
  %v2580 = vsel %vm363, %v2569, 0
  %v2582 = vsel %vm363, %v2571, 0
  %v2584 = vsel %vm363, %v2573, 0
  %v2586 = vsel %vm363, %v2575, 0
  %v2588 = vsel %vm363, %v2577, 0
  %2590 = vmatprep.subr.mxu0 0.0
  %2591 = vmatpush1.xpose.msra.mxu0 %v2586
  %2592 = vmatprep.subr.mxu0 0.0
  %2593 = vmatpush1.xpose.msra.mxu0 %v2588
  %2594 = vmatprep.subr.mxu0 0.0
  %2595 = vmatpush1.xpose.msra.mxu0 %v497
  %2596 = vmatprep.subr.mxu0 0.0
  %2597 = vmatpush1.xpose.msra.mxu0 %v499
  %2598 = vmatprep.subr.mxu0 0.0
  %2599 = vmatpush1.xpose.msra.mxu0 0.0
  %2600 = vmatprep.subr.mxu0 0.0
  %2601 = vmatpush1.xpose.msra.mxu0 0.0
  %2602 = vmatprep.subr.mxu0 0.0
  %2603 = vmatpush1.xpose.msra.mxu0 0.0
  %2604 = vmatprep.subr.mxu0 0.0
  %2605 = vmatpush1.xpose.msra.mxu0 0.0
  %2606 = vmatprep.subr.mxu0 0.0
  %2607 = vmatpush1.xpose.msra.mxu0 0.0
  %2608 = vmatprep.subr.mxu0 0.0
  %2609 = vmatpush1.xpose.msra.mxu0 0.0
  %2610 = vmatprep.subr.mxu0 0.0
  %2611 = vmatpush1.xpose.msra.mxu0 0.0
  %2612 = vmatprep.subr.mxu0 0.0
  %2613 = vmatpush1.xpose.msra.mxu0 0.0
  %2614 = vmatprep.subr.mxu0 0.0
  %2615 = vmatpush1.xpose.msra.mxu0 0.0
  %2616 = vmatprep.subr.mxu0 0.0
  %2617 = vmatpush1.xpose.msra.mxu0 0.0
  %2618 = vmatprep.subr.mxu0 0.0
  %2619 = vmatpush1.xpose.msra.mxu0 0.0
  %2620 = vmatprep.subr.mxu0 0.0
  %2621 = vmatpush1.xpose.msra.mxu0 0.0
  %2622 = vmatprep.subr.mxu0 0.0
  %2623 = vmatpush1.xpose.msra.mxu0 0.0
  %2624 = vmatprep.subr.mxu0 0.0
  %2625 = vmatpush1.xpose.msra.mxu0 0.0
  %2626 = vmatprep.subr.mxu0 0.0
  %2627 = vmatpush1.xpose.msra.mxu0 0.0
  %2628 = vmatprep.subr.mxu0 0.0
  %2629 = vmatpush1.xpose.msra.mxu0 0.0
  %2630 = vmatprep.subr.mxu0 0.0
  %2631 = vmatpush1.xpose.msra.mxu0 0.0
  %2632 = vmatprep.subr.mxu0 0.0
  %2633 = vmatpush1.xpose.msra.mxu0 0.0
  %2634 = vmatprep.subr.mxu0 0.0
  %2635 = vmatpush1.xpose.msra.mxu0 0.0
  %2636 = vmatprep.subr.mxu0 0.0
  %2637 = vmatpush1.xpose.msra.mxu0 0.0
  %2638 = vmatprep.subr.mxu0 0.0
  %2639 = vmatpush1.xpose.msra.mxu0 0.0
  %2640 = vmatprep.subr.mxu0 0.0
  %2641 = vmatpush1.xpose.msra.mxu0 0.0
  %2642 = vmatprep.subr.mxu0 0.0
  %2643 = vmatpush1.xpose.msra.mxu0 0.0
  %2644 = vmatprep.subr.mxu0 0.0
  %2645 = vmatpush1.xpose.msra.mxu0 0.0
  %2646 = vmatprep.subr.mxu0 0.0
  %2647 = vmatpush1.xpose.msra.mxu0 0.0
  %2648 = vmatprep.subr.mxu0 0.0
  %2649 = vmatpush1.xpose.msra.mxu0 0.0
  %2650 = vmatprep.subr.mxu0 0.0
  %2651 = vmatpush1.xpose.msra.mxu0 0.0
  %2652 = vmatprep.subr.mxu0 0.0
  %2653 = vmatpush1.xpose.msra.mxu0 0.0
  %2654 = vmatprep.mubr.f32.mxu0 0.0
  %2655 = vmatmul.mubr.f32.gmra.mrb[0].mxu0 %v2578
  %v2656 = vpop.f32.mrb[0].mxu0
  %v2657 = vadd.f32 0.0, %v2656
  %v2658 = vpop.f32.mrb[0].mxu0
  %2659 = vmatprep.mubr.f32.mxu0 0.0
  %2660 = vmatmul.mubr.f32.gmra.mrb[0].mxu0 %v2580
  %v2661 = vpop.f32.mrb[0].mxu0
  %v2662 = vadd.f32 0.0, %v2661
  %v2663 = vpop.f32.mrb[0].mxu0
  %2664 = vmatprep.mubr.f32.mxu0 0.0
  %2665 = vmatmul.mubr.f32.gmra.mrb[0].mxu0 %v2582
  %v2666 = vpop.f32.mrb[0].mxu0
  %v2667 = vadd.f32 0.0, %v2666
  %v2668 = vpop.f32.mrb[0].mxu0
  %2669 = vmatprep.mubr.f32.mxu0 0.0
  %2670 = vmatmul.mubr.f32.gmra.mrb[0].mxu0 %v2584
  %v2671 = vpop.f32.mrb[0].mxu0
  %v2672 = vadd.f32 0.0, %v2671
  %v2673 = vpop.f32.mrb[0].mxu0
  %2674 = vdwg.mxu0
  %2675 = vrot.lane.b32.xlu0 %v2357, 112
  %v2676 = vpop.permute.xlu0 %2675
  %2677 = vrot.lane.b32.xlu0 %v2358, 112
  %v2678 = vpop.permute.xlu0 %2677
  %2679 = vrot.lane.b32.xlu0 %v2363, 112
  %v2680 = vpop.permute.xlu0 %2679
  %2681 = vrot.lane.b32.xlu0 %v2364, 112
  %v2682 = vpop.permute.xlu0 %2681
  %2683 = vrot.lane.b32.xlu0 %v2345, 80
  %v2684 = vpop.permute.xlu0 %2683
  %2685 = vrot.lane.b32.xlu0 %v2350, 80
  %v2686 = vpop.permute.xlu0 %2685
  %v2687 = vsel %vm363, %v2676, 0
  %v2689 = vsel %vm363, %v2678, 0
  %v2691 = vsel %vm363, %v2680, 0
  %v2693 = vsel %vm363, %v2682, 0
  %v2695 = vsel %vm363, %v2684, 0
  %v2697 = vsel %vm363, %v2686, 0
  %2699 = vmatprep.subr.mxu0 0.0
  %2700 = vmatpush1.xpose.msra.mxu0 %v2695
  %2701 = vmatprep.subr.mxu0 0.0
  %2702 = vmatpush1.xpose.msra.mxu0 %v2697
  %2703 = vmatprep.subr.mxu0 0.0
  %2704 = vmatpush1.xpose.msra.mxu0 %v614
  %2705 = vmatprep.subr.mxu0 0.0
  %2706 = vmatpush1.xpose.msra.mxu0 %v616
  %2707 = vmatprep.subr.mxu0 0.0
  %2708 = vmatpush1.xpose.msra.mxu0 0.0
  %2709 = vmatprep.subr.mxu0 0.0
  %2710 = vmatpush1.xpose.msra.mxu0 0.0
  %2711 = vmatprep.subr.mxu0 0.0
  %2712 = vmatpush1.xpose.msra.mxu0 0.0
  %2713 = vmatprep.subr.mxu0 0.0
  %2714 = vmatpush1.xpose.msra.mxu0 0.0
  %2715 = vmatprep.subr.mxu0 0.0
  %2716 = vmatpush1.xpose.msra.mxu0 0.0
  %2717 = vmatprep.subr.mxu0 0.0
  %2718 = vmatpush1.xpose.msra.mxu0 0.0
  %2719 = vmatprep.subr.mxu0 0.0
  %2720 = vmatpush1.xpose.msra.mxu0 0.0
  %2721 = vmatprep.subr.mxu0 0.0
  %2722 = vmatpush1.xpose.msra.mxu0 0.0
  %2723 = vmatprep.subr.mxu0 0.0
  %2724 = vmatpush1.xpose.msra.mxu0 0.0
  %2725 = vmatprep.subr.mxu0 0.0
  %2726 = vmatpush1.xpose.msra.mxu0 0.0
  %2727 = vmatprep.subr.mxu0 0.0
  %2728 = vmatpush1.xpose.msra.mxu0 0.0
  %2729 = vmatprep.subr.mxu0 0.0
  %2730 = vmatpush1.xpose.msra.mxu0 0.0
  %2731 = vmatprep.subr.mxu0 0.0
  %2732 = vmatpush1.xpose.msra.mxu0 0.0
  %2733 = vmatprep.subr.mxu0 0.0
  %2734 = vmatpush1.xpose.msra.mxu0 0.0
  %2735 = vmatprep.subr.mxu0 0.0
  %2736 = vmatpush1.xpose.msra.mxu0 0.0
  %2737 = vmatprep.subr.mxu0 0.0
  %2738 = vmatpush1.xpose.msra.mxu0 0.0
  %2739 = vmatprep.subr.mxu0 0.0
  %2740 = vmatpush1.xpose.msra.mxu0 0.0
  %2741 = vmatprep.subr.mxu0 0.0
  %2742 = vmatpush1.xpose.msra.mxu0 0.0
  %2743 = vmatprep.subr.mxu0 0.0
  %2744 = vmatpush1.xpose.msra.mxu0 0.0
  %2745 = vmatprep.subr.mxu0 0.0
  %2746 = vmatpush1.xpose.msra.mxu0 0.0
  %2747 = vmatprep.subr.mxu0 0.0
  %2748 = vmatpush1.xpose.msra.mxu0 0.0
  %2749 = vmatprep.subr.mxu0 0.0
  %2750 = vmatpush1.xpose.msra.mxu0 0.0
  %2751 = vmatprep.subr.mxu0 0.0
  %2752 = vmatpush1.xpose.msra.mxu0 0.0
  %2753 = vmatprep.subr.mxu0 0.0
  %2754 = vmatpush1.xpose.msra.mxu0 0.0
  %2755 = vmatprep.subr.mxu0 0.0
  %2756 = vmatpush1.xpose.msra.mxu0 0.0
  %2757 = vmatprep.subr.mxu0 0.0
  %2758 = vmatpush1.xpose.msra.mxu0 0.0
  %2759 = vmatprep.subr.mxu0 0.0
  %2760 = vmatpush1.xpose.msra.mxu0 0.0
  %2761 = vmatprep.subr.mxu0 0.0
  %2762 = vmatpush1.xpose.msra.mxu0 0.0
  %2763 = vmatprep.mubr.f32.mxu0 0.0
  %2764 = vmatmul.mubr.f32.gmra.mrb[0].mxu0 %v2687
  %v2765 = vpop.f32.mrb[0].mxu0
  %v2766 = vadd.f32 0.0, %v2765
  %v2767 = vpop.f32.mrb[0].mxu0
  %2768 = vmatprep.mubr.f32.mxu0 0.0
  %2769 = vmatmul.mubr.f32.gmra.mrb[0].mxu0 %v2689
  %v2770 = vpop.f32.mrb[0].mxu0
  %v2771 = vadd.f32 0.0, %v2770
  %v2772 = vpop.f32.mrb[0].mxu0
  %2773 = vmatprep.mubr.f32.mxu0 0.0
  %2774 = vmatmul.mubr.f32.gmra.mrb[0].mxu0 %v2691
  %v2775 = vpop.f32.mrb[0].mxu0
  %v2776 = vadd.f32 0.0, %v2775
  %v2777 = vpop.f32.mrb[0].mxu0
  %2778 = vmatprep.mubr.f32.mxu0 0.0
  %2779 = vmatmul.mubr.f32.gmra.mrb[0].mxu0 %v2693
  %v2780 = vpop.f32.mrb[0].mxu0
  %v2781 = vadd.f32 0.0, %v2780
  %v2782 = vpop.f32.mrb[0].mxu0
  %2783 = vdwg.mxu0
  %2784 = vrot.lane.b32.xlu0 %v2357, 104
  %v2785 = vpop.permute.xlu0 %2784
  %2786 = vrot.lane.b32.xlu0 %v2358, 104
  %v2787 = vpop.permute.xlu0 %2786
  %2788 = vrot.lane.b32.xlu0 %v2363, 104
  %v2789 = vpop.permute.xlu0 %2788
  %2790 = vrot.lane.b32.xlu0 %v2364, 104
  %v2791 = vpop.permute.xlu0 %2790
  %2792 = vrot.lane.b32.xlu0 %v2345, 72
  %v2793 = vpop.permute.xlu0 %2792
  %2794 = vrot.lane.b32.xlu0 %v2350, 72
  %v2795 = vpop.permute.xlu0 %2794
  %v2796 = vsel %vm363, %v2785, 0
  %v2798 = vsel %vm363, %v2787, 0
  %v2800 = vsel %vm363, %v2789, 0
  %v2802 = vsel %vm363, %v2791, 0
  %v2804 = vsel %vm363, %v2793, 0
  %v2806 = vsel %vm363, %v2795, 0
  %2808 = vmatprep.subr.mxu0 0.0
  %2809 = vmatpush1.xpose.msra.mxu0 %v2804
  %2810 = vmatprep.subr.mxu0 0.0
  %2811 = vmatpush1.xpose.msra.mxu0 %v2806
  %2812 = vmatprep.subr.mxu0 0.0
  %2813 = vmatpush1.xpose.msra.mxu0 %v731
  %2814 = vmatprep.subr.mxu0 0.0
  %2815 = vmatpush1.xpose.msra.mxu0 %v733
  %2816 = vmatprep.subr.mxu0 0.0
  %2817 = vmatpush1.xpose.msra.mxu0 0.0
  %2818 = vmatprep.subr.mxu0 0.0
  %2819 = vmatpush1.xpose.msra.mxu0 0.0
  %2820 = vmatprep.subr.mxu0 0.0
  %2821 = vmatpush1.xpose.msra.mxu0 0.0
  %2822 = vmatprep.subr.mxu0 0.0
  %2823 = vmatpush1.xpose.msra.mxu0 0.0
  %2824 = vmatprep.subr.mxu0 0.0
  %2825 = vmatpush1.xpose.msra.mxu0 0.0
  %2826 = vmatprep.subr.mxu0 0.0
  %2827 = vmatpush1.xpose.msra.mxu0 0.0
  %2828 = vmatprep.subr.mxu0 0.0
  %2829 = vmatpush1.xpose.msra.mxu0 0.0
  %2830 = vmatprep.subr.mxu0 0.0
  %2831 = vmatpush1.xpose.msra.mxu0 0.0
  %2832 = vmatprep.subr.mxu0 0.0
  %2833 = vmatpush1.xpose.msra.mxu0 0.0
  %2834 = vmatprep.subr.mxu0 0.0
  %2835 = vmatpush1.xpose.msra.mxu0 0.0
  %2836 = vmatprep.subr.mxu0 0.0
  %2837 = vmatpush1.xpose.msra.mxu0 0.0
  %2838 = vmatprep.subr.mxu0 0.0
  %2839 = vmatpush1.xpose.msra.mxu0 0.0
  %2840 = vmatprep.subr.mxu0 0.0
  %2841 = vmatpush1.xpose.msra.mxu0 0.0
  %2842 = vmatprep.subr.mxu0 0.0
  %2843 = vmatpush1.xpose.msra.mxu0 0.0
  %2844 = vmatprep.subr.mxu0 0.0
  %2845 = vmatpush1.xpose.msra.mxu0 0.0
  %2846 = vmatprep.subr.mxu0 0.0
  %2847 = vmatpush1.xpose.msra.mxu0 0.0
  %2848 = vmatprep.subr.mxu0 0.0
  %2849 = vmatpush1.xpose.msra.mxu0 0.0
  %2850 = vmatprep.subr.mxu0 0.0
  %2851 = vmatpush1.xpose.msra.mxu0 0.0
  %2852 = vmatprep.subr.mxu0 0.0
  %2853 = vmatpush1.xpose.msra.mxu0 0.0
  %2854 = vmatprep.subr.mxu0 0.0
  %2855 = vmatpush1.xpose.msra.mxu0 0.0
  %2856 = vmatprep.subr.mxu0 0.0
  %2857 = vmatpush1.xpose.msra.mxu0 0.0
  %2858 = vmatprep.subr.mxu0 0.0
  %2859 = vmatpush1.xpose.msra.mxu0 0.0
  %2860 = vmatprep.subr.mxu0 0.0
  %2861 = vmatpush1.xpose.msra.mxu0 0.0
  %2862 = vmatprep.subr.mxu0 0.0
  %2863 = vmatpush1.xpose.msra.mxu0 0.0
  %2864 = vmatprep.subr.mxu0 0.0
  %2865 = vmatpush1.xpose.msra.mxu0 0.0
  %2866 = vmatprep.subr.mxu0 0.0
  %2867 = vmatpush1.xpose.msra.mxu0 0.0
  %2868 = vmatprep.subr.mxu0 0.0
  %2869 = vmatpush1.xpose.msra.mxu0 0.0
  %2870 = vmatprep.subr.mxu0 0.0
  %2871 = vmatpush1.xpose.msra.mxu0 0.0
  %2872 = vmatprep.mubr.f32.mxu0 0.0
  %2873 = vmatmul.mubr.f32.gmra.mrb[0].mxu0 %v2796
  %v2874 = vpop.f32.mrb[0].mxu0
  %v2875 = vadd.f32 0.0, %v2874
  %v2876 = vpop.f32.mrb[0].mxu0
  %2877 = vmatprep.mubr.f32.mxu0 0.0
  %2878 = vmatmul.mubr.f32.gmra.mrb[0].mxu0 %v2798
  %v2879 = vpop.f32.mrb[0].mxu0
  %v2880 = vadd.f32 0.0, %v2879
  %v2881 = vpop.f32.mrb[0].mxu0
  %2882 = vmatprep.mubr.f32.mxu0 0.0
  %2883 = vmatmul.mubr.f32.gmra.mrb[0].mxu0 %v2800
  %v2884 = vpop.f32.mrb[0].mxu0
  %v2885 = vadd.f32 0.0, %v2884
  %v2886 = vpop.f32.mrb[0].mxu0
  %2887 = vmatprep.mubr.f32.mxu0 0.0
  %2888 = vmatmul.mubr.f32.gmra.mrb[0].mxu0 %v2802
  %v2889 = vpop.f32.mrb[0].mxu0
  %v2890 = vadd.f32 0.0, %v2889
  %v2891 = vpop.f32.mrb[0].mxu0
  %2892 = vdwg.mxu0
  %2901 = vrot.lane.b32.xlu0 %v2558, 97
  %v2902 = vpop.permute.xlu0 %2901
  %2903 = vrot.lane.b32.xlu0 %v2563, 97
  %v2904 = vpop.permute.xlu0 %2903
  %2905 = vrot.lane.b32.xlu0 %v2667, 97
  %v2906 = vpop.permute.xlu0 %2905
  %2907 = vrot.lane.b32.xlu0 %v2672, 97
  %v2908 = vpop.permute.xlu0 %2907
  %2909 = vrot.lane.b32.xlu0 %v2776, 97
  %v2910 = vpop.permute.xlu0 %2909
  %2911 = vrot.lane.b32.xlu0 %v2781, 97
  %v2912 = vpop.permute.xlu0 %2911
  %2913 = vrot.lane.b32.xlu0 %v2885, 97
  %v2914 = vpop.permute.xlu0 %2913
  %2915 = vrot.lane.b32.xlu0 %v2890, 97
  %v2916 = vpop.permute.xlu0 %2915
  %2925 = vrot.lane.b32.xlu0 %v2558, 113
  %v2926 = vpop.permute.xlu0 %2925
  %2927 = vrot.lane.b32.xlu0 %v2563, 113
  %v2928 = vpop.permute.xlu0 %2927
  %2929 = vrot.lane.b32.xlu0 %v2667, 113
  %v2930 = vpop.permute.xlu0 %2929
  %2931 = vrot.lane.b32.xlu0 %v2672, 113
  %v2932 = vpop.permute.xlu0 %2931
  %2933 = vrot.lane.b32.xlu0 %v2776, 113
  %v2934 = vpop.permute.xlu0 %2933
  %2935 = vrot.lane.b32.xlu0 %v2781, 113
  %v2936 = vpop.permute.xlu0 %2935
  %2937 = vrot.lane.b32.xlu0 %v2885, 113
  %v2938 = vpop.permute.xlu0 %2937
  %2939 = vrot.lane.b32.xlu0 %v2890, 113
  %v2940 = vpop.permute.xlu0 %2939
  %v2949 = vsel %vm876, %v2902, %v2926
  %v2950 = vsel %vm876, %v2904, %v2928
  %v2951 = vsel %vm876, %v2906, %v2930
  %v2952 = vsel %vm876, %v2908, %v2932
  %v2953 = vsel %vm876, %v2910, %v2934
  %v2954 = vsel %vm876, %v2912, %v2936
  %v2955 = vsel %vm876, %v2914, %v2938
  %v2956 = vsel %vm876, %v2916, %v2940
  %2957 = vrot.lane.b32.xlu0 %v2558, 112
  %v2958 = vpop.permute.xlu0 %2957
  %2959 = vrot.lane.b32.xlu0 %v2563, 112
  %v2960 = vpop.permute.xlu0 %2959
  %2961 = vrot.lane.b32.xlu0 %v2667, 112
  %v2962 = vpop.permute.xlu0 %2961
  %2963 = vrot.lane.b32.xlu0 %v2672, 112
  %v2964 = vpop.permute.xlu0 %2963
  %2965 = vrot.lane.b32.xlu0 %v2776, 112
  %v2966 = vpop.permute.xlu0 %2965
  %2967 = vrot.lane.b32.xlu0 %v2781, 112
  %v2968 = vpop.permute.xlu0 %2967
  %2969 = vrot.lane.b32.xlu0 %v2885, 112
  %v2970 = vpop.permute.xlu0 %2969
  %2971 = vrot.lane.b32.xlu0 %v2890, 112
  %v2972 = vpop.permute.xlu0 %2971
  %v2981 = vsel %vm909, %v2949, %v2958
  %v2982 = vsel %vm910, %v2950, %v2960
  %v2983 = vsel %vm911, %v2951, %v2962
  %v2984 = vsel %vm912, %v2952, %v2964
  %v2985 = vsel %vm913, %v2953, %v2966
  %v2986 = vsel %vm914, %v2954, %v2968
  %v2987 = vsel %vm915, %v2955, %v2970
  %v2988 = vsel %vm916, %v2956, %v2972
  %2997 = vrot.lane.b32.xlu0 %v2981, 114
  %v2998 = vpop.permute.xlu0 %2997
  %2999 = vrot.lane.b32.xlu0 %v2982, 114
  %v3000 = vpop.permute.xlu0 %2999
  %3001 = vrot.lane.b32.xlu0 %v2983, 114
  %v3002 = vpop.permute.xlu0 %3001
  %3003 = vrot.lane.b32.xlu0 %v2984, 114
  %v3004 = vpop.permute.xlu0 %3003
  %3005 = vrot.lane.b32.xlu0 %v2985, 114
  %v3006 = vpop.permute.xlu0 %3005
  %3007 = vrot.lane.b32.xlu0 %v2986, 114
  %v3008 = vpop.permute.xlu0 %3007
  %3009 = vrot.lane.b32.xlu0 %v2987, 114
  %v3010 = vpop.permute.xlu0 %3009
  %3011 = vrot.lane.b32.xlu0 %v2988, 114
  %v3012 = vpop.permute.xlu0 %3011
  %3021 = vrot.lane.b32.xlu0 %v2981, 2
  %v3022 = vpop.permute.xlu0 %3021
  %3023 = vrot.lane.b32.xlu0 %v2982, 2
  %v3024 = vpop.permute.xlu0 %3023
  %3025 = vrot.lane.b32.xlu0 %v2983, 2
  %v3026 = vpop.permute.xlu0 %3025
  %3027 = vrot.lane.b32.xlu0 %v2984, 2
  %v3028 = vpop.permute.xlu0 %3027
  %3029 = vrot.lane.b32.xlu0 %v2985, 2
  %v3030 = vpop.permute.xlu0 %3029
  %3031 = vrot.lane.b32.xlu0 %v2986, 2
  %v3032 = vpop.permute.xlu0 %3031
  %3033 = vrot.lane.b32.xlu0 %v2987, 2
  %v3034 = vpop.permute.xlu0 %3033
  %3035 = vrot.lane.b32.xlu0 %v2988, 2
  %v3036 = vpop.permute.xlu0 %3035
  %v3045 = vsel %vm1005, %v2998, %v3022
  %v3046 = vsel %vm1005, %v3000, %v3024
  %v3047 = vsel %vm1005, %v3002, %v3026
  %v3048 = vsel %vm1005, %v3004, %v3028
  %v3049 = vsel %vm1005, %v3006, %v3030
  %v3050 = vsel %vm1005, %v3008, %v3032
  %v3051 = vsel %vm1005, %v3010, %v3034
  %v3052 = vsel %vm1005, %v3012, %v3036
  %v3053 = vsel %vm1038, %v3045, %v2981
  %v3054 = vsel %vm1039, %v3046, %v2982
  %v3055 = vsel %vm1040, %v3047, %v2983
  %v3056 = vsel %vm1041, %v3048, %v2984
  %v3057 = vsel %vm1042, %v3049, %v2985
  %v3058 = vsel %vm1043, %v3050, %v2986
  %v3059 = vsel %vm1044, %v3051, %v2987
  %v3060 = vsel %vm1045, %v3052, %v2988
  %3069 = vrot.lane.b32.xlu0 %v3053, 116
  %v3070 = vpop.permute.xlu0 %3069
  %3071 = vrot.lane.b32.xlu0 %v3054, 116
  %v3072 = vpop.permute.xlu0 %3071
  %3073 = vrot.lane.b32.xlu0 %v3055, 116
  %v3074 = vpop.permute.xlu0 %3073
  %3075 = vrot.lane.b32.xlu0 %v3056, 116
  %v3076 = vpop.permute.xlu0 %3075
  %3077 = vrot.lane.b32.xlu0 %v3057, 116
  %v3078 = vpop.permute.xlu0 %3077
  %3079 = vrot.lane.b32.xlu0 %v3058, 116
  %v3080 = vpop.permute.xlu0 %3079
  %3081 = vrot.lane.b32.xlu0 %v3059, 116
  %v3082 = vpop.permute.xlu0 %3081
  %3083 = vrot.lane.b32.xlu0 %v3060, 116
  %v3084 = vpop.permute.xlu0 %3083
  %3093 = vrot.lane.b32.xlu0 %v3053, 4
  %v3094 = vpop.permute.xlu0 %3093
  %3095 = vrot.lane.b32.xlu0 %v3054, 4
  %v3096 = vpop.permute.xlu0 %3095
  %3097 = vrot.lane.b32.xlu0 %v3055, 4
  %v3098 = vpop.permute.xlu0 %3097
  %3099 = vrot.lane.b32.xlu0 %v3056, 4
  %v3100 = vpop.permute.xlu0 %3099
  %3101 = vrot.lane.b32.xlu0 %v3057, 4
  %v3102 = vpop.permute.xlu0 %3101
  %3103 = vrot.lane.b32.xlu0 %v3058, 4
  %v3104 = vpop.permute.xlu0 %3103
  %3105 = vrot.lane.b32.xlu0 %v3059, 4
  %v3106 = vpop.permute.xlu0 %3105
  %3107 = vrot.lane.b32.xlu0 %v3060, 4
  %v3108 = vpop.permute.xlu0 %3107
  %v3117 = vsel %vm1110, %v3070, %v3094
  %v3118 = vsel %vm1110, %v3072, %v3096
  %v3119 = vsel %vm1110, %v3074, %v3098
  %v3120 = vsel %vm1110, %v3076, %v3100
  %v3121 = vsel %vm1110, %v3078, %v3102
  %v3122 = vsel %vm1110, %v3080, %v3104
  %v3123 = vsel %vm1110, %v3082, %v3106
  %v3124 = vsel %vm1110, %v3084, %v3108
  %v3125 = vsel %vm1143, %v3117, %v3053
  %v3126 = vsel %vm1144, %v3118, %v3054
  %v3127 = vsel %vm1145, %v3119, %v3055
  %v3128 = vsel %vm1146, %v3120, %v3056
  %v3129 = vsel %vm1147, %v3121, %v3057
  %v3130 = vsel %vm1148, %v3122, %v3058
  %v3131 = vsel %vm1149, %v3123, %v3059
  %v3132 = vsel %vm1150, %v3124, %v3060
  %3141 = vrot.lane.b32.xlu0 %v3125, 120
  %v3142 = vpop.permute.xlu0 %3141
  %3143 = vrot.lane.b32.xlu0 %v3126, 120
  %v3144 = vpop.permute.xlu0 %3143
  %3145 = vrot.lane.b32.xlu0 %v3127, 120
  %v3146 = vpop.permute.xlu0 %3145
  %3147 = vrot.lane.b32.xlu0 %v3128, 120
  %v3148 = vpop.permute.xlu0 %3147
  %3149 = vrot.lane.b32.xlu0 %v3129, 120
  %v3150 = vpop.permute.xlu0 %3149
  %3151 = vrot.lane.b32.xlu0 %v3130, 120
  %v3152 = vpop.permute.xlu0 %3151
  %3153 = vrot.lane.b32.xlu0 %v3131, 120
  %v3154 = vpop.permute.xlu0 %3153
  %3155 = vrot.lane.b32.xlu0 %v3132, 120
  %v3156 = vpop.permute.xlu0 %3155
  %v3165 = vsel %vm363, %v3142, %v3125
  %v3166 = vsel %vm363, %v3144, %v3126
  %v3167 = vsel %vm363, %v3146, %v3127
  %v3168 = vsel %vm363, %v3148, %v3128
  %v3169 = vsel %vm363, %v3150, %v3129
  %v3170 = vsel %vm363, %v3152, %v3130
  %v3171 = vsel %vm363, %v3154, %v3131
  %v3172 = vsel %vm363, %v3156, %v3132
  %3175 = vrot.lane.b32.xlu0 %v2451, 124
  %v3176 = vpop.permute.xlu0 %3175
  %3177 = vrot.lane.b32.xlu0 %v2456, 124
  %v3178 = vpop.permute.xlu0 %3177
  %v3181 = vsub.f32 %v2451, %v3176
  %v3182 = vsub.f32 %v2456, %v3178
  %3184 = vset.pattern.permute.xlu0 0
  %3185 = vperm.xlu0 %3184, %v3181
  %v3186 = vpop.permute.xlu0 %3185
  %3189 = vset.pattern.permute.xlu0 0
  %3190 = vperm.xlu0 %3189, %v3182
  %v3191 = vpop.permute.xlu0 %3190
  %v3193 = vmul.f32 %v29, %v3186
  %v3194 = vmul.f32 %v30, %v3191
  %3195 = vset.pattern.permute.xlu0 4
  %3196 = vperm.xlu0 %3195, %v2451
  %v3197 = vpop.permute.xlu0 %3196
  %3199 = vset.pattern.permute.xlu0 4
  %3200 = vperm.xlu0 %3199, %v2456
  %v3201 = vpop.permute.xlu0 %3200
  %v3203 = vadd.f32 %v3197, %v3193
  %v3204 = vadd.f32 %v3201, %v3194
  %v3205 = vadd.f32 %v2548, %v3165
  %v3206 = vadd.f32 %v2553, %v3166
  %v3207 = vadd.f32 %v3205, %v3203
  %v3208 = vadd.f32 %v3206, %v3204
  %v3209 = vmul.f32 %v3207, 0.35355338
  %v3210 = vmul.f32 %v3208, 0.35355338
  %v3211 = vadd.f32 %v3209, %v32
  %v3212 = vadd.f32 %v3210, %v33
  %v3213 = vsel %vm1239, %v3211, -inf
  %3214 = vmax.xlane.f32.xlu0 %v3213
  %v3215 = vpop.xlane.xlu0 %3214
  %v3216 = vsel %vm1239, %v3212, -inf
  %3217 = vmax.xlane.f32.xlu0 %v3216
  %v3218 = vpop.xlane.xlu0 %3217
  %v3219 = vsub.f32 %v3211, %v3215
  %v3220 = vsub.f32 %v3212, %v3218
  %v3221 = vmul.f32 %v3219, 1.442695
  %v3222 = vpow.pop %v3221
  %v3223 = vmul.f32 %v3220, 1.442695
  %v3224 = vpow.pop %v3223
  %v3225 = vsel %vm1239, %v3222, 0.0
  %3226 = vadd.xlane.f32.xlu0 %v3225
  %v3227 = vpop.xlane.xlu0 %3226
  %v3228 = vsel %vm1239, %v3224, 0.0
  %3229 = vadd.xlane.f32.xlu0 %v3228
  %v3230 = vpop.xlane.xlu0 %3229
  %v3231 = vrcp.pop %v3227
  %v3232 = vmul.f32 %v3222, %v3231
  %v3233 = vrcp.pop %v3230
  %v3234 = vmul.f32 %v3224, %v3233
  %3235 = vrot.lane.b32.xlu0 %v2345, 64
  %v3236 = vpop.permute.xlu0 %3235
  %3237 = vrot.lane.b32.xlu0 %v2350, 64
  %v3238 = vpop.permute.xlu0 %3237
  %v3242 = vsel %vm1239, %v3232, 0
  %v3245 = vsel %vm1239, %v3234, 0
  %3247 = vmatprep.subr.mxu0 0.0
  %3248 = vmatpush1.msra.mxu0 %v3236
  %3249 = vmatprep.subr.mxu0 0.0
  %3250 = vmatpush1.msra.mxu0 %v3238
  %3251 = vmatprep.subr.mxu0 0.0
  %3252 = vmatpush1.msra.mxu0 0.0
  %3253 = vmatprep.subr.mxu0 0.0
  %3254 = vmatpush1.msra.mxu0 0.0
  %3255 = vmatprep.subr.mxu0 0.0
  %3256 = vmatpush1.msra.mxu0 0.0
  %3257 = vmatprep.subr.mxu0 0.0
  %3258 = vmatpush1.msra.mxu0 0.0
  %3259 = vmatprep.subr.mxu0 0.0
  %3260 = vmatpush1.msra.mxu0 0.0
  %3261 = vmatprep.subr.mxu0 0.0
  %3262 = vmatpush1.msra.mxu0 0.0
  %3263 = vmatprep.subr.mxu0 0.0
  %3264 = vmatpush1.msra.mxu0 0.0
  %3265 = vmatprep.subr.mxu0 0.0
  %3266 = vmatpush1.msra.mxu0 0.0
  %3267 = vmatprep.subr.mxu0 0.0
  %3268 = vmatpush1.msra.mxu0 0.0
  %3269 = vmatprep.subr.mxu0 0.0
  %3270 = vmatpush1.msra.mxu0 0.0
  %3271 = vmatprep.subr.mxu0 0.0
  %3272 = vmatpush1.msra.mxu0 0.0
  %3273 = vmatprep.subr.mxu0 0.0
  %3274 = vmatpush1.msra.mxu0 0.0
  %3275 = vmatprep.subr.mxu0 0.0
  %3276 = vmatpush1.msra.mxu0 0.0
  %3277 = vmatprep.subr.mxu0 0.0
  %3278 = vmatpush1.msra.mxu0 0.0
  %3279 = vmatprep.subr.mxu0 0.0
  %3280 = vmatpush1.msra.mxu0 0.0
  %3281 = vmatprep.subr.mxu0 0.0
  %3282 = vmatpush1.msra.mxu0 0.0
  %3283 = vmatprep.subr.mxu0 0.0
  %3284 = vmatpush1.msra.mxu0 0.0
  %3285 = vmatprep.subr.mxu0 0.0
  %3286 = vmatpush1.msra.mxu0 0.0
  %3287 = vmatprep.subr.mxu0 0.0
  %3288 = vmatpush1.msra.mxu0 0.0
  %3289 = vmatprep.subr.mxu0 0.0
  %3290 = vmatpush1.msra.mxu0 0.0
  %3291 = vmatprep.subr.mxu0 0.0
  %3292 = vmatpush1.msra.mxu0 0.0
  %3293 = vmatprep.subr.mxu0 0.0
  %3294 = vmatpush1.msra.mxu0 0.0
  %3295 = vmatprep.subr.mxu0 0.0
  %3296 = vmatpush1.msra.mxu0 0.0
  %3297 = vmatprep.subr.mxu0 0.0
  %3298 = vmatpush1.msra.mxu0 0.0
  %3299 = vmatprep.subr.mxu0 0.0
  %3300 = vmatpush1.msra.mxu0 0.0
  %3301 = vmatprep.subr.mxu0 0.0
  %3302 = vmatpush1.msra.mxu0 0.0
  %3303 = vmatprep.subr.mxu0 0.0
  %3304 = vmatpush1.msra.mxu0 0.0
  %3305 = vmatprep.subr.mxu0 0.0
  %3306 = vmatpush1.msra.mxu0 0.0
  %3307 = vmatprep.subr.mxu0 0.0
  %3308 = vmatpush1.msra.mxu0 0.0
  %3309 = vmatprep.subr.mxu0 0.0
  %3310 = vmatpush1.msra.mxu0 0.0
  %3311 = vmatprep.mubr.f32.mxu0 0.0
  %3312 = vmatmul.mubr.f32.gmra.mrb[0].mxu0 %v3242
  %v3313 = vpop.f32.mrb[0].mxu0
  %v3314 = vadd.f32 0.0, %v3313
  %v3315 = vpop.f32.mrb[0].mxu0
  %3316 = vmatprep.mubr.f32.mxu0 0.0
  %3317 = vmatmul.mubr.f32.gmra.mrb[0].mxu0 %v3245
  %v3318 = vpop.f32.mrb[0].mxu0
  %v3319 = vadd.f32 0.0, %v3318
  %v3320 = vpop.f32.mrb[0].mxu0
  %3321 = vdwg.mxu0
  %3322 = vset.pattern.permute.xlu0 1
  %3323 = vperm.xlu0 %3322, %v3181
  %v3324 = vpop.permute.xlu0 %3323
  %3326 = vset.pattern.permute.xlu0 1
  %3327 = vperm.xlu0 %3326, %v3182
  %v3328 = vpop.permute.xlu0 %3327
  %v3330 = vmul.f32 %v29, %v3324
  %v3331 = vmul.f32 %v30, %v3328
  %3332 = vset.pattern.permute.xlu0 5
  %3333 = vperm.xlu0 %3332, %v2451
  %v3334 = vpop.permute.xlu0 %3333
  %3336 = vset.pattern.permute.xlu0 5
  %3337 = vperm.xlu0 %3336, %v2456
  %v3338 = vpop.permute.xlu0 %3337
  %v3340 = vadd.f32 %v3334, %v3330
  %v3341 = vadd.f32 %v3338, %v3331
  %v3342 = vadd.f32 %v2657, %v3167
  %v3343 = vadd.f32 %v2662, %v3168
  %v3344 = vadd.f32 %v3342, %v3340
  %v3345 = vadd.f32 %v3343, %v3341
  %v3346 = vmul.f32 %v3344, 0.35355338
  %v3347 = vmul.f32 %v3345, 0.35355338
  %v3348 = vadd.f32 %v3346, %v32
  %v3349 = vadd.f32 %v3347, %v33
  %v3350 = vsel %vm1239, %v3348, -inf
  %3351 = vmax.xlane.f32.xlu0 %v3350
  %v3352 = vpop.xlane.xlu0 %3351
  %v3353 = vsel %vm1239, %v3349, -inf
  %3354 = vmax.xlane.f32.xlu0 %v3353
  %v3355 = vpop.xlane.xlu0 %3354
  %v3356 = vsub.f32 %v3348, %v3352
  %v3357 = vsub.f32 %v3349, %v3355
  %v3358 = vmul.f32 %v3356, 1.442695
  %v3359 = vpow.pop %v3358
  %v3360 = vmul.f32 %v3357, 1.442695
  %v3361 = vpow.pop %v3360
  %v3362 = vsel %vm1239, %v3359, 0.0
  %3363 = vadd.xlane.f32.xlu0 %v3362
  %v3364 = vpop.xlane.xlu0 %3363
  %v3365 = vsel %vm1239, %v3361, 0.0
  %3366 = vadd.xlane.f32.xlu0 %v3365
  %v3367 = vpop.xlane.xlu0 %3366
  %v3368 = vrcp.pop %v3364
  %v3369 = vmul.f32 %v3359, %v3368
  %v3370 = vrcp.pop %v3367
  %v3371 = vmul.f32 %v3361, %v3370
  %3372 = vrot.lane.b32.xlu0 %v2345, 56
  %v3373 = vpop.permute.xlu0 %3372
  %3374 = vrot.lane.b32.xlu0 %v2350, 56
  %v3375 = vpop.permute.xlu0 %3374
  %v3379 = vsel %vm1239, %v3369, 0
  %v3382 = vsel %vm1239, %v3371, 0
  %3384 = vmatprep.subr.mxu0 0.0
  %3385 = vmatpush1.msra.mxu0 %v3373
  %3386 = vmatprep.subr.mxu0 0.0
  %3387 = vmatpush1.msra.mxu0 %v3375
  %3388 = vmatprep.subr.mxu0 0.0
  %3389 = vmatpush1.msra.mxu0 0.0
  %3390 = vmatprep.subr.mxu0 0.0
  %3391 = vmatpush1.msra.mxu0 0.0
  %3392 = vmatprep.subr.mxu0 0.0
  %3393 = vmatpush1.msra.mxu0 0.0
  %3394 = vmatprep.subr.mxu0 0.0
  %3395 = vmatpush1.msra.mxu0 0.0
  %3396 = vmatprep.subr.mxu0 0.0
  %3397 = vmatpush1.msra.mxu0 0.0
  %3398 = vmatprep.subr.mxu0 0.0
  %3399 = vmatpush1.msra.mxu0 0.0
  %3400 = vmatprep.subr.mxu0 0.0
  %3401 = vmatpush1.msra.mxu0 0.0
  %3402 = vmatprep.subr.mxu0 0.0
  %3403 = vmatpush1.msra.mxu0 0.0
  %3404 = vmatprep.subr.mxu0 0.0
  %3405 = vmatpush1.msra.mxu0 0.0
  %3406 = vmatprep.subr.mxu0 0.0
  %3407 = vmatpush1.msra.mxu0 0.0
  %3408 = vmatprep.subr.mxu0 0.0
  %3409 = vmatpush1.msra.mxu0 0.0
  %3410 = vmatprep.subr.mxu0 0.0
  %3411 = vmatpush1.msra.mxu0 0.0
  %3412 = vmatprep.subr.mxu0 0.0
  %3413 = vmatpush1.msra.mxu0 0.0
  %3414 = vmatprep.subr.mxu0 0.0
  %3415 = vmatpush1.msra.mxu0 0.0
  %3416 = vmatprep.subr.mxu0 0.0
  %3417 = vmatpush1.msra.mxu0 0.0
  %3418 = vmatprep.subr.mxu0 0.0
  %3419 = vmatpush1.msra.mxu0 0.0
  %3420 = vmatprep.subr.mxu0 0.0
  %3421 = vmatpush1.msra.mxu0 0.0
  %3422 = vmatprep.subr.mxu0 0.0
  %3423 = vmatpush1.msra.mxu0 0.0
  %3424 = vmatprep.subr.mxu0 0.0
  %3425 = vmatpush1.msra.mxu0 0.0
  %3426 = vmatprep.subr.mxu0 0.0
  %3427 = vmatpush1.msra.mxu0 0.0
  %3428 = vmatprep.subr.mxu0 0.0
  %3429 = vmatpush1.msra.mxu0 0.0
  %3430 = vmatprep.subr.mxu0 0.0
  %3431 = vmatpush1.msra.mxu0 0.0
  %3432 = vmatprep.subr.mxu0 0.0
  %3433 = vmatpush1.msra.mxu0 0.0
  %3434 = vmatprep.subr.mxu0 0.0
  %3435 = vmatpush1.msra.mxu0 0.0
  %3436 = vmatprep.subr.mxu0 0.0
  %3437 = vmatpush1.msra.mxu0 0.0
  %3438 = vmatprep.subr.mxu0 0.0
  %3439 = vmatpush1.msra.mxu0 0.0
  %3440 = vmatprep.subr.mxu0 0.0
  %3441 = vmatpush1.msra.mxu0 0.0
  %3442 = vmatprep.subr.mxu0 0.0
  %3443 = vmatpush1.msra.mxu0 0.0
  %3444 = vmatprep.subr.mxu0 0.0
  %3445 = vmatpush1.msra.mxu0 0.0
  %3446 = vmatprep.subr.mxu0 0.0
  %3447 = vmatpush1.msra.mxu0 0.0
  %3448 = vmatprep.mubr.f32.mxu0 0.0
  %3449 = vmatmul.mubr.f32.gmra.mrb[0].mxu0 %v3379
  %v3450 = vpop.f32.mrb[0].mxu0
  %v3451 = vadd.f32 0.0, %v3450
  %v3452 = vpop.f32.mrb[0].mxu0
  %3453 = vmatprep.mubr.f32.mxu0 0.0
  %3454 = vmatmul.mubr.f32.gmra.mrb[0].mxu0 %v3382
  %v3455 = vpop.f32.mrb[0].mxu0
  %v3456 = vadd.f32 0.0, %v3455
  %v3457 = vpop.f32.mrb[0].mxu0
  %3458 = vdwg.mxu0
  %v3460 = vsel %vm363, %v3451, 0
  %v3463 = vsel %vm363, %v3456, 0
  %3465 = vmatprep.subr.mxu0 0.0
  %3466 = vmatpush1.msra.mxu0 %v37
  %3467 = vmatprep.subr.mxu0 0.0
  %3468 = vmatpush1.msra.mxu0 0.0
  %3469 = vmatprep.subr.mxu0 0.0
  %3470 = vmatpush1.msra.mxu0 0.0
  %3471 = vmatprep.subr.mxu0 0.0
  %3472 = vmatpush1.msra.mxu0 0.0
  %3473 = vmatprep.subr.mxu0 0.0
  %3474 = vmatpush1.msra.mxu0 0.0
  %3475 = vmatprep.subr.mxu0 0.0
  %3476 = vmatpush1.msra.mxu0 0.0
  %3477 = vmatprep.subr.mxu0 0.0
  %3478 = vmatpush1.msra.mxu0 0.0
  %3479 = vmatprep.subr.mxu0 0.0
  %3480 = vmatpush1.msra.mxu0 0.0
  %3481 = vmatprep.subr.mxu0 0.0
  %3482 = vmatpush1.msra.mxu0 0.0
  %3483 = vmatprep.subr.mxu0 0.0
  %3484 = vmatpush1.msra.mxu0 0.0
  %3485 = vmatprep.subr.mxu0 0.0
  %3486 = vmatpush1.msra.mxu0 0.0
  %3487 = vmatprep.subr.mxu0 0.0
  %3488 = vmatpush1.msra.mxu0 0.0
  %3489 = vmatprep.subr.mxu0 0.0
  %3490 = vmatpush1.msra.mxu0 0.0
  %3491 = vmatprep.subr.mxu0 0.0
  %3492 = vmatpush1.msra.mxu0 0.0
  %3493 = vmatprep.subr.mxu0 0.0
  %3494 = vmatpush1.msra.mxu0 0.0
  %3495 = vmatprep.subr.mxu0 0.0
  %3496 = vmatpush1.msra.mxu0 0.0
  %3497 = vmatprep.subr.mxu0 0.0
  %3498 = vmatpush1.msra.mxu0 0.0
  %3499 = vmatprep.subr.mxu0 0.0
  %3500 = vmatpush1.msra.mxu0 0.0
  %3501 = vmatprep.subr.mxu0 0.0
  %3502 = vmatpush1.msra.mxu0 0.0
  %3503 = vmatprep.subr.mxu0 0.0
  %3504 = vmatpush1.msra.mxu0 0.0
  %3505 = vmatprep.subr.mxu0 0.0
  %3506 = vmatpush1.msra.mxu0 0.0
  %3507 = vmatprep.subr.mxu0 0.0
  %3508 = vmatpush1.msra.mxu0 0.0
  %3509 = vmatprep.subr.mxu0 0.0
  %3510 = vmatpush1.msra.mxu0 0.0
  %3511 = vmatprep.subr.mxu0 0.0
  %3512 = vmatpush1.msra.mxu0 0.0
  %3513 = vmatprep.subr.mxu0 0.0
  %3514 = vmatpush1.msra.mxu0 0.0
  %3515 = vmatprep.subr.mxu0 0.0
  %3516 = vmatpush1.msra.mxu0 0.0
  %3517 = vmatprep.subr.mxu0 0.0
  %3518 = vmatpush1.msra.mxu0 0.0
  %3519 = vmatprep.subr.mxu0 0.0
  %3520 = vmatpush1.msra.mxu0 0.0
  %3521 = vmatprep.subr.mxu0 0.0
  %3522 = vmatpush1.msra.mxu0 0.0
  %3523 = vmatprep.subr.mxu0 0.0
  %3524 = vmatpush1.msra.mxu0 0.0
  %3525 = vmatprep.subr.mxu0 0.0
  %3526 = vmatpush1.msra.mxu0 0.0
  %3527 = vmatprep.subr.mxu0 0.0
  %3528 = vmatpush1.msra.mxu0 0.0
  %3529 = vmatprep.mubr.f32.mxu0 0.0
  %3530 = vmatmul.mubr.f32.gmra.mrb[0].mxu0 %v3460
  %v3531 = vpop.f32.mrb[0].mxu0
  %v3532 = vadd.f32 0.0, %v3531
  %v3533 = vpop.f32.mrb[0].mxu0
  %3534 = vmatprep.mubr.f32.mxu0 0.0
  %3535 = vmatmul.mubr.f32.gmra.mrb[0].mxu0 %v3463
  %v3536 = vpop.f32.mrb[0].mxu0
  %v3537 = vadd.f32 0.0, %v3536
  %v3538 = vpop.f32.mrb[0].mxu0
  %3539 = vdwg.mxu0
  %v3541 = vsel %vm363, %v3314, 0
  %v3544 = vsel %vm363, %v3319, 0
  %3546 = vmatprep.subr.mxu0 0.0
  %3547 = vmatpush1.msra.mxu0 %v35
  %3548 = vmatprep.subr.mxu0 0.0
  %3549 = vmatpush1.msra.mxu0 0.0
  %3550 = vmatprep.subr.mxu0 0.0
  %3551 = vmatpush1.msra.mxu0 0.0
  %3552 = vmatprep.subr.mxu0 0.0
  %3553 = vmatpush1.msra.mxu0 0.0
  %3554 = vmatprep.subr.mxu0 0.0
  %3555 = vmatpush1.msra.mxu0 0.0
  %3556 = vmatprep.subr.mxu0 0.0
  %3557 = vmatpush1.msra.mxu0 0.0
  %3558 = vmatprep.subr.mxu0 0.0
  %3559 = vmatpush1.msra.mxu0 0.0
  %3560 = vmatprep.subr.mxu0 0.0
  %3561 = vmatpush1.msra.mxu0 0.0
  %3562 = vmatprep.subr.mxu0 0.0
  %3563 = vmatpush1.msra.mxu0 0.0
  %3564 = vmatprep.subr.mxu0 0.0
  %3565 = vmatpush1.msra.mxu0 0.0
  %3566 = vmatprep.subr.mxu0 0.0
  %3567 = vmatpush1.msra.mxu0 0.0
  %3568 = vmatprep.subr.mxu0 0.0
  %3569 = vmatpush1.msra.mxu0 0.0
  %3570 = vmatprep.subr.mxu0 0.0
  %3571 = vmatpush1.msra.mxu0 0.0
  %3572 = vmatprep.subr.mxu0 0.0
  %3573 = vmatpush1.msra.mxu0 0.0
  %3574 = vmatprep.subr.mxu0 0.0
  %3575 = vmatpush1.msra.mxu0 0.0
  %3576 = vmatprep.subr.mxu0 0.0
  %3577 = vmatpush1.msra.mxu0 0.0
  %3578 = vmatprep.subr.mxu0 0.0
  %3579 = vmatpush1.msra.mxu0 0.0
  %3580 = vmatprep.subr.mxu0 0.0
  %3581 = vmatpush1.msra.mxu0 0.0
  %3582 = vmatprep.subr.mxu0 0.0
  %3583 = vmatpush1.msra.mxu0 0.0
  %3584 = vmatprep.subr.mxu0 0.0
  %3585 = vmatpush1.msra.mxu0 0.0
  %3586 = vmatprep.subr.mxu0 0.0
  %3587 = vmatpush1.msra.mxu0 0.0
  %3588 = vmatprep.subr.mxu0 0.0
  %3589 = vmatpush1.msra.mxu0 0.0
  %3590 = vmatprep.subr.mxu0 0.0
  %3591 = vmatpush1.msra.mxu0 0.0
  %3592 = vmatprep.subr.mxu0 0.0
  %3593 = vmatpush1.msra.mxu0 0.0
  %3594 = vmatprep.subr.mxu0 0.0
  %3595 = vmatpush1.msra.mxu0 0.0
  %3596 = vmatprep.subr.mxu0 0.0
  %3597 = vmatpush1.msra.mxu0 0.0
  %3598 = vmatprep.subr.mxu0 0.0
  %3599 = vmatpush1.msra.mxu0 0.0
  %3600 = vmatprep.subr.mxu0 0.0
  %3601 = vmatpush1.msra.mxu0 0.0
  %3602 = vmatprep.subr.mxu0 0.0
  %3603 = vmatpush1.msra.mxu0 0.0
  %3604 = vmatprep.subr.mxu0 0.0
  %3605 = vmatpush1.msra.mxu0 0.0
  %3606 = vmatprep.subr.mxu0 0.0
  %3607 = vmatpush1.msra.mxu0 0.0
  %3608 = vmatprep.subr.mxu0 0.0
  %3609 = vmatpush1.msra.mxu0 0.0
  %3610 = vmatprep.mubr.f32.mxu0 0.0
  %3611 = vmatmul.mubr.f32.gmra.mrb[0].mxu0 %v3541
  %v3612 = vpop.f32.mrb[0].mxu0
  %v3613 = vadd.f32 %v3532, %v3612
  %v3614 = vpop.f32.mrb[0].mxu0
  %3615 = vmatprep.mubr.f32.mxu0 0.0
  %3616 = vmatmul.mubr.f32.gmra.mrb[0].mxu0 %v3544
  %v3617 = vpop.f32.mrb[0].mxu0
  %v3618 = vadd.f32 %v3537, %v3617
  %v3619 = vpop.f32.mrb[0].mxu0
  %3620 = vdwg.mxu0
  %3621 = vset.pattern.permute.xlu0 2
  %3622 = vperm.xlu0 %3621, %v3181
  %v3623 = vpop.permute.xlu0 %3622
  %3625 = vset.pattern.permute.xlu0 2
  %3626 = vperm.xlu0 %3625, %v3182
  %v3627 = vpop.permute.xlu0 %3626
  %v3629 = vmul.f32 %v29, %v3623
  %v3630 = vmul.f32 %v30, %v3627
  %3631 = vset.pattern.permute.xlu0 6
  %3632 = vperm.xlu0 %3631, %v2451
  %v3633 = vpop.permute.xlu0 %3632
  %3635 = vset.pattern.permute.xlu0 6
  %3636 = vperm.xlu0 %3635, %v2456
  %v3637 = vpop.permute.xlu0 %3636
  %v3639 = vadd.f32 %v3633, %v3629
  %v3640 = vadd.f32 %v3637, %v3630
  %v3641 = vadd.f32 %v2766, %v3169
  %v3642 = vadd.f32 %v2771, %v3170
  %v3643 = vadd.f32 %v3641, %v3639
  %v3644 = vadd.f32 %v3642, %v3640
  %v3645 = vmul.f32 %v3643, 0.35355338
  %v3646 = vmul.f32 %v3644, 0.35355338
  %v3647 = vadd.f32 %v3645, %v32
  %v3648 = vadd.f32 %v3646, %v33
  %v3649 = vsel %vm1239, %v3647, -inf
  %3650 = vmax.xlane.f32.xlu0 %v3649
  %v3651 = vpop.xlane.xlu0 %3650
  %v3652 = vsel %vm1239, %v3648, -inf
  %3653 = vmax.xlane.f32.xlu0 %v3652
  %v3654 = vpop.xlane.xlu0 %3653
  %v3655 = vsub.f32 %v3647, %v3651
  %v3656 = vsub.f32 %v3648, %v3654
  %v3657 = vmul.f32 %v3655, 1.442695
  %v3658 = vpow.pop %v3657
  %v3659 = vmul.f32 %v3656, 1.442695
  %v3660 = vpow.pop %v3659
  %v3661 = vsel %vm1239, %v3658, 0.0
  %3662 = vadd.xlane.f32.xlu0 %v3661
  %v3663 = vpop.xlane.xlu0 %3662
  %v3664 = vsel %vm1239, %v3660, 0.0
  %3665 = vadd.xlane.f32.xlu0 %v3664
  %v3666 = vpop.xlane.xlu0 %3665
  %v3667 = vrcp.pop %v3663
  %v3668 = vmul.f32 %v3658, %v3667
  %v3669 = vrcp.pop %v3666
  %v3670 = vmul.f32 %v3660, %v3669
  %3671 = vrot.lane.b32.xlu0 %v2345, 48
  %v3672 = vpop.permute.xlu0 %3671
  %3673 = vrot.lane.b32.xlu0 %v2350, 48
  %v3674 = vpop.permute.xlu0 %3673
  %v3678 = vsel %vm1239, %v3668, 0
  %v3681 = vsel %vm1239, %v3670, 0
  %3683 = vmatprep.subr.mxu0 0.0
  %3684 = vmatpush1.msra.mxu0 %v3672
  %3685 = vmatprep.subr.mxu0 0.0
  %3686 = vmatpush1.msra.mxu0 %v3674
  %3687 = vmatprep.subr.mxu0 0.0
  %3688 = vmatpush1.msra.mxu0 0.0
  %3689 = vmatprep.subr.mxu0 0.0
  %3690 = vmatpush1.msra.mxu0 0.0
  %3691 = vmatprep.subr.mxu0 0.0
  %3692 = vmatpush1.msra.mxu0 0.0
  %3693 = vmatprep.subr.mxu0 0.0
  %3694 = vmatpush1.msra.mxu0 0.0
  %3695 = vmatprep.subr.mxu0 0.0
  %3696 = vmatpush1.msra.mxu0 0.0
  %3697 = vmatprep.subr.mxu0 0.0
  %3698 = vmatpush1.msra.mxu0 0.0
  %3699 = vmatprep.subr.mxu0 0.0
  %3700 = vmatpush1.msra.mxu0 0.0
  %3701 = vmatprep.subr.mxu0 0.0
  %3702 = vmatpush1.msra.mxu0 0.0
  %3703 = vmatprep.subr.mxu0 0.0
  %3704 = vmatpush1.msra.mxu0 0.0
  %3705 = vmatprep.subr.mxu0 0.0
  %3706 = vmatpush1.msra.mxu0 0.0
  %3707 = vmatprep.subr.mxu0 0.0
  %3708 = vmatpush1.msra.mxu0 0.0
  %3709 = vmatprep.subr.mxu0 0.0
  %3710 = vmatpush1.msra.mxu0 0.0
  %3711 = vmatprep.subr.mxu0 0.0
  %3712 = vmatpush1.msra.mxu0 0.0
  %3713 = vmatprep.subr.mxu0 0.0
  %3714 = vmatpush1.msra.mxu0 0.0
  %3715 = vmatprep.subr.mxu0 0.0
  %3716 = vmatpush1.msra.mxu0 0.0
  %3717 = vmatprep.subr.mxu0 0.0
  %3718 = vmatpush1.msra.mxu0 0.0
  %3719 = vmatprep.subr.mxu0 0.0
  %3720 = vmatpush1.msra.mxu0 0.0
  %3721 = vmatprep.subr.mxu0 0.0
  %3722 = vmatpush1.msra.mxu0 0.0
  %3723 = vmatprep.subr.mxu0 0.0
  %3724 = vmatpush1.msra.mxu0 0.0
  %3725 = vmatprep.subr.mxu0 0.0
  %3726 = vmatpush1.msra.mxu0 0.0
  %3727 = vmatprep.subr.mxu0 0.0
  %3728 = vmatpush1.msra.mxu0 0.0
  %3729 = vmatprep.subr.mxu0 0.0
  %3730 = vmatpush1.msra.mxu0 0.0
  %3731 = vmatprep.subr.mxu0 0.0
  %3732 = vmatpush1.msra.mxu0 0.0
  %3733 = vmatprep.subr.mxu0 0.0
  %3734 = vmatpush1.msra.mxu0 0.0
  %3735 = vmatprep.subr.mxu0 0.0
  %3736 = vmatpush1.msra.mxu0 0.0
  %3737 = vmatprep.subr.mxu0 0.0
  %3738 = vmatpush1.msra.mxu0 0.0
  %3739 = vmatprep.subr.mxu0 0.0
  %3740 = vmatpush1.msra.mxu0 0.0
  %3741 = vmatprep.subr.mxu0 0.0
  %3742 = vmatpush1.msra.mxu0 0.0
  %3743 = vmatprep.subr.mxu0 0.0
  %3744 = vmatpush1.msra.mxu0 0.0
  %3745 = vmatprep.subr.mxu0 0.0
  %3746 = vmatpush1.msra.mxu0 0.0
  %3747 = vmatprep.mubr.f32.mxu0 0.0
  %3748 = vmatmul.mubr.f32.gmra.mrb[0].mxu0 %v3678
  %v3749 = vpop.f32.mrb[0].mxu0
  %v3750 = vadd.f32 0.0, %v3749
  %v3751 = vpop.f32.mrb[0].mxu0
  %3752 = vmatprep.mubr.f32.mxu0 0.0
  %3753 = vmatmul.mubr.f32.gmra.mrb[0].mxu0 %v3681
  %v3754 = vpop.f32.mrb[0].mxu0
  %v3755 = vadd.f32 0.0, %v3754
  %v3756 = vpop.f32.mrb[0].mxu0
  %3757 = vdwg.mxu0
  %v3759 = vsel %vm363, %v3750, 0
  %v3762 = vsel %vm363, %v3755, 0
  %3764 = vmatprep.subr.mxu0 0.0
  %3765 = vmatpush1.msra.mxu0 %v39
  %3766 = vmatprep.subr.mxu0 0.0
  %3767 = vmatpush1.msra.mxu0 0.0
  %3768 = vmatprep.subr.mxu0 0.0
  %3769 = vmatpush1.msra.mxu0 0.0
  %3770 = vmatprep.subr.mxu0 0.0
  %3771 = vmatpush1.msra.mxu0 0.0
  %3772 = vmatprep.subr.mxu0 0.0
  %3773 = vmatpush1.msra.mxu0 0.0
  %3774 = vmatprep.subr.mxu0 0.0
  %3775 = vmatpush1.msra.mxu0 0.0
  %3776 = vmatprep.subr.mxu0 0.0
  %3777 = vmatpush1.msra.mxu0 0.0
  %3778 = vmatprep.subr.mxu0 0.0
  %3779 = vmatpush1.msra.mxu0 0.0
  %3780 = vmatprep.subr.mxu0 0.0
  %3781 = vmatpush1.msra.mxu0 0.0
  %3782 = vmatprep.subr.mxu0 0.0
  %3783 = vmatpush1.msra.mxu0 0.0
  %3784 = vmatprep.subr.mxu0 0.0
  %3785 = vmatpush1.msra.mxu0 0.0
  %3786 = vmatprep.subr.mxu0 0.0
  %3787 = vmatpush1.msra.mxu0 0.0
  %3788 = vmatprep.subr.mxu0 0.0
  %3789 = vmatpush1.msra.mxu0 0.0
  %3790 = vmatprep.subr.mxu0 0.0
  %3791 = vmatpush1.msra.mxu0 0.0
  %3792 = vmatprep.subr.mxu0 0.0
  %3793 = vmatpush1.msra.mxu0 0.0
  %3794 = vmatprep.subr.mxu0 0.0
  %3795 = vmatpush1.msra.mxu0 0.0
  %3796 = vmatprep.subr.mxu0 0.0
  %3797 = vmatpush1.msra.mxu0 0.0
  %3798 = vmatprep.subr.mxu0 0.0
  %3799 = vmatpush1.msra.mxu0 0.0
  %3800 = vmatprep.subr.mxu0 0.0
  %3801 = vmatpush1.msra.mxu0 0.0
  %3802 = vmatprep.subr.mxu0 0.0
  %3803 = vmatpush1.msra.mxu0 0.0
  %3804 = vmatprep.subr.mxu0 0.0
  %3805 = vmatpush1.msra.mxu0 0.0
  %3806 = vmatprep.subr.mxu0 0.0
  %3807 = vmatpush1.msra.mxu0 0.0
  %3808 = vmatprep.subr.mxu0 0.0
  %3809 = vmatpush1.msra.mxu0 0.0
  %3810 = vmatprep.subr.mxu0 0.0
  %3811 = vmatpush1.msra.mxu0 0.0
  %3812 = vmatprep.subr.mxu0 0.0
  %3813 = vmatpush1.msra.mxu0 0.0
  %3814 = vmatprep.subr.mxu0 0.0
  %3815 = vmatpush1.msra.mxu0 0.0
  %3816 = vmatprep.subr.mxu0 0.0
  %3817 = vmatpush1.msra.mxu0 0.0
  %3818 = vmatprep.subr.mxu0 0.0
  %3819 = vmatpush1.msra.mxu0 0.0
  %3820 = vmatprep.subr.mxu0 0.0
  %3821 = vmatpush1.msra.mxu0 0.0
  %3822 = vmatprep.subr.mxu0 0.0
  %3823 = vmatpush1.msra.mxu0 0.0
  %3824 = vmatprep.subr.mxu0 0.0
  %3825 = vmatpush1.msra.mxu0 0.0
  %3826 = vmatprep.subr.mxu0 0.0
  %3827 = vmatpush1.msra.mxu0 0.0
  %3828 = vmatprep.mubr.f32.mxu0 0.0
  %3829 = vmatmul.mubr.f32.gmra.mrb[0].mxu0 %v3759
  %v3830 = vpop.f32.mrb[0].mxu0
  %v3831 = vadd.f32 0.0, %v3830
  %v3832 = vpop.f32.mrb[0].mxu0
  %3833 = vmatprep.mubr.f32.mxu0 0.0
  %3834 = vmatmul.mubr.f32.gmra.mrb[0].mxu0 %v3762
  %v3835 = vpop.f32.mrb[0].mxu0
  %v3836 = vadd.f32 0.0, %v3835
  %v3837 = vpop.f32.mrb[0].mxu0
  %3838 = vdwg.mxu0
  %v3839 = vadd.f32 %v3613, %v3831
  %v3840 = vadd.f32 %v3618, %v3836
  %3841 = vset.pattern.permute.xlu0 3
  %3842 = vperm.xlu0 %3841, %v3181
  %v3843 = vpop.permute.xlu0 %3842
  %3845 = vset.pattern.permute.xlu0 3
  %3846 = vperm.xlu0 %3845, %v3182
  %v3847 = vpop.permute.xlu0 %3846
  %v3849 = vmul.f32 %v29, %v3843
  %v3850 = vmul.f32 %v30, %v3847
  %3851 = vset.pattern.permute.xlu0 7
  %3852 = vperm.xlu0 %3851, %v2451
  %v3853 = vpop.permute.xlu0 %3852
  %3855 = vset.pattern.permute.xlu0 7
  %3856 = vperm.xlu0 %3855, %v2456
  %v3857 = vpop.permute.xlu0 %3856
  %v3859 = vadd.f32 %v3853, %v3849
  %v3860 = vadd.f32 %v3857, %v3850
  %v3861 = vadd.f32 %v2875, %v3171
  %v3862 = vadd.f32 %v2880, %v3172
  %v3863 = vadd.f32 %v3861, %v3859
  %v3864 = vadd.f32 %v3862, %v3860
  %v3865 = vmul.f32 %v3863, 0.35355338
  %v3866 = vmul.f32 %v3864, 0.35355338
  %v3867 = vadd.f32 %v3865, %v32
  %v3868 = vadd.f32 %v3866, %v33
  %v3869 = vsel %vm1239, %v3867, -inf
  %3870 = vmax.xlane.f32.xlu0 %v3869
  %v3871 = vpop.xlane.xlu0 %3870
  %v3872 = vsel %vm1239, %v3868, -inf
  %3873 = vmax.xlane.f32.xlu0 %v3872
  %v3874 = vpop.xlane.xlu0 %3873
  %v3875 = vsub.f32 %v3867, %v3871
  %v3876 = vsub.f32 %v3868, %v3874
  %v3877 = vmul.f32 %v3875, 1.442695
  %v3878 = vpow.pop %v3877
  %v3879 = vmul.f32 %v3876, 1.442695
  %v3880 = vpow.pop %v3879
  %v3881 = vsel %vm1239, %v3878, 0.0
  %3882 = vadd.xlane.f32.xlu0 %v3881
  %v3883 = vpop.xlane.xlu0 %3882
  %v3884 = vsel %vm1239, %v3880, 0.0
  %3885 = vadd.xlane.f32.xlu0 %v3884
  %v3886 = vpop.xlane.xlu0 %3885
  %v3887 = vrcp.pop %v3883
  %v3888 = vmul.f32 %v3878, %v3887
  %v3889 = vrcp.pop %v3886
  %v3890 = vmul.f32 %v3880, %v3889
  %3891 = vrot.lane.b32.xlu0 %v2345, 40
  %v3892 = vpop.permute.xlu0 %3891
  %3893 = vrot.lane.b32.xlu0 %v2350, 40
  %v3894 = vpop.permute.xlu0 %3893
  %v3898 = vsel %vm1239, %v3888, 0
  %v3901 = vsel %vm1239, %v3890, 0
  %3903 = vmatprep.subr.mxu0 0.0
  %3904 = vmatpush1.msra.mxu0 %v3892
  %3905 = vmatprep.subr.mxu0 0.0
  %3906 = vmatpush1.msra.mxu0 %v3894
  %3907 = vmatprep.subr.mxu0 0.0
  %3908 = vmatpush1.msra.mxu0 0.0
  %3909 = vmatprep.subr.mxu0 0.0
  %3910 = vmatpush1.msra.mxu0 0.0
  %3911 = vmatprep.subr.mxu0 0.0
  %3912 = vmatpush1.msra.mxu0 0.0
  %3913 = vmatprep.subr.mxu0 0.0
  %3914 = vmatpush1.msra.mxu0 0.0
  %3915 = vmatprep.subr.mxu0 0.0
  %3916 = vmatpush1.msra.mxu0 0.0
  %3917 = vmatprep.subr.mxu0 0.0
  %3918 = vmatpush1.msra.mxu0 0.0
  %3919 = vmatprep.subr.mxu0 0.0
  %3920 = vmatpush1.msra.mxu0 0.0
  %3921 = vmatprep.subr.mxu0 0.0
  %3922 = vmatpush1.msra.mxu0 0.0
  %3923 = vmatprep.subr.mxu0 0.0
  %3924 = vmatpush1.msra.mxu0 0.0
  %3925 = vmatprep.subr.mxu0 0.0
  %3926 = vmatpush1.msra.mxu0 0.0
  %3927 = vmatprep.subr.mxu0 0.0
  %3928 = vmatpush1.msra.mxu0 0.0
  %3929 = vmatprep.subr.mxu0 0.0
  %3930 = vmatpush1.msra.mxu0 0.0
  %3931 = vmatprep.subr.mxu0 0.0
  %3932 = vmatpush1.msra.mxu0 0.0
  %3933 = vmatprep.subr.mxu0 0.0
  %3934 = vmatpush1.msra.mxu0 0.0
  %3935 = vmatprep.subr.mxu0 0.0
  %3936 = vmatpush1.msra.mxu0 0.0
  %3937 = vmatprep.subr.mxu0 0.0
  %3938 = vmatpush1.msra.mxu0 0.0
  %3939 = vmatprep.subr.mxu0 0.0
  %3940 = vmatpush1.msra.mxu0 0.0
  %3941 = vmatprep.subr.mxu0 0.0
  %3942 = vmatpush1.msra.mxu0 0.0
  %3943 = vmatprep.subr.mxu0 0.0
  %3944 = vmatpush1.msra.mxu0 0.0
  %3945 = vmatprep.subr.mxu0 0.0
  %3946 = vmatpush1.msra.mxu0 0.0
  %3947 = vmatprep.subr.mxu0 0.0
  %3948 = vmatpush1.msra.mxu0 0.0
  %3949 = vmatprep.subr.mxu0 0.0
  %3950 = vmatpush1.msra.mxu0 0.0
  %3951 = vmatprep.subr.mxu0 0.0
  %3952 = vmatpush1.msra.mxu0 0.0
  %3953 = vmatprep.subr.mxu0 0.0
  %3954 = vmatpush1.msra.mxu0 0.0
  %3955 = vmatprep.subr.mxu0 0.0
  %3956 = vmatpush1.msra.mxu0 0.0
  %3957 = vmatprep.subr.mxu0 0.0
  %3958 = vmatpush1.msra.mxu0 0.0
  %3959 = vmatprep.subr.mxu0 0.0
  %3960 = vmatpush1.msra.mxu0 0.0
  %3961 = vmatprep.subr.mxu0 0.0
  %3962 = vmatpush1.msra.mxu0 0.0
  %3963 = vmatprep.subr.mxu0 0.0
  %3964 = vmatpush1.msra.mxu0 0.0
  %3965 = vmatprep.subr.mxu0 0.0
  %3966 = vmatpush1.msra.mxu0 0.0
  %3967 = vmatprep.mubr.f32.mxu0 0.0
  %3968 = vmatmul.mubr.f32.gmra.mrb[0].mxu0 %v3898
  %v3969 = vpop.f32.mrb[0].mxu0
  %v3970 = vadd.f32 0.0, %v3969
  %v3971 = vpop.f32.mrb[0].mxu0
  %3972 = vmatprep.mubr.f32.mxu0 0.0
  %3973 = vmatmul.mubr.f32.gmra.mrb[0].mxu0 %v3901
  %v3974 = vpop.f32.mrb[0].mxu0
  %v3975 = vadd.f32 0.0, %v3974
  %v3976 = vpop.f32.mrb[0].mxu0
  %3977 = vdwg.mxu0
  %v3979 = vsel %vm363, %v3970, 0
  %v3982 = vsel %vm363, %v3975, 0
  %3984 = vmatprep.subr.mxu0 0.0
  %3985 = vmatpush1.msra.mxu0 %v41
  %3986 = vmatprep.subr.mxu0 0.0
  %3987 = vmatpush1.msra.mxu0 0.0
  %3988 = vmatprep.subr.mxu0 0.0
  %3989 = vmatpush1.msra.mxu0 0.0
  %3990 = vmatprep.subr.mxu0 0.0
  %3991 = vmatpush1.msra.mxu0 0.0
  %3992 = vmatprep.subr.mxu0 0.0
  %3993 = vmatpush1.msra.mxu0 0.0
  %3994 = vmatprep.subr.mxu0 0.0
  %3995 = vmatpush1.msra.mxu0 0.0
  %3996 = vmatprep.subr.mxu0 0.0
  %3997 = vmatpush1.msra.mxu0 0.0
  %3998 = vmatprep.subr.mxu0 0.0
  %3999 = vmatpush1.msra.mxu0 0.0
  %4000 = vmatprep.subr.mxu0 0.0
  %4001 = vmatpush1.msra.mxu0 0.0
  %4002 = vmatprep.subr.mxu0 0.0
  %4003 = vmatpush1.msra.mxu0 0.0
  %4004 = vmatprep.subr.mxu0 0.0
  %4005 = vmatpush1.msra.mxu0 0.0
  %4006 = vmatprep.subr.mxu0 0.0
  %4007 = vmatpush1.msra.mxu0 0.0
  %4008 = vmatprep.subr.mxu0 0.0
  %4009 = vmatpush1.msra.mxu0 0.0
  %4010 = vmatprep.subr.mxu0 0.0
  %4011 = vmatpush1.msra.mxu0 0.0
  %4012 = vmatprep.subr.mxu0 0.0
  %4013 = vmatpush1.msra.mxu0 0.0
  %4014 = vmatprep.subr.mxu0 0.0
  %4015 = vmatpush1.msra.mxu0 0.0
  %4016 = vmatprep.subr.mxu0 0.0
  %4017 = vmatpush1.msra.mxu0 0.0
  %4018 = vmatprep.subr.mxu0 0.0
  %4019 = vmatpush1.msra.mxu0 0.0
  %4020 = vmatprep.subr.mxu0 0.0
  %4021 = vmatpush1.msra.mxu0 0.0
  %4022 = vmatprep.subr.mxu0 0.0
  %4023 = vmatpush1.msra.mxu0 0.0
  %4024 = vmatprep.subr.mxu0 0.0
  %4025 = vmatpush1.msra.mxu0 0.0
  %4026 = vmatprep.subr.mxu0 0.0
  %4027 = vmatpush1.msra.mxu0 0.0
  %4028 = vmatprep.subr.mxu0 0.0
  %4029 = vmatpush1.msra.mxu0 0.0
  %4030 = vmatprep.subr.mxu0 0.0
  %4031 = vmatpush1.msra.mxu0 0.0
  %4032 = vmatprep.subr.mxu0 0.0
  %4033 = vmatpush1.msra.mxu0 0.0
  %4034 = vmatprep.subr.mxu0 0.0
  %4035 = vmatpush1.msra.mxu0 0.0
  %4036 = vmatprep.subr.mxu0 0.0
  %4037 = vmatpush1.msra.mxu0 0.0
  %4038 = vmatprep.subr.mxu0 0.0
  %4039 = vmatpush1.msra.mxu0 0.0
  %4040 = vmatprep.subr.mxu0 0.0
  %4041 = vmatpush1.msra.mxu0 0.0
  %4042 = vmatprep.subr.mxu0 0.0
  %4043 = vmatpush1.msra.mxu0 0.0
  %4044 = vmatprep.subr.mxu0 0.0
  %4045 = vmatpush1.msra.mxu0 0.0
  %4046 = vmatprep.subr.mxu0 0.0
  %4047 = vmatpush1.msra.mxu0 0.0
  %4048 = vmatprep.mubr.f32.mxu0 0.0
  %4049 = vmatmul.mubr.f32.gmra.mrb[0].mxu0 %v3979
  %v4050 = vpop.f32.mrb[0].mxu0
  %v4051 = vadd.f32 0.0, %v4050
  %v4052 = vpop.f32.mrb[0].mxu0
  %4053 = vmatprep.mubr.f32.mxu0 0.0
  %4054 = vmatmul.mubr.f32.gmra.mrb[0].mxu0 %v3982
  %v4055 = vpop.f32.mrb[0].mxu0
  %v4056 = vadd.f32 0.0, %v4055
  %v4057 = vpop.f32.mrb[0].mxu0
  %4058 = vdwg.mxu0
  %v4059 = vadd.f32 %v3839, %v4051
  %v4060 = vadd.f32 %v3840, %v4056
  %v4061 = vadd.f32 %v4059, %v2262
  %v4062 = vadd.f32 %v4060, %v2263
  %v4063 = vsel %vm66, %v4061, 0.0
  %4064 = vadd.xlane.f32.xlu0 %v4063
  %v4065 = vpop.xlane.xlu0 %4064
  %v4066 = vsel %vm66, %v4062, 0.0
  %4067 = vadd.xlane.f32.xlu0 %v4066
  %v4068 = vpop.xlane.xlu0 %4067
  %v4069 = vmul.f32 %v4065, %v2096
  %v4070 = vmul.f32 %v4068, %v2096
  %v4071 = vsub.f32 %v4061, %v4069
  %v4072 = vsub.f32 %v4062, %v4070
  %v4073 = vmul.f32 %v4071, %v4071
  %v4074 = vmul.f32 %v4072, %v4072
  %v4075 = vsel %vm66, %v4073, 0.0
  %4076 = vadd.xlane.f32.xlu0 %v4075
  %v4077 = vpop.xlane.xlu0 %4076
  %v4078 = vsel %vm66, %v4074, 0.0
  %4079 = vadd.xlane.f32.xlu0 %v4078
  %v4080 = vpop.xlane.xlu0 %4079
  %v4081 = vmul.f32 %v4077, %v2096
  %v4082 = vmul.f32 %v4080, %v2096
  %v4083 = vadd.f32 %v4081, 1e-05
  %v4084 = vadd.f32 %v4082, 1e-05
  %v4085 = vrsqrt.pop %v4083
  %v4086 = vrsqrt.pop %v4084
  %v4087 = vmul.f32 %v4071, %v4085
  %v4088 = vmul.f32 %v4072, %v4086
  %v4089 = vmul.f32 %v4087, %v2120
  %v4090 = vmul.f32 %v4088, %v2120
  %v4091 = vadd.f32 %v4089, %v2126
  %v4092 = vadd.f32 %v4090, %v2126
  %v4094 = vsel %vm66, %v4091, 0
  %v4097 = vsel %vm66, %v4092, 0
  %4099 = vmatprep.subr.mxu0 0.0
  %4100 = vmatpush1.msra.mxu0 %v2138
  %4101 = vmatprep.subr.mxu0 0.0
  %4102 = vmatpush1.msra.mxu0 %v2140
  %4103 = vmatprep.subr.mxu0 0.0
  %4104 = vmatpush1.msra.mxu0 %v2142
  %4105 = vmatprep.subr.mxu0 0.0
  %4106 = vmatpush1.msra.mxu0 %v2144
  %4107 = vmatprep.subr.mxu0 0.0
  %4108 = vmatpush1.msra.mxu0 0.0
  %4109 = vmatprep.subr.mxu0 0.0
  %4110 = vmatpush1.msra.mxu0 0.0
  %4111 = vmatprep.subr.mxu0 0.0
  %4112 = vmatpush1.msra.mxu0 0.0
  %4113 = vmatprep.subr.mxu0 0.0
  %4114 = vmatpush1.msra.mxu0 0.0
  %4115 = vmatprep.subr.mxu0 0.0
  %4116 = vmatpush1.msra.mxu0 0.0
  %4117 = vmatprep.subr.mxu0 0.0
  %4118 = vmatpush1.msra.mxu0 0.0
  %4119 = vmatprep.subr.mxu0 0.0
  %4120 = vmatpush1.msra.mxu0 0.0
  %4121 = vmatprep.subr.mxu0 0.0
  %4122 = vmatpush1.msra.mxu0 0.0
  %4123 = vmatprep.subr.mxu0 0.0
  %4124 = vmatpush1.msra.mxu0 0.0
  %4125 = vmatprep.subr.mxu0 0.0
  %4126 = vmatpush1.msra.mxu0 0.0
  %4127 = vmatprep.subr.mxu0 0.0
  %4128 = vmatpush1.msra.mxu0 0.0
  %4129 = vmatprep.subr.mxu0 0.0
  %4130 = vmatpush1.msra.mxu0 0.0
  %4131 = vmatprep.subr.mxu0 0.0
  %4132 = vmatpush1.msra.mxu0 0.0
  %4133 = vmatprep.subr.mxu0 0.0
  %4134 = vmatpush1.msra.mxu0 0.0
  %4135 = vmatprep.subr.mxu0 0.0
  %4136 = vmatpush1.msra.mxu0 0.0
  %4137 = vmatprep.subr.mxu0 0.0
  %4138 = vmatpush1.msra.mxu0 0.0
  %4139 = vmatprep.subr.mxu0 0.0
  %4140 = vmatpush1.msra.mxu0 0.0
  %4141 = vmatprep.subr.mxu0 0.0
  %4142 = vmatpush1.msra.mxu0 0.0
  %4143 = vmatprep.subr.mxu0 0.0
  %4144 = vmatpush1.msra.mxu0 0.0
  %4145 = vmatprep.subr.mxu0 0.0
  %4146 = vmatpush1.msra.mxu0 0.0
  %4147 = vmatprep.subr.mxu0 0.0
  %4148 = vmatpush1.msra.mxu0 0.0
  %4149 = vmatprep.subr.mxu0 0.0
  %4150 = vmatpush1.msra.mxu0 0.0
  %4151 = vmatprep.subr.mxu0 0.0
  %4152 = vmatpush1.msra.mxu0 0.0
  %4153 = vmatprep.subr.mxu0 0.0
  %4154 = vmatpush1.msra.mxu0 0.0
  %4155 = vmatprep.subr.mxu0 0.0
  %4156 = vmatpush1.msra.mxu0 0.0
  %4157 = vmatprep.subr.mxu0 0.0
  %4158 = vmatpush1.msra.mxu0 0.0
  %4159 = vmatprep.subr.mxu0 0.0
  %4160 = vmatpush1.msra.mxu0 0.0
  %4161 = vmatprep.subr.mxu0 0.0
  %4162 = vmatpush1.msra.mxu0 0.0
  %4163 = vmatprep.mubr.f32.mxu0 0.0
  %4164 = vmatmul.mubr.f32.gmra.mrb[0].mxu0 %v4094
  %v4165 = vpop.f32.mrb[0].mxu0
  %v4166 = vadd.f32 %v2132, %v4165
  %v4167 = vpop.f32.mrb[0].mxu0
  %4168 = vmatprep.mubr.f32.mxu0 0.0
  %4169 = vmatmul.mubr.f32.gmra.mrb[0].mxu0 %v4097
  %v4170 = vpop.f32.mrb[0].mxu0
  %v4171 = vadd.f32 %v2132, %v4170
  %v4172 = vpop.f32.mrb[0].mxu0
  %4173 = vdwg.mxu0
  %v4174 = vmax.f32 %v4166, 0.0
  %v4175 = vmax.f32 %v4171, 0.0
  %v4176 = vadd.f32 %v4174, %v4091
  %v4177 = vadd.f32 %v4175, %v4092
  %v4178 = vsel %vm66, %v4176, 0.0
  %4179 = vadd.xlane.f32.xlu0 %v4178
  %v4180 = vpop.xlane.xlu0 %4179
  %v4181 = vsel %vm66, %v4177, 0.0
  %4182 = vadd.xlane.f32.xlu0 %v4181
  %v4183 = vpop.xlane.xlu0 %4182
  %v4184 = vmul.f32 %v4180, %v2096
  %v4185 = vmul.f32 %v4183, %v2096
  %v4186 = vsub.f32 %v4176, %v4184
  %v4187 = vsub.f32 %v4177, %v4185
  %v4188 = vmul.f32 %v4186, %v4186
  %v4189 = vmul.f32 %v4187, %v4187
  %v4190 = vsel %vm66, %v4188, 0.0
  %4191 = vadd.xlane.f32.xlu0 %v4190
  %v4192 = vpop.xlane.xlu0 %4191
  %v4193 = vsel %vm66, %v4189, 0.0
  %4194 = vadd.xlane.f32.xlu0 %v4193
  %v4195 = vpop.xlane.xlu0 %4194
  %v4196 = vmul.f32 %v4192, %v2096
  %v4197 = vmul.f32 %v4195, %v2096
  %v4198 = vadd.f32 %v4196, 1e-05
  %v4199 = vadd.f32 %v4197, 1e-05
  %v4200 = vrsqrt.pop %v4198
  %v4201 = vrsqrt.pop %v4199
  %v4202 = vmul.f32 %v4186, %v4200
  %v4203 = vmul.f32 %v4187, %v4201
  %v4204 = vmul.f32 %v4202, %v2120
  %v4205 = vmul.f32 %v4203, %v2120
  %v4206 = vadd.f32 %v4204, %v2126
  %v4207 = vadd.f32 %v4205, %v2126
  %v4208 = vlaneseq
  %v4209 = vshrl.u32 %v4208, 7
  %v4210 = vsub.s32 0, %v4209
  %v4211 = vrot.slane %v49, %v4210
  %v4213 = vsel %vm66, %v4206, 0
  %v4216 = vsel %vm66, %v4207, 0
  %4218 = vmatprep.subr.mxu0 0.0
  %4219 = vmatpush1.msra.mxu0 %v45
  %4220 = vmatprep.subr.mxu0 0.0
  %4221 = vmatpush1.msra.mxu0 %v46
  %4222 = vmatprep.subr.mxu0 0.0
  %4223 = vmatpush1.msra.mxu0 %v47
  %4224 = vmatprep.subr.mxu0 0.0
  %4225 = vmatpush1.msra.mxu0 %v48
  %4226 = vmatprep.subr.mxu0 0.0
  %4227 = vmatpush1.msra.mxu0 0.0
  %4228 = vmatprep.subr.mxu0 0.0
  %4229 = vmatpush1.msra.mxu0 0.0
  %4230 = vmatprep.subr.mxu0 0.0
  %4231 = vmatpush1.msra.mxu0 0.0
  %4232 = vmatprep.subr.mxu0 0.0
  %4233 = vmatpush1.msra.mxu0 0.0
  %4234 = vmatprep.subr.mxu0 0.0
  %4235 = vmatpush1.msra.mxu0 0.0
  %4236 = vmatprep.subr.mxu0 0.0
  %4237 = vmatpush1.msra.mxu0 0.0
  %4238 = vmatprep.subr.mxu0 0.0
  %4239 = vmatpush1.msra.mxu0 0.0
  %4240 = vmatprep.subr.mxu0 0.0
  %4241 = vmatpush1.msra.mxu0 0.0
  %4242 = vmatprep.subr.mxu0 0.0
  %4243 = vmatpush1.msra.mxu0 0.0
  %4244 = vmatprep.subr.mxu0 0.0
  %4245 = vmatpush1.msra.mxu0 0.0
  %4246 = vmatprep.subr.mxu0 0.0
  %4247 = vmatpush1.msra.mxu0 0.0
  %4248 = vmatprep.subr.mxu0 0.0
  %4249 = vmatpush1.msra.mxu0 0.0
  %4250 = vmatprep.subr.mxu0 0.0
  %4251 = vmatpush1.msra.mxu0 0.0
  %4252 = vmatprep.subr.mxu0 0.0
  %4253 = vmatpush1.msra.mxu0 0.0
  %4254 = vmatprep.subr.mxu0 0.0
  %4255 = vmatpush1.msra.mxu0 0.0
  %4256 = vmatprep.subr.mxu0 0.0
  %4257 = vmatpush1.msra.mxu0 0.0
  %4258 = vmatprep.subr.mxu0 0.0
  %4259 = vmatpush1.msra.mxu0 0.0
  %4260 = vmatprep.subr.mxu0 0.0
  %4261 = vmatpush1.msra.mxu0 0.0
  %4262 = vmatprep.subr.mxu0 0.0
  %4263 = vmatpush1.msra.mxu0 0.0
  %4264 = vmatprep.subr.mxu0 0.0
  %4265 = vmatpush1.msra.mxu0 0.0
  %4266 = vmatprep.subr.mxu0 0.0
  %4267 = vmatpush1.msra.mxu0 0.0
  %4268 = vmatprep.subr.mxu0 0.0
  %4269 = vmatpush1.msra.mxu0 0.0
  %4270 = vmatprep.subr.mxu0 0.0
  %4271 = vmatpush1.msra.mxu0 0.0
  %4272 = vmatprep.subr.mxu0 0.0
  %4273 = vmatpush1.msra.mxu0 0.0
  %4274 = vmatprep.subr.mxu0 0.0
  %4275 = vmatpush1.msra.mxu0 0.0
  %4276 = vmatprep.subr.mxu0 0.0
  %4277 = vmatpush1.msra.mxu0 0.0
  %4278 = vmatprep.subr.mxu0 0.0
  %4279 = vmatpush1.msra.mxu0 0.0
  %4280 = vmatprep.subr.mxu0 0.0
  %4281 = vmatpush1.msra.mxu0 0.0
  %4282 = vmatprep.mubr.f32.mxu0 0.0
  %4283 = vmatmul.mubr.f32.gmra.mrb[0].mxu0 %v4213
  %v4284 = vpop.f32.mrb[0].mxu0
  %v4285 = vadd.f32 %v4211, %v4284
  %v4286 = vpop.f32.mrb[0].mxu0
  %4287 = vmatprep.mubr.f32.mxu0 0.0
  %4288 = vmatmul.mubr.f32.gmra.mrb[0].mxu0 %v4216
  %v4289 = vpop.f32.mrb[0].mxu0
  %v4290 = vadd.f32 %v4211, %v4289
  %v4291 = vpop.f32.mrb[0].mxu0
  %4292 = vdwg.mxu0
  %4293 = vst [vmem:[%s7] sm:$0xff] %v4285
  %4294 = vst [vmem:[%s7 + $0x8] sm:$0xff] %v4290
  // Predicated region
  $region26: #{xlnet_forward.1} parent=0 // pred_check
    _
  $region27: #{xlnet_forward.1} parent=0 // pred_check_branch
    %4296 = sbr.rel (0) target = $region29
  $region28: #{xlnet_forward.1} parent=0 // pred_region
    _
  $region29: #{xlnet_forward.1} parent=0 // pred_fallthru
    _
  // Predicated region
  $region30: #{xlnet_forward.1} parent=0 // pred_check
    _
  $region31: #{xlnet_forward.1} parent=0 // pred_check_branch
    %4298 = sbr.rel (0) target = $region33
  $region32: #{xlnet_forward.1} parent=0 // pred_region
    _
  $region33: #{xlnet_forward.1} parent=0 // pred_fallthru
    _
  // Predicated region
  $region34: #{xlnet_forward.1} parent=0 // pred_check
    _
  $region35: #{xlnet_forward.1} parent=0 // pred_check_branch
    %4300 = sbr.rel (0) target = $region37
  $region36: #{xlnet_forward.1} parent=0 // pred_region
    _
  $region37: #{xlnet_forward.1} parent=0 // pred_fallthru
    _
  // Predicated region
  $region38: #{xlnet_forward.1} parent=0 // pred_check
    _
  $region39: #{xlnet_forward.1} parent=0 // pred_check_branch
    %4302 = sbr.rel (0) target = $region41
  $region40: #{xlnet_forward.1} parent=0 // pred_region
    _
  $region41: #{xlnet_forward.1} parent=0 // pred_fallthru
    _

</llo_original>
